<compile_context>
chip_gen: v5e
topology: v5e:2x2
jax: 0.10.0
libtpu: 0.0.40
codegen_flags: <defaults>
</compile_context>

<pallas_src>
import functools
import math

import jax
import jax.numpy as jnp
from jax.experimental import pallas as pl
from jax.experimental.pallas import tpu as pltpu


_LAYER_PARAM_ORDER = (
    "v_w", "v_b",
    "sa_wqkv", "sa_bqkv", "sa_wo", "sa_bo",
    "q2_w", "q2_b",
    "ea_wkv", "ea_bkv", "ea_wo", "ea_bo",
    "e1_wkv", "e1_bkv", "e1_wo", "e1_bo",
    "ln1_g", "ln1_b", "ln2_g", "ln2_b", "ln3_g", "ln3_b",
    "ff_w1", "ff_b1", "ff_w2", "ff_b2",
)


# ----------------------------------------------------------------------------
# In-kernel helpers (operate on loaded jnp values)
# ----------------------------------------------------------------------------

def _layer_norm(x, g, b, eps):
    """x: [N, D] f32, g/b: [1, D]. PyTorch nn.LayerNorm over the last dim."""
    mu = jnp.mean(x, axis=-1, keepdims=True)
    var = jnp.mean((x - mu) ** 2, axis=-1, keepdims=True)
    return (x - mu) * jax.lax.rsqrt(var + eps) * g + b


def _mha(q_src, q_off, k_src, k_off, v_src, v_off, bias, wo, bo, *,
         batch, n_heads):
    """Head-batched multi-head attention, fully in-kernel.

    q_src/k_src/v_src: 2-D [B*L, *] value tensors holding the projected Q/K/V
    starting at column offsets q_off/k_off/v_off (so a fused QKV / fused-Q /
    fused-KV projection output can be consumed without extra copies).
    bias: additive mask bias [H*B, Lq, Lk] (or None).
    Heads are folded into a single leading batch dim (ordering (h, b)); scores
    and context each use ONE 3-D batched einsum and the output projection is a
    single [B*Lq, D] @ [D, D] matmul.  Returns [B*Lq, D].
    """
    d = wo.shape[0]
    dh = d // n_heads
    lq = q_src.shape[0] // batch
    lk = k_src.shape[0] // batch
    inv_scale = 1.0 / math.sqrt(dh)

    def split_heads(x, off, length):
        # [B*L, ...] -> [H*B, L, Dh]  (leading-dim reshape + axis-0 concat only)
        parts = [x[:, off + h * dh: off + (h + 1) * dh] for h in range(n_heads)]
        return jnp.concatenate(parts, axis=0).reshape(n_heads * batch, length, dh)

    qh = split_heads(q_src, q_off, lq)
    kh = split_heads(k_src, k_off, lk)
    vh = split_heads(v_src, v_off, lk)

    s = jnp.einsum('bqd,bkd->bqk', qh, kh,
                   preferred_element_type=jnp.float32) * inv_scale
    if bias is not None:
        s = s + bias                                    # additive mask bias
    s = s - jnp.max(s, axis=-1, keepdims=True)
    p = jnp.exp(s)
    p = p * pl.reciprocal(jnp.sum(p, axis=-1, keepdims=True), approx=True)

    ctx = jnp.einsum('bqk,bkd->bqd', p, vh,
                     preferred_element_type=jnp.float32)    # [H*B, Lq, Dh]
    ctx = ctx.reshape(n_heads, batch * lq, dh)
    merged = jnp.concatenate([ctx[h] for h in range(n_heads)], axis=-1)  # [B*Lq, D]
    return jnp.dot(merged, wo, preferred_element_type=jnp.float32) + bo


# ----------------------------------------------------------------------------
# Per-layer kernel body (grid over layers; weights streamed per layer)
# ----------------------------------------------------------------------------

def _decoder_layer_kernel(
        trg0_ref, src_ref, imgs_ref, tbias_ref, sbias_ref,
        v_w_ref, v_b_ref,
        sa_wqkv_ref, sa_bqkv_ref, sa_wo_ref, sa_bo_ref,
        q2_w_ref, q2_b_ref,
        ea_wkv_ref, ea_bkv_ref, ea_wo_ref, ea_bo_ref,
        e1_wkv_ref, e1_bkv_ref, e1_wo_ref, e1_bo_ref,
        ln1_g_ref, ln1_b_ref, ln2_g_ref, ln2_b_ref, ln3_g_ref, ln3_b_ref,
        ff_w1_ref, ff_b1_ref, ff_w2_ref, ff_b2_ref,
        fc_w_ref, fc_b_ref,
        out_ref, trg_state,
        *, n_heads, batch, eps):
    li = pl.program_id(0)
    d = trg0_ref.shape[-1]

    @pl.when(li == 0)
    def _():
        trg_state[...] = trg0_ref[...]

    trg = trg_state[...]                              # [B*Lt, D] f32 carried state
    src = src_ref[...]                                # [B*Ls, D]
    imgs = imgs_ref[...]                              # [B*Li, D]
    tbias = tbias_ref[...]                            # [H*B, Lt, Lt] additive bias
    sbias = sbias_ref[...]                            # [H*B, Lt, Ls] additive bias

    # imgs_l = relu(self.v(imgs)) — each layer applies its own v to the ORIGINAL
    # imgs (the reference reassigns imgs only inside the layer).
    # TODO(synk): reference hard-codes nn.Linear(512, 512); parametrized here as
    # Linear(hid_dim, hid_dim) (equivalent when hid_dim == 512).
    imgs_l = jnp.maximum(
        jnp.dot(imgs, v_w_ref[0], preferred_element_type=jnp.float32)
        + v_b_ref[0], 0.0)

    # ---- self attention (fused QKV projection) ----
    qkv = (jnp.dot(trg, sa_wqkv_ref[0], preferred_element_type=jnp.float32)
           + sa_bqkv_ref[0])                          # [N, 3D]
    sa = _mha(qkv, 0, qkv, d, qkv, 2 * d, tbias, sa_wo_ref[0], sa_bo_ref[0],
              batch=batch, n_heads=n_heads)
    trg = _layer_norm(trg + sa, ln1_g_ref[0], ln1_b_ref[0], eps)

    # ---- enc-attn (src) and enc-attn1 (imgs_l): fused Q projection [D, 2D] ----
    q2 = (jnp.dot(trg, q2_w_ref[0], preferred_element_type=jnp.float32)
          + q2_b_ref[0])                              # [N, 2D] = [q_ea | q_e1]
    kv_ea = (jnp.dot(src, ea_wkv_ref[0], preferred_element_type=jnp.float32)
             + ea_bkv_ref[0])                         # [B*Ls, 2D]
    kv_e1 = (jnp.dot(imgs_l, e1_wkv_ref[0], preferred_element_type=jnp.float32)
             + e1_bkv_ref[0])                         # [B*Li, 2D]

    ea = _mha(q2, 0, kv_ea, 0, kv_ea, d, sbias, ea_wo_ref[0], ea_bo_ref[0],
              batch=batch, n_heads=n_heads)
    e1 = _mha(q2, d, kv_e1, 0, kv_e1, d, None, e1_wo_ref[0], e1_bo_ref[0],
              batch=batch, n_heads=n_heads)
    trg = _layer_norm(trg + ea + e1, ln2_g_ref[0], ln2_b_ref[0], eps)

    # ---- position-wise feed-forward ----
    h = jnp.maximum(
        jnp.dot(trg, ff_w1_ref[0], preferred_element_type=jnp.float32)
        + ff_b1_ref[0], 0.0)
    ff = (jnp.dot(h, ff_w2_ref[0], preferred_element_type=jnp.float32)
          + ff_b2_ref[0])
    trg = _layer_norm(trg + ff, ln3_g_ref[0], ln3_b_ref[0], eps)

    trg_state[...] = trg

    # ---- fc_out fused with exact log_softmax (last layer only) ----
    # TODO(synk): for a realistic vocab (~30k) tile fc_out over a vocab grid axis
    # with an online max/LSE instead of a single padded lane-dense block.
    @pl.when(li == pl.num_programs(0) - 1)
    def _():
        logits = (jnp.dot(trg, fc_w_ref[...], preferred_element_type=jnp.float32)
                  + fc_b_ref[...])                    # padded cols biased to -1e30
        m = jnp.max(logits, axis=-1, keepdims=True)
        s = logits - m
        lse = jnp.log(jnp.sum(jnp.exp(s), axis=-1, keepdims=True))
        out_ref[...] = (s - lse).astype(out_ref.dtype)


# ----------------------------------------------------------------------------
# Host wrapper (embedding gather, mask->bias, vocab padding, pallas_call)
# ----------------------------------------------------------------------------

def decoder_forward(params, trg_tokens, src, trg_mask, src_mask, imgs, n_heads):
    B, L = trg_tokens.shape
    D = params["tok_emb"].shape[1]
    V = params["fc_out_w"].shape[1]
    Ls = src.shape[1]
    Li = imgs.shape[1]
    LP = params["layers"]
    n_layers = LP["v_w"].shape[0]

    # Embedding gather stays in plain XLA; everything downstream is one kernel.
    tok = jnp.take(params["tok_emb"], trg_tokens, axis=0)            # [B, L, D]
    posv = params["pos_emb"][:L][None, :, :]                         # [1, L, D]
    trg0 = (tok * math.sqrt(D) + posv).reshape(B * L, D)             # dropout = id

    # Additive attention biases, pre-tiled over heads (head-major batch order).
    tmask = trg_mask.reshape(B, L, L).astype(jnp.float32)
    smask = src_mask.reshape(B, 1, Ls).astype(jnp.float32)
    tbias = jnp.tile((tmask - 1.0) * 1e10, (n_heads, 1, 1))           # [H*B, L, L]
    sbias = jnp.tile(jnp.broadcast_to((smask - 1.0) * 1e10, (B, L, Ls)),
                     (n_heads, 1, 1))                                 # [H*B, L, Ls]

    # Pad vocab to a lane-dense multiple of 128; padded bias -> -inf-ish.
    Vp = ((V + 127) // 128) * 128
    fc_w = jnp.pad(params["fc_out_w"], ((0, 0), (0, Vp - V)))
    fc_b = jnp.pad(params["fc_out_b"], (0, Vp - V),
                   constant_values=-1e30).reshape(1, Vp)

    kernel = functools.partial(_decoder_layer_kernel,
                               n_heads=n_heads, batch=B, eps=1e-5)

    layer_args = [LP[k] for k in _LAYER_PARAM_ORDER]
    args = (trg0, src.reshape(B * Ls, D), imgs.reshape(B * Li, D), tbias, sbias,
            *layer_args, fc_w, fc_b)

    def full_spec(a):
        zeros = (0,) * a.ndim
        return pl.BlockSpec(a.shape, lambda l: zeros)   # resident across layers

    def layer_spec(a):
        return pl.BlockSpec((1,) + a.shape[1:], lambda l: (l, 0, 0))

    in_specs = ([full_spec(a) for a in args[:5]]
                + [layer_spec(a) for a in layer_args]
                + [full_spec(fc_w), full_spec(fc_b)])

    out2d = pl.pallas_call(
        kernel,
        grid=(n_layers,),
        in_specs=in_specs,
        out_specs=pl.BlockSpec((B * L, Vp), lambda l: (0, 0)),
        out_shape=jax.ShapeDtypeStruct((B * L, Vp), jnp.float32),
        scratch_shapes=[pltpu.VMEM((B * L, D), jnp.float32)],   # carried trg
        compiler_params=pltpu.CompilerParams(
            dimension_semantics=("arbitrary",),
            vmem_limit_bytes=32 * 1024 * 1024),
    )(*args)

    out = out2d[:, :V].reshape(B, L, V)
    return out, out


# ----------------------------------------------------------------------------
# Deterministic parameter initialization (nn.Linear-style uniform); per-layer
# parameters stacked along a leading layer axis for per-layer streaming.
# ----------------------------------------------------------------------------

def _uniform(key, shape, fan_in):
    bound = 1.0 / math.sqrt(fan_in)
    return jax.random.uniform(key, shape, jnp.float32, -bound, bound)


def init_decoder_params(key, output_dim, hid_dim, n_layers, pf_dim, max_length=38):
    D = hid_dim
    keys = jax.random.split(key, 4 + n_layers)
    params = {
        "tok_emb": jax.random.normal(keys[0], (output_dim, D), jnp.float32),
        "pos_emb": jax.random.normal(keys[1], (max_length, D), jnp.float32),
    }
    kfw, kfb = jax.random.split(keys[2])
    params["fc_out_w"] = _uniform(kfw, (D, output_dim), D)
    params["fc_out_b"] = _uniform(kfb, (output_dim,), D)

    def init_layer(k):
        ks = iter(jax.random.split(k, 24))
        lp = {
            "v_w": _uniform(next(ks), (D, D), D),
            "v_b": _uniform(next(ks), (1, D), D),
            "sa_wqkv": _uniform(next(ks), (D, 3 * D), D),
            "sa_bqkv": _uniform(next(ks), (1, 3 * D), D),
            "sa_wo": _uniform(next(ks), (D, D), D),
            "sa_bo": _uniform(next(ks), (1, D), D),
            # fused Q projection for enc-attn / enc-attn1: [q_ea | q_e1]
            "q2_w": _uniform(next(ks), (D, 2 * D), D),
            "q2_b": _uniform(next(ks), (1, 2 * D), D),
            "ea_wkv": _uniform(next(ks), (D, 2 * D), D),
            "ea_bkv": _uniform(next(ks), (1, 2 * D), D),
            "ea_wo": _uniform(next(ks), (D, D), D),
            "ea_bo": _uniform(next(ks), (1, D), D),
            "e1_wkv": _uniform(next(ks), (D, 2 * D), D),
            "e1_bkv": _uniform(next(ks), (1, 2 * D), D),
            "e1_wo": _uniform(next(ks), (D, D), D),
            "e1_bo": _uniform(next(ks), (1, D), D),
            "ff_w1": _uniform(next(ks), (D, pf_dim), D),
            "ff_b1": _uniform(next(ks), (1, pf_dim), D),
            "ff_w2": _uniform(next(ks), (pf_dim, D), pf_dim),
            "ff_b2": _uniform(next(ks), (1, D), pf_dim),
            "ln1_g": jnp.ones((1, D), jnp.float32), "ln1_b": jnp.zeros((1, D), jnp.float32),
            "ln2_g": jnp.ones((1, D), jnp.float32), "ln2_b": jnp.zeros((1, D), jnp.float32),
            "ln3_g": jnp.ones((1, D), jnp.float32), "ln3_b": jnp.zeros((1, D), jnp.float32),
        }
        return lp

    layer_list = [init_layer(keys[4 + li]) for li in range(n_layers)]
    params["layers"] = {k: jnp.stack([lp[k] for lp in layer_list], axis=0)
                        for k in layer_list[0]}
    return params


# ----------------------------------------------------------------------------
# Main
# ----------------------------------------------------------------------------

if __name__ == "__main__":
    B = 2
    trg_len = 8
    src_len = 8
    n_img = 8
    hid_dim = 32
    n_heads = 4
    pf_dim = 64
    output_dim = 50
    n_layers = 2

    root = jax.random.PRNGKey(0)
    kp, kt, ks, ki = jax.random.split(root, 4)

    params = init_decoder_params(kp, output_dim, hid_dim, n_layers, pf_dim)

    trg_tokens = jax.random.randint(kt, (B, trg_len), 0, output_dim)
    src = jax.random.normal(ks, (B, src_len, hid_dim), jnp.float32)
    imgs = jax.random.normal(ki, (B, n_img, hid_dim), jnp.float32)

    # masks (1 = keep, 0 = mask out), PyTorch convention [B,1,Lq,Lk] / [B,1,1,Lk]
    trg_mask = jnp.tril(jnp.ones((trg_len, trg_len), jnp.float32))[None, None]
    trg_mask = jnp.broadcast_to(trg_mask, (B, 1, trg_len, trg_len))
    src_mask = jnp.ones((B, 1, 1, src_len), jnp.float32)

    fwd = jax.jit(decoder_forward, static_argnames=("n_heads",))
    out, out2 = fwd(params, trg_tokens, src, trg_mask, src_mask, imgs,
                    n_heads=n_heads)
    out = jax.block_until_ready(out)

    assert out.shape == (B, trg_len, output_dim)
    assert bool(jnp.all(jnp.isfinite(out)))
    # rows of log_softmax must sum (in prob space) to ~1
    prob_sums = jnp.sum(jnp.exp(out), axis=-1)
    assert bool(jnp.all(jnp.abs(prob_sums - 1.0) < 1e-3))

    print("KERNEL_OK")
</pallas_src>

<mosaic_0001>
module attributes {stable_mosaic.version = 11 : i64} {
  func.func @_decoder_layer_kernel(%arg0: i32, %arg1: memref<16x32xf32, #tpu.memory_space<vmem>>, %arg2: memref<16x32xf32, #tpu.memory_space<vmem>>, %arg3: memref<16x32xf32, #tpu.memory_space<vmem>>, %arg4: memref<8x8x8xf32, #tpu.memory_space<vmem>>, %arg5: memref<8x8x8xf32, #tpu.memory_space<vmem>>, %arg6: memref<1x32x32xf32, #tpu.memory_space<vmem>>, %arg7: memref<1x1x32xf32, #tpu.memory_space<vmem>>, %arg8: memref<1x32x96xf32, #tpu.memory_space<vmem>>, %arg9: memref<1x1x96xf32, #tpu.memory_space<vmem>>, %arg10: memref<1x32x32xf32, #tpu.memory_space<vmem>>, %arg11: memref<1x1x32xf32, #tpu.memory_space<vmem>>, %arg12: memref<1x32x64xf32, #tpu.memory_space<vmem>>, %arg13: memref<1x1x64xf32, #tpu.memory_space<vmem>>, %arg14: memref<1x32x64xf32, #tpu.memory_space<vmem>>, %arg15: memref<1x1x64xf32, #tpu.memory_space<vmem>>, %arg16: memref<1x32x32xf32, #tpu.memory_space<vmem>>, %arg17: memref<1x1x32xf32, #tpu.memory_space<vmem>>, %arg18: memref<1x32x64xf32, #tpu.memory_space<vmem>>, %arg19: memref<1x1x64xf32, #tpu.memory_space<vmem>>, %arg20: memref<1x32x32xf32, #tpu.memory_space<vmem>>, %arg21: memref<1x1x32xf32, #tpu.memory_space<vmem>>, %arg22: memref<1x1x32xf32, #tpu.memory_space<vmem>>, %arg23: memref<1x1x32xf32, #tpu.memory_space<vmem>>, %arg24: memref<1x1x32xf32, #tpu.memory_space<vmem>>, %arg25: memref<1x1x32xf32, #tpu.memory_space<vmem>>, %arg26: memref<1x1x32xf32, #tpu.memory_space<vmem>>, %arg27: memref<1x1x32xf32, #tpu.memory_space<vmem>>, %arg28: memref<1x32x64xf32, #tpu.memory_space<vmem>>, %arg29: memref<1x1x64xf32, #tpu.memory_space<vmem>>, %arg30: memref<1x64x32xf32, #tpu.memory_space<vmem>>, %arg31: memref<1x1x32xf32, #tpu.memory_space<vmem>>, %arg32: memref<32x128xf32, #tpu.memory_space<vmem>>, %arg33: memref<1x128xf32, #tpu.memory_space<vmem>>, %arg34: memref<16x128xf32, #tpu.memory_space<vmem>>, %arg35: memref<16x32xf32, #tpu.memory_space<vmem>>) attributes {dimension_semantics = [#tpu.dimension_semantics<arbitrary>], iteration_bounds = array<i64: 2>, scalar_prefetch = 0 : i64, scratch_operands = 1 : i64, tpu.core_type = #tpu.core_type<tc>, window_params = [{pipeline_mode = #tpu.pipeline_mode<synchronous>, transform_indices = @transform_0, window_bounds = array<i64: 16, 32>}, {pipeline_mode = #tpu.pipeline_mode<synchronous>, transform_indices = @transform_1, window_bounds = array<i64: 16, 32>}, {pipeline_mode = #tpu.pipeline_mode<synchronous>, transform_indices = @transform_2, window_bounds = array<i64: 16, 32>}, {pipeline_mode = #tpu.pipeline_mode<synchronous>, transform_indices = @transform_3, window_bounds = array<i64: 8, 8, 8>}, {pipeline_mode = #tpu.pipeline_mode<synchronous>, transform_indices = @transform_4, window_bounds = array<i64: 8, 8, 8>}, {transform_indices = @transform_5, window_bounds = array<i64: 1, 32, 32>}, {transform_indices = @transform_6, window_bounds = array<i64: 1, 1, 32>}, {transform_indices = @transform_7, window_bounds = array<i64: 1, 32, 96>}, {transform_indices = @transform_8, window_bounds = array<i64: 1, 1, 96>}, {transform_indices = @transform_9, window_bounds = array<i64: 1, 32, 32>}, {transform_indices = @transform_10, window_bounds = array<i64: 1, 1, 32>}, {transform_indices = @transform_11, window_bounds = array<i64: 1, 32, 64>}, {transform_indices = @transform_12, window_bounds = array<i64: 1, 1, 64>}, {transform_indices = @transform_13, window_bounds = array<i64: 1, 32, 64>}, {transform_indices = @transform_14, window_bounds = array<i64: 1, 1, 64>}, {transform_indices = @transform_15, window_bounds = array<i64: 1, 32, 32>}, {transform_indices = @transform_16, window_bounds = array<i64: 1, 1, 32>}, {transform_indices = @transform_17, window_bounds = array<i64: 1, 32, 64>}, {transform_indices = @transform_18, window_bounds = array<i64: 1, 1, 64>}, {transform_indices = @transform_19, window_bounds = array<i64: 1, 32, 32>}, {transform_indices = @transform_20, window_bounds = array<i64: 1, 1, 32>}, {transform_indices = @transform_21, window_bounds = array<i64: 1, 1, 32>}, {transform_indices = @transform_22, window_bounds = array<i64: 1, 1, 32>}, {transform_indices = @transform_23, window_bounds = array<i64: 1, 1, 32>}, {transform_indices = @transform_24, window_bounds = array<i64: 1, 1, 32>}, {transform_indices = @transform_25, window_bounds = array<i64: 1, 1, 32>}, {transform_indices = @transform_26, window_bounds = array<i64: 1, 1, 32>}, {transform_indices = @transform_27, window_bounds = array<i64: 1, 32, 64>}, {transform_indices = @transform_28, window_bounds = array<i64: 1, 1, 64>}, {transform_indices = @transform_29, window_bounds = array<i64: 1, 64, 32>}, {transform_indices = @transform_30, window_bounds = array<i64: 1, 1, 32>}, {pipeline_mode = #tpu.pipeline_mode<synchronous>, transform_indices = @transform_31, window_bounds = array<i64: 32, 128>}, {pipeline_mode = #tpu.pipeline_mode<synchronous>, transform_indices = @transform_32, window_bounds = array<i64: 1, 128>}, {pipeline_mode = #tpu.pipeline_mode<synchronous>, transform_indices = @transform_33, window_bounds = array<i64: 16, 128>}]} {
    %c0_i32 = arith.constant 0 : i32
    %0 = arith.cmpi eq, %arg0, %c0_i32 : i32
    %1 = arith.extui %0 : i1 to i32
    %c0_i32_0 = arith.constant 0 : i32
    %2 = arith.cmpi ne, %1, %c0_i32_0 : i32
    scf.if %2 {
      %c0_134 = arith.constant 0 : index
      %c0_135 = arith.constant 0 : index
      %296 = vector.load %arg1[%c0_134, %c0_135] : memref<16x32xf32, #tpu.memory_space<vmem>>, vector<16x32xf32>
      %c0_136 = arith.constant 0 : index
      %c0_137 = arith.constant 0 : index
      %297 = vector.load %arg35[%c0_136, %c0_137] : memref<16x32xf32, #tpu.memory_space<vmem>>, vector<16x32xf32>
      tpu.vector_store %arg35[%c0_136, %c0_137], %296 {strides = array<i32>} : memref<16x32xf32, #tpu.memory_space<vmem>>, vector<16x32xf32>,
    } else {
    }
    %c0 = arith.constant 0 : index
    %c0_1 = arith.constant 0 : index
    %3 = vector.load %arg35[%c0, %c0_1] : memref<16x32xf32, #tpu.memory_space<vmem>>, vector<16x32xf32>
    %c0_2 = arith.constant 0 : index
    %c0_3 = arith.constant 0 : index
    %4 = vector.load %arg2[%c0_2, %c0_3] : memref<16x32xf32, #tpu.memory_space<vmem>>, vector<16x32xf32>
    %c0_4 = arith.constant 0 : index
    %c0_5 = arith.constant 0 : index
    %5 = vector.load %arg3[%c0_4, %c0_5] : memref<16x32xf32, #tpu.memory_space<vmem>>, vector<16x32xf32>
    %c0_6 = arith.constant 0 : index
    %c0_7 = arith.constant 0 : index
    %c0_8 = arith.constant 0 : index
    %6 = vector.load %arg4[%c0_6, %c0_7, %c0_8] : memref<8x8x8xf32, #tpu.memory_space<vmem>>, vector<8x8x8xf32>
    %c0_9 = arith.constant 0 : index
    %c0_10 = arith.constant 0 : index
    %c0_11 = arith.constant 0 : index
    %7 = vector.load %arg5[%c0_9, %c0_10, %c0_11] : memref<8x8x8xf32, #tpu.memory_space<vmem>>, vector<8x8x8xf32>
    %c0_12 = arith.constant 0 : index
    %c0_13 = arith.constant 0 : index
    %c0_14 = arith.constant 0 : index
    %8 = vector.load %arg6[%c0_12, %c0_13, %c0_14] : memref<1x32x32xf32, #tpu.memory_space<vmem>>, vector<1x32x32xf32>
    %9 = vector.shape_cast %8 : vector<1x32x32xf32> to vector<32x32xf32>
    %cst = arith.constant dense<0.000000e+00> : vector<16x32xf32>
    %10 = tpu.matmul %5, %9, %cst {dimension_numbers = #tpu.dot_dimension_numbers<[1], [0], [0], [1], [0, 0, 1, 1], [], []>} : vector<16x32xf32>, vector<32x32xf32>, vector<16x32xf32> -> vector<16x32xf32>
    %c0_15 = arith.constant 0 : index
    %c0_16 = arith.constant 0 : index
    %c0_17 = arith.constant 0 : index
    %11 = vector.load %arg7[%c0_15, %c0_16, %c0_17] : memref<1x1x32xf32, #tpu.memory_space<vmem>>, vector<1x1x32xf32>
    %12 = vector.shape_cast %11 : vector<1x1x32xf32> to vector<1x32xf32>
    %13 = vector.broadcast %12 : vector<1x32xf32> to vector<16x32xf32>
    %14 = arith.addf %10, %13 : vector<16x32xf32>
    %cst_18 = arith.constant 0.000000e+00 : f32
    %15 = vector.broadcast %cst_18 : f32 to vector<16x32xf32>
    %16 = arith.maximumf %14, %15 : vector<16x32xf32>
    %c0_19 = arith.constant 0 : index
    %c0_20 = arith.constant 0 : index
    %c0_21 = arith.constant 0 : index
    %17 = vector.load %arg8[%c0_19, %c0_20, %c0_21] : memref<1x32x96xf32, #tpu.memory_space<vmem>>, vector<1x32x96xf32>
    %18 = vector.shape_cast %17 : vector<1x32x96xf32> to vector<32x96xf32>
    %cst_22 = arith.constant dense<0.000000e+00> : vector<16x96xf32>
    %19 = tpu.matmul %3, %18, %cst_22 {dimension_numbers = #tpu.dot_dimension_numbers<[1], [0], [0], [1], [0, 0, 1, 1], [], []>} : vector<16x32xf32>, vector<32x96xf32>, vector<16x96xf32> -> vector<16x96xf32>
    %c0_23 = arith.constant 0 : index
    %c0_24 = arith.constant 0 : index
    %c0_25 = arith.constant 0 : index
    %20 = vector.load %arg9[%c0_23, %c0_24, %c0_25] : memref<1x1x96xf32, #tpu.memory_space<vmem>>, vector<1x1x96xf32>
    %21 = vector.shape_cast %20 : vector<1x1x96xf32> to vector<1x96xf32>
    %22 = vector.broadcast %21 : vector<1x96xf32> to vector<16x96xf32>
    %23 = arith.addf %19, %22 : vector<16x96xf32>
    %c0_26 = arith.constant 0 : index
    %c0_27 = arith.constant 0 : index
    %c0_28 = arith.constant 0 : index
    %24 = vector.load %arg10[%c0_26, %c0_27, %c0_28] : memref<1x32x32xf32, #tpu.memory_space<vmem>>, vector<1x32x32xf32>
    %25 = vector.shape_cast %24 : vector<1x32x32xf32> to vector<32x32xf32>
    %c0_29 = arith.constant 0 : index
    %c0_30 = arith.constant 0 : index
    %c0_31 = arith.constant 0 : index
    %26 = vector.load %arg11[%c0_29, %c0_30, %c0_31] : memref<1x1x32xf32, #tpu.memory_space<vmem>>, vector<1x1x32xf32>
    %27 = vector.shape_cast %26 : vector<1x1x32xf32> to vector<1x32xf32>
    %28 = vector.extract_strided_slice %23 {offsets = [0, 0], sizes = [16, 8], strides = [1, 1]} : vector<16x96xf32> to vector<16x8xf32>
    %29 = vector.extract_strided_slice %23 {offsets = [0, 8], sizes = [16, 8], strides = [1, 1]} : vector<16x96xf32> to vector<16x8xf32>
    %30 = vector.extract_strided_slice %23 {offsets = [0, 16], sizes = [16, 8], strides = [1, 1]} : vector<16x96xf32> to vector<16x8xf32>
    %31 = vector.extract_strided_slice %23 {offsets = [0, 24], sizes = [16, 8], strides = [1, 1]} : vector<16x96xf32> to vector<16x8xf32>
    %32 = tpu.concatenate %28, %29, %30, %31 in 0 : vector<16x8xf32>, vector<16x8xf32>, vector<16x8xf32>, vector<16x8xf32> -> vector<64x8xf32>
    %33 = vector.shape_cast %32 : vector<64x8xf32> to vector<8x8x8xf32>
    %34 = vector.extract_strided_slice %23 {offsets = [0, 32], sizes = [16, 8], strides = [1, 1]} : vector<16x96xf32> to vector<16x8xf32>
    %35 = vector.extract_strided_slice %23 {offsets = [0, 40], sizes = [16, 8], strides = [1, 1]} : vector<16x96xf32> to vector<16x8xf32>
    %36 = vector.extract_strided_slice %23 {offsets = [0, 48], sizes = [16, 8], strides = [1, 1]} : vector<16x96xf32> to vector<16x8xf32>
    %37 = vector.extract_strided_slice %23 {offsets = [0, 56], sizes = [16, 8], strides = [1, 1]} : vector<16x96xf32> to vector<16x8xf32>
    %38 = tpu.concatenate %34, %35, %36, %37 in 0 : vector<16x8xf32>, vector<16x8xf32>, vector<16x8xf32>, vector<16x8xf32> -> vector<64x8xf32>
    %39 = vector.shape_cast %38 : vector<64x8xf32> to vector<8x8x8xf32>
    %40 = vector.extract_strided_slice %23 {offsets = [0, 64], sizes = [16, 8], strides = [1, 1]} : vector<16x96xf32> to vector<16x8xf32>
    %41 = vector.extract_strided_slice %23 {offsets = [0, 72], sizes = [16, 8], strides = [1, 1]} : vector<16x96xf32> to vector<16x8xf32>
    %42 = vector.extract_strided_slice %23 {offsets = [0, 80], sizes = [16, 8], strides = [1, 1]} : vector<16x96xf32> to vector<16x8xf32>
    %43 = vector.extract_strided_slice %23 {offsets = [0, 88], sizes = [16, 8], strides = [1, 1]} : vector<16x96xf32> to vector<16x8xf32>
    %44 = tpu.concatenate %40, %41, %42, %43 in 0 : vector<16x8xf32>, vector<16x8xf32>, vector<16x8xf32>, vector<16x8xf32> -> vector<64x8xf32>
    %45 = vector.shape_cast %44 : vector<64x8xf32> to vector<8x8x8xf32>
    "tpu.trace_start"() <{level = 10 : i32, message = "bqd,bkd->bqk"}> : () -> ()
    %cst_32 = arith.constant dense<0.000000e+00> : vector<8x8x8xf32>
    %46 = tpu.matmul %33, %39, %cst_32 {dimension_numbers = #tpu.dot_dimension_numbers<[2], [2], [1], [1], [0, 0, 0, 1, 1, 1], [0], [0]>} : vector<8x8x8xf32>, vector<8x8x8xf32>, vector<8x8x8xf32> -> vector<8x8x8xf32>
    "tpu.trace_stop"() : () -> ()
    %cst_33 = arith.constant 0.353553385 : f32
    %47 = vector.broadcast %cst_33 : f32 to vector<8x8x8xf32>
    %48 = arith.mulf %46, %47 : vector<8x8x8xf32>
    %49 = arith.addf %48, %6 : vector<8x8x8xf32>
    %cst_34 = arith.constant dense<0xFF800000> : vector<8x8xf32>
    %50 = vector.multi_reduction <maximumf>, %49, %cst_34 [2] : vector<8x8x8xf32> to vector<8x8xf32>
    %51 = vector.shape_cast %50 : vector<8x8xf32> to vector<8x8x1xf32>
    %52 = vector.broadcast %51 : vector<8x8x1xf32> to vector<8x8x8xf32>
    %53 = arith.subf %49, %52 : vector<8x8x8xf32>
    %54 = math.exp %53 : vector<8x8x8xf32>
    %cst_35 = arith.constant dense<0.000000e+00> : vector<8x8xf32>
    %55 = vector.multi_reduction <add>, %54, %cst_35 [2] : vector<8x8x8xf32> to vector<8x8xf32>
    %56 = vector.shape_cast %55 : vector<8x8xf32> to vector<8x8x1xf32>
    %57 = tpu.reciprocal %56 {approx = true} : vector<8x8x1xf32> -> vector<8x8x1xf32>
    %58 = vector.broadcast %57 : vector<8x8x1xf32> to vector<8x8x8xf32>
    %59 = arith.mulf %54, %58 : vector<8x8x8xf32>
    "tpu.trace_start"() <{level = 10 : i32, message = "bqk,bkd->bqd"}> : () -> ()
    %cst_36 = arith.constant dense<0.000000e+00> : vector<8x8x8xf32>
    %60 = tpu.matmul %59, %45, %cst_36 {dimension_numbers = #tpu.dot_dimension_numbers<[2], [1], [1], [2], [0, 0, 0, 1, 1, 2], [0], [0]>} : vector<8x8x8xf32>, vector<8x8x8xf32>, vector<8x8x8xf32> -> vector<8x8x8xf32>
    "tpu.trace_stop"() : () -> ()
    %61 = vector.shape_cast %60 : vector<8x8x8xf32> to vector<4x16x8xf32>
    %62 = vector.extract_strided_slice %61 {offsets = [0, 0, 0], sizes = [1, 16, 8], strides = [1, 1, 1]} : vector<4x16x8xf32> to vector<1x16x8xf32>
    %63 = vector.shape_cast %62 : vector<1x16x8xf32> to vector<16x8xf32>
    %64 = vector.extract_strided_slice %61 {offsets = [1, 0, 0], sizes = [1, 16, 8], strides = [1, 1, 1]} : vector<4x16x8xf32> to vector<1x16x8xf32>
    %65 = vector.shape_cast %64 : vector<1x16x8xf32> to vector<16x8xf32>
    %66 = vector.extract_strided_slice %61 {offsets = [2, 0, 0], sizes = [1, 16, 8], strides = [1, 1, 1]} : vector<4x16x8xf32> to vector<1x16x8xf32>
    %67 = vector.shape_cast %66 : vector<1x16x8xf32> to vector<16x8xf32>
    %68 = vector.extract_strided_slice %61 {offsets = [3, 0, 0], sizes = [1, 16, 8], strides = [1, 1, 1]} : vector<4x16x8xf32> to vector<1x16x8xf32>
    %69 = vector.shape_cast %68 : vector<1x16x8xf32> to vector<16x8xf32>
    %70 = tpu.concatenate %63, %65, %67, %69 in 1 : vector<16x8xf32>, vector<16x8xf32>, vector<16x8xf32>, vector<16x8xf32> -> vector<16x32xf32>
    %cst_37 = arith.constant dense<0.000000e+00> : vector<16x32xf32>
    %71 = tpu.matmul %70, %25, %cst_37 {dimension_numbers = #tpu.dot_dimension_numbers<[1], [0], [0], [1], [0, 0, 1, 1], [], []>} : vector<16x32xf32>, vector<32x32xf32>, vector<16x32xf32> -> vector<16x32xf32>
    %72 = vector.broadcast %27 : vector<1x32xf32> to vector<16x32xf32>
    %73 = arith.addf %71, %72 : vector<16x32xf32>
    %74 = arith.addf %3, %73 : vector<16x32xf32>
    %c0_38 = arith.constant 0 : index
    %c0_39 = arith.constant 0 : index
    %c0_40 = arith.constant 0 : index
    %75 = vector.load %arg22[%c0_38, %c0_39, %c0_40] : memref<1x1x32xf32, #tpu.memory_space<vmem>>, vector<1x1x32xf32>
    %76 = vector.shape_cast %75 : vector<1x1x32xf32> to vector<1x32xf32>
    %c0_41 = arith.constant 0 : index
    %c0_42 = arith.constant 0 : index
    %c0_43 = arith.constant 0 : index
    %77 = vector.load %arg23[%c0_41, %c0_42, %c0_43] : memref<1x1x32xf32, #tpu.memory_space<vmem>>, vector<1x1x32xf32>
    %78 = vector.shape_cast %77 : vector<1x1x32xf32> to vector<1x32xf32>
    %cst_44 = arith.constant dense<0.000000e+00> : vector<16xf32>
    %79 = vector.multi_reduction <add>, %74, %cst_44 [1] : vector<16x32xf32> to vector<16xf32>
    %80 = vector.shape_cast %79 : vector<16xf32> to vector<16x1xf32>
    %cst_45 = arith.constant 3.200000e+01 : f32
    %81 = vector.broadcast %cst_45 : f32 to vector<16x1xf32>
    %82 = arith.divf %80, %81 : vector<16x1xf32>
    %83 = vector.broadcast %82 : vector<16x1xf32> to vector<16x32xf32>
    %84 = arith.subf %74, %83 : vector<16x32xf32>
    %85 = arith.mulf %84, %84 : vector<16x32xf32>
    %cst_46 = arith.constant dense<0.000000e+00> : vector<16xf32>
    %86 = vector.multi_reduction <add>, %85, %cst_46 [1] : vector<16x32xf32> to vector<16xf32>
    %87 = vector.shape_cast %86 : vector<16xf32> to vector<16x1xf32>
    %cst_47 = arith.constant 3.200000e+01 : f32
    %88 = vector.broadcast %cst_47 : f32 to vector<16x1xf32>
    %89 = arith.divf %87, %88 : vector<16x1xf32>
    %90 = vector.broadcast %82 : vector<16x1xf32> to vector<16x32xf32>
    %91 = arith.subf %74, %90 : vector<16x32xf32>
    %cst_48 = arith.constant 9.99999974E-6 : f32
    %92 = vector.broadcast %cst_48 : f32 to vector<16x1xf32>
    %93 = arith.addf %89, %92 : vector<16x1xf32>
    %94 = math.rsqrt %93 : vector<16x1xf32>
    %95 = vector.broadcast %94 : vector<16x1xf32> to vector<16x32xf32>
    %96 = arith.mulf %91, %95 : vector<16x32xf32>
    %97 = vector.broadcast %76 : vector<1x32xf32> to vector<16x32xf32>
    %98 = arith.mulf %96, %97 : vector<16x32xf32>
    %99 = vector.broadcast %78 : vector<1x32xf32> to vector<16x32xf32>
    %100 = arith.addf %98, %99 : vector<16x32xf32>
    %c0_49 = arith.constant 0 : index
    %c0_50 = arith.constant 0 : index
    %c0_51 = arith.constant 0 : index
    %101 = vector.load %arg12[%c0_49, %c0_50, %c0_51] : memref<1x32x64xf32, #tpu.memory_space<vmem>>, vector<1x32x64xf32>
    %102 = vector.shape_cast %101 : vector<1x32x64xf32> to vector<32x64xf32>
    %cst_52 = arith.constant dense<0.000000e+00> : vector<16x64xf32>
    %103 = tpu.matmul %100, %102, %cst_52 {dimension_numbers = #tpu.dot_dimension_numbers<[1], [0], [0], [1], [0, 0, 1, 1], [], []>} : vector<16x32xf32>, vector<32x64xf32>, vector<16x64xf32> -> vector<16x64xf32>
    %c0_53 = arith.constant 0 : index
    %c0_54 = arith.constant 0 : index
    %c0_55 = arith.constant 0 : index
    %104 = vector.load %arg13[%c0_53, %c0_54, %c0_55] : memref<1x1x64xf32, #tpu.memory_space<vmem>>, vector<1x1x64xf32>
    %105 = vector.shape_cast %104 : vector<1x1x64xf32> to vector<1x64xf32>
    %106 = vector.broadcast %105 : vector<1x64xf32> to vector<16x64xf32>
    %107 = arith.addf %103, %106 : vector<16x64xf32>
    %c0_56 = arith.constant 0 : index
    %c0_57 = arith.constant 0 : index
    %c0_58 = arith.constant 0 : index
    %108 = vector.load %arg14[%c0_56, %c0_57, %c0_58] : memref<1x32x64xf32, #tpu.memory_space<vmem>>, vector<1x32x64xf32>
    %109 = vector.shape_cast %108 : vector<1x32x64xf32> to vector<32x64xf32>
    %cst_59 = arith.constant dense<0.000000e+00> : vector<16x64xf32>
    %110 = tpu.matmul %4, %109, %cst_59 {dimension_numbers = #tpu.dot_dimension_numbers<[1], [0], [0], [1], [0, 0, 1, 1], [], []>} : vector<16x32xf32>, vector<32x64xf32>, vector<16x64xf32> -> vector<16x64xf32>
    %c0_60 = arith.constant 0 : index
    %c0_61 = arith.constant 0 : index
    %c0_62 = arith.constant 0 : index
    %111 = vector.load %arg15[%c0_60, %c0_61, %c0_62] : memref<1x1x64xf32, #tpu.memory_space<vmem>>, vector<1x1x64xf32>
    %112 = vector.shape_cast %111 : vector<1x1x64xf32> to vector<1x64xf32>
    %113 = vector.broadcast %112 : vector<1x64xf32> to vector<16x64xf32>
    %114 = arith.addf %110, %113 : vector<16x64xf32>
    %c0_63 = arith.constant 0 : index
    %c0_64 = arith.constant 0 : index
    %c0_65 = arith.constant 0 : index
    %115 = vector.load %arg18[%c0_63, %c0_64, %c0_65] : memref<1x32x64xf32, #tpu.memory_space<vmem>>, vector<1x32x64xf32>
    %116 = vector.shape_cast %115 : vector<1x32x64xf32> to vector<32x64xf32>
    %cst_66 = arith.constant dense<0.000000e+00> : vector<16x64xf32>
    %117 = tpu.matmul %16, %116, %cst_66 {dimension_numbers = #tpu.dot_dimension_numbers<[1], [0], [0], [1], [0, 0, 1, 1], [], []>} : vector<16x32xf32>, vector<32x64xf32>, vector<16x64xf32> -> vector<16x64xf32>
    %c0_67 = arith.constant 0 : index
    %c0_68 = arith.constant 0 : index
    %c0_69 = arith.constant 0 : index
    %118 = vector.load %arg19[%c0_67, %c0_68, %c0_69] : memref<1x1x64xf32, #tpu.memory_space<vmem>>, vector<1x1x64xf32>
    %119 = vector.shape_cast %118 : vector<1x1x64xf32> to vector<1x64xf32>
    %120 = vector.broadcast %119 : vector<1x64xf32> to vector<16x64xf32>
    %121 = arith.addf %117, %120 : vector<16x64xf32>
    %c0_70 = arith.constant 0 : index
    %c0_71 = arith.constant 0 : index
    %c0_72 = arith.constant 0 : index
    %122 = vector.load %arg16[%c0_70, %c0_71, %c0_72] : memref<1x32x32xf32, #tpu.memory_space<vmem>>, vector<1x32x32xf32>
    %123 = vector.shape_cast %122 : vector<1x32x32xf32> to vector<32x32xf32>
    %c0_73 = arith.constant 0 : index
    %c0_74 = arith.constant 0 : index
    %c0_75 = arith.constant 0 : index
    %124 = vector.load %arg17[%c0_73, %c0_74, %c0_75] : memref<1x1x32xf32, #tpu.memory_space<vmem>>, vector<1x1x32xf32>
    %125 = vector.shape_cast %124 : vector<1x1x32xf32> to vector<1x32xf32>
    %126 = vector.extract_strided_slice %107 {offsets = [0, 0], sizes = [16, 8], strides = [1, 1]} : vector<16x64xf32> to vector<16x8xf32>
    %127 = vector.extract_strided_slice %107 {offsets = [0, 8], sizes = [16, 8], strides = [1, 1]} : vector<16x64xf32> to vector<16x8xf32>
    %128 = vector.extract_strided_slice %107 {offsets = [0, 16], sizes = [16, 8], strides = [1, 1]} : vector<16x64xf32> to vector<16x8xf32>
    %129 = vector.extract_strided_slice %107 {offsets = [0, 24], sizes = [16, 8], strides = [1, 1]} : vector<16x64xf32> to vector<16x8xf32>
    %130 = tpu.concatenate %126, %127, %128, %129 in 0 : vector<16x8xf32>, vector<16x8xf32>, vector<16x8xf32>, vector<16x8xf32> -> vector<64x8xf32>
    %131 = vector.shape_cast %130 : vector<64x8xf32> to vector<8x8x8xf32>
    %132 = vector.extract_strided_slice %114 {offsets = [0, 0], sizes = [16, 8], strides = [1, 1]} : vector<16x64xf32> to vector<16x8xf32>
    %133 = vector.extract_strided_slice %114 {offsets = [0, 8], sizes = [16, 8], strides = [1, 1]} : vector<16x64xf32> to vector<16x8xf32>
    %134 = vector.extract_strided_slice %114 {offsets = [0, 16], sizes = [16, 8], strides = [1, 1]} : vector<16x64xf32> to vector<16x8xf32>
    %135 = vector.extract_strided_slice %114 {offsets = [0, 24], sizes = [16, 8], strides = [1, 1]} : vector<16x64xf32> to vector<16x8xf32>
    %136 = tpu.concatenate %132, %133, %134, %135 in 0 : vector<16x8xf32>, vector<16x8xf32>, vector<16x8xf32>, vector<16x8xf32> -> vector<64x8xf32>
    %137 = vector.shape_cast %136 : vector<64x8xf32> to vector<8x8x8xf32>
    %138 = vector.extract_strided_slice %114 {offsets = [0, 32], sizes = [16, 8], strides = [1, 1]} : vector<16x64xf32> to vector<16x8xf32>
    %139 = vector.extract_strided_slice %114 {offsets = [0, 40], sizes = [16, 8], strides = [1, 1]} : vector<16x64xf32> to vector<16x8xf32>
    %140 = vector.extract_strided_slice %114 {offsets = [0, 48], sizes = [16, 8], strides = [1, 1]} : vector<16x64xf32> to vector<16x8xf32>
    %141 = vector.extract_strided_slice %114 {offsets = [0, 56], sizes = [16, 8], strides = [1, 1]} : vector<16x64xf32> to vector<16x8xf32>
    %142 = tpu.concatenate %138, %139, %140, %141 in 0 : vector<16x8xf32>, vector<16x8xf32>, vector<16x8xf32>, vector<16x8xf32> -> vector<64x8xf32>
    %143 = vector.shape_cast %142 : vector<64x8xf32> to vector<8x8x8xf32>
    "tpu.trace_start"() <{level = 10 : i32, message = "bqd,bkd->bqk"}> : () -> ()
    %cst_76 = arith.constant dense<0.000000e+00> : vector<8x8x8xf32>
    %144 = tpu.matmul %131, %137, %cst_76 {dimension_numbers = #tpu.dot_dimension_numbers<[2], [2], [1], [1], [0, 0, 0, 1, 1, 1], [0], [0]>} : vector<8x8x8xf32>, vector<8x8x8xf32>, vector<8x8x8xf32> -> vector<8x8x8xf32>
    "tpu.trace_stop"() : () -> ()
    %cst_77 = arith.constant 0.353553385 : f32
    %145 = vector.broadcast %cst_77 : f32 to vector<8x8x8xf32>
    %146 = arith.mulf %144, %145 : vector<8x8x8xf32>
    %147 = arith.addf %146, %7 : vector<8x8x8xf32>
    %cst_78 = arith.constant dense<0xFF800000> : vector<8x8xf32>
    %148 = vector.multi_reduction <maximumf>, %147, %cst_78 [2] : vector<8x8x8xf32> to vector<8x8xf32>
    %149 = vector.shape_cast %148 : vector<8x8xf32> to vector<8x8x1xf32>
    %150 = vector.broadcast %149 : vector<8x8x1xf32> to vector<8x8x8xf32>
    %151 = arith.subf %147, %150 : vector<8x8x8xf32>
    %152 = math.exp %151 : vector<8x8x8xf32>
    %cst_79 = arith.constant dense<0.000000e+00> : vector<8x8xf32>
    %153 = vector.multi_reduction <add>, %152, %cst_79 [2] : vector<8x8x8xf32> to vector<8x8xf32>
    %154 = vector.shape_cast %153 : vector<8x8xf32> to vector<8x8x1xf32>
    %155 = tpu.reciprocal %154 {approx = true} : vector<8x8x1xf32> -> vector<8x8x1xf32>
    %156 = vector.broadcast %155 : vector<8x8x1xf32> to vector<8x8x8xf32>
    %157 = arith.mulf %152, %156 : vector<8x8x8xf32>
    "tpu.trace_start"() <{level = 10 : i32, message = "bqk,bkd->bqd"}> : () -> ()
    %cst_80 = arith.constant dense<0.000000e+00> : vector<8x8x8xf32>
    %158 = tpu.matmul %157, %143, %cst_80 {dimension_numbers = #tpu.dot_dimension_numbers<[2], [1], [1], [2], [0, 0, 0, 1, 1, 2], [0], [0]>} : vector<8x8x8xf32>, vector<8x8x8xf32>, vector<8x8x8xf32> -> vector<8x8x8xf32>
    "tpu.trace_stop"() : () -> ()
    %159 = vector.shape_cast %158 : vector<8x8x8xf32> to vector<4x16x8xf32>
    %160 = vector.extract_strided_slice %159 {offsets = [0, 0, 0], sizes = [1, 16, 8], strides = [1, 1, 1]} : vector<4x16x8xf32> to vector<1x16x8xf32>
    %161 = vector.shape_cast %160 : vector<1x16x8xf32> to vector<16x8xf32>
    %162 = vector.extract_strided_slice %159 {offsets = [1, 0, 0], sizes = [1, 16, 8], strides = [1, 1, 1]} : vector<4x16x8xf32> to vector<1x16x8xf32>
    %163 = vector.shape_cast %162 : vector<1x16x8xf32> to vector<16x8xf32>
    %164 = vector.extract_strided_slice %159 {offsets = [2, 0, 0], sizes = [1, 16, 8], strides = [1, 1, 1]} : vector<4x16x8xf32> to vector<1x16x8xf32>
    %165 = vector.shape_cast %164 : vector<1x16x8xf32> to vector<16x8xf32>
    %166 = vector.extract_strided_slice %159 {offsets = [3, 0, 0], sizes = [1, 16, 8], strides = [1, 1, 1]} : vector<4x16x8xf32> to vector<1x16x8xf32>
    %167 = vector.shape_cast %166 : vector<1x16x8xf32> to vector<16x8xf32>
    %168 = tpu.concatenate %161, %163, %165, %167 in 1 : vector<16x8xf32>, vector<16x8xf32>, vector<16x8xf32>, vector<16x8xf32> -> vector<16x32xf32>
    %cst_81 = arith.constant dense<0.000000e+00> : vector<16x32xf32>
    %169 = tpu.matmul %168, %123, %cst_81 {dimension_numbers = #tpu.dot_dimension_numbers<[1], [0], [0], [1], [0, 0, 1, 1], [], []>} : vector<16x32xf32>, vector<32x32xf32>, vector<16x32xf32> -> vector<16x32xf32>
    %170 = vector.broadcast %125 : vector<1x32xf32> to vector<16x32xf32>
    %171 = arith.addf %169, %170 : vector<16x32xf32>
    %c0_82 = arith.constant 0 : index
    %c0_83 = arith.constant 0 : index
    %c0_84 = arith.constant 0 : index
    %172 = vector.load %arg20[%c0_82, %c0_83, %c0_84] : memref<1x32x32xf32, #tpu.memory_space<vmem>>, vector<1x32x32xf32>
    %173 = vector.shape_cast %172 : vector<1x32x32xf32> to vector<32x32xf32>
    %c0_85 = arith.constant 0 : index
    %c0_86 = arith.constant 0 : index
    %c0_87 = arith.constant 0 : index
    %174 = vector.load %arg21[%c0_85, %c0_86, %c0_87] : memref<1x1x32xf32, #tpu.memory_space<vmem>>, vector<1x1x32xf32>
    %175 = vector.shape_cast %174 : vector<1x1x32xf32> to vector<1x32xf32>
    %176 = vector.extract_strided_slice %107 {offsets = [0, 32], sizes = [16, 8], strides = [1, 1]} : vector<16x64xf32> to vector<16x8xf32>
    %177 = vector.extract_strided_slice %107 {offsets = [0, 40], sizes = [16, 8], strides = [1, 1]} : vector<16x64xf32> to vector<16x8xf32>
    %178 = vector.extract_strided_slice %107 {offsets = [0, 48], sizes = [16, 8], strides = [1, 1]} : vector<16x64xf32> to vector<16x8xf32>
    %179 = vector.extract_strided_slice %107 {offsets = [0, 56], sizes = [16, 8], strides = [1, 1]} : vector<16x64xf32> to vector<16x8xf32>
    %180 = tpu.concatenate %176, %177, %178, %179 in 0 : vector<16x8xf32>, vector<16x8xf32>, vector<16x8xf32>, vector<16x8xf32> -> vector<64x8xf32>
    %181 = vector.shape_cast %180 : vector<64x8xf32> to vector<8x8x8xf32>
    %182 = vector.extract_strided_slice %121 {offsets = [0, 0], sizes = [16, 8], strides = [1, 1]} : vector<16x64xf32> to vector<16x8xf32>
    %183 = vector.extract_strided_slice %121 {offsets = [0, 8], sizes = [16, 8], strides = [1, 1]} : vector<16x64xf32> to vector<16x8xf32>
    %184 = vector.extract_strided_slice %121 {offsets = [0, 16], sizes = [16, 8], strides = [1, 1]} : vector<16x64xf32> to vector<16x8xf32>
    %185 = vector.extract_strided_slice %121 {offsets = [0, 24], sizes = [16, 8], strides = [1, 1]} : vector<16x64xf32> to vector<16x8xf32>
    %186 = tpu.concatenate %182, %183, %184, %185 in 0 : vector<16x8xf32>, vector<16x8xf32>, vector<16x8xf32>, vector<16x8xf32> -> vector<64x8xf32>
    %187 = vector.shape_cast %186 : vector<64x8xf32> to vector<8x8x8xf32>
    %188 = vector.extract_strided_slice %121 {offsets = [0, 32], sizes = [16, 8], strides = [1, 1]} : vector<16x64xf32> to vector<16x8xf32>
    %189 = vector.extract_strided_slice %121 {offsets = [0, 40], sizes = [16, 8], strides = [1, 1]} : vector<16x64xf32> to vector<16x8xf32>
    %190 = vector.extract_strided_slice %121 {offsets = [0, 48], sizes = [16, 8], strides = [1, 1]} : vector<16x64xf32> to vector<16x8xf32>
    %191 = vector.extract_strided_slice %121 {offsets = [0, 56], sizes = [16, 8], strides = [1, 1]} : vector<16x64xf32> to vector<16x8xf32>
    %192 = tpu.concatenate %188, %189, %190, %191 in 0 : vector<16x8xf32>, vector<16x8xf32>, vector<16x8xf32>, vector<16x8xf32> -> vector<64x8xf32>
    %193 = vector.shape_cast %192 : vector<64x8xf32> to vector<8x8x8xf32>
    "tpu.trace_start"() <{level = 10 : i32, message = "bqd,bkd->bqk"}> : () -> ()
    %cst_88 = arith.constant dense<0.000000e+00> : vector<8x8x8xf32>
    %194 = tpu.matmul %181, %187, %cst_88 {dimension_numbers = #tpu.dot_dimension_numbers<[2], [2], [1], [1], [0, 0, 0, 1, 1, 1], [0], [0]>} : vector<8x8x8xf32>, vector<8x8x8xf32>, vector<8x8x8xf32> -> vector<8x8x8xf32>
    "tpu.trace_stop"() : () -> ()
    %cst_89 = arith.constant 0.353553385 : f32
    %195 = vector.broadcast %cst_89 : f32 to vector<8x8x8xf32>
    %196 = arith.mulf %194, %195 : vector<8x8x8xf32>
    %cst_90 = arith.constant dense<0xFF800000> : vector<8x8xf32>
    %197 = vector.multi_reduction <maximumf>, %196, %cst_90 [2] : vector<8x8x8xf32> to vector<8x8xf32>
    %198 = vector.shape_cast %197 : vector<8x8xf32> to vector<8x8x1xf32>
    %199 = vector.broadcast %198 : vector<8x8x1xf32> to vector<8x8x8xf32>
    %200 = arith.subf %196, %199 : vector<8x8x8xf32>
    %201 = math.exp %200 : vector<8x8x8xf32>
    %cst_91 = arith.constant dense<0.000000e+00> : vector<8x8xf32>
    %202 = vector.multi_reduction <add>, %201, %cst_91 [2] : vector<8x8x8xf32> to vector<8x8xf32>
    %203 = vector.shape_cast %202 : vector<8x8xf32> to vector<8x8x1xf32>
    %204 = tpu.reciprocal %203 {approx = true} : vector<8x8x1xf32> -> vector<8x8x1xf32>
    %205 = vector.broadcast %204 : vector<8x8x1xf32> to vector<8x8x8xf32>
    %206 = arith.mulf %201, %205 : vector<8x8x8xf32>
    "tpu.trace_start"() <{level = 10 : i32, message = "bqk,bkd->bqd"}> : () -> ()
    %cst_92 = arith.constant dense<0.000000e+00> : vector<8x8x8xf32>
    %207 = tpu.matmul %206, %193, %cst_92 {dimension_numbers = #tpu.dot_dimension_numbers<[2], [1], [1], [2], [0, 0, 0, 1, 1, 2], [0], [0]>} : vector<8x8x8xf32>, vector<8x8x8xf32>, vector<8x8x8xf32> -> vector<8x8x8xf32>
    "tpu.trace_stop"() : () -> ()
    %208 = vector.shape_cast %207 : vector<8x8x8xf32> to vector<4x16x8xf32>
    %209 = vector.extract_strided_slice %208 {offsets = [0, 0, 0], sizes = [1, 16, 8], strides = [1, 1, 1]} : vector<4x16x8xf32> to vector<1x16x8xf32>
    %210 = vector.shape_cast %209 : vector<1x16x8xf32> to vector<16x8xf32>
    %211 = vector.extract_strided_slice %208 {offsets = [1, 0, 0], sizes = [1, 16, 8], strides = [1, 1, 1]} : vector<4x16x8xf32> to vector<1x16x8xf32>
    %212 = vector.shape_cast %211 : vector<1x16x8xf32> to vector<16x8xf32>
    %213 = vector.extract_strided_slice %208 {offsets = [2, 0, 0], sizes = [1, 16, 8], strides = [1, 1, 1]} : vector<4x16x8xf32> to vector<1x16x8xf32>
    %214 = vector.shape_cast %213 : vector<1x16x8xf32> to vector<16x8xf32>
    %215 = vector.extract_strided_slice %208 {offsets = [3, 0, 0], sizes = [1, 16, 8], strides = [1, 1, 1]} : vector<4x16x8xf32> to vector<1x16x8xf32>
    %216 = vector.shape_cast %215 : vector<1x16x8xf32> to vector<16x8xf32>
    %217 = tpu.concatenate %210, %212, %214, %216 in 1 : vector<16x8xf32>, vector<16x8xf32>, vector<16x8xf32>, vector<16x8xf32> -> vector<16x32xf32>
    %cst_93 = arith.constant dense<0.000000e+00> : vector<16x32xf32>
    %218 = tpu.matmul %217, %173, %cst_93 {dimension_numbers = #tpu.dot_dimension_numbers<[1], [0], [0], [1], [0, 0, 1, 1], [], []>} : vector<16x32xf32>, vector<32x32xf32>, vector<16x32xf32> -> vector<16x32xf32>
    %219 = vector.broadcast %175 : vector<1x32xf32> to vector<16x32xf32>
    %220 = arith.addf %218, %219 : vector<16x32xf32>
    %221 = arith.addf %100, %171 : vector<16x32xf32>
    %222 = arith.addf %221, %220 : vector<16x32xf32>
    %c0_94 = arith.constant 0 : index
    %c0_95 = arith.constant 0 : index
    %c0_96 = arith.constant 0 : index
    %223 = vector.load %arg24[%c0_94, %c0_95, %c0_96] : memref<1x1x32xf32, #tpu.memory_space<vmem>>, vector<1x1x32xf32>
    %224 = vector.shape_cast %223 : vector<1x1x32xf32> to vector<1x32xf32>
    %c0_97 = arith.constant 0 : index
    %c0_98 = arith.constant 0 : index
    %c0_99 = arith.constant 0 : index
    %225 = vector.load %arg25[%c0_97, %c0_98, %c0_99] : memref<1x1x32xf32, #tpu.memory_space<vmem>>, vector<1x1x32xf32>
    %226 = vector.shape_cast %225 : vector<1x1x32xf32> to vector<1x32xf32>
    %cst_100 = arith.constant dense<0.000000e+00> : vector<16xf32>
    %227 = vector.multi_reduction <add>, %222, %cst_100 [1] : vector<16x32xf32> to vector<16xf32>
    %228 = vector.shape_cast %227 : vector<16xf32> to vector<16x1xf32>
    %cst_101 = arith.constant 3.200000e+01 : f32
    %229 = vector.broadcast %cst_101 : f32 to vector<16x1xf32>
    %230 = arith.divf %228, %229 : vector<16x1xf32>
    %231 = vector.broadcast %230 : vector<16x1xf32> to vector<16x32xf32>
    %232 = arith.subf %222, %231 : vector<16x32xf32>
    %233 = arith.mulf %232, %232 : vector<16x32xf32>
    %cst_102 = arith.constant dense<0.000000e+00> : vector<16xf32>
    %234 = vector.multi_reduction <add>, %233, %cst_102 [1] : vector<16x32xf32> to vector<16xf32>
    %235 = vector.shape_cast %234 : vector<16xf32> to vector<16x1xf32>
    %cst_103 = arith.constant 3.200000e+01 : f32
    %236 = vector.broadcast %cst_103 : f32 to vector<16x1xf32>
    %237 = arith.divf %235, %236 : vector<16x1xf32>
    %238 = vector.broadcast %230 : vector<16x1xf32> to vector<16x32xf32>
    %239 = arith.subf %222, %238 : vector<16x32xf32>
    %cst_104 = arith.constant 9.99999974E-6 : f32
    %240 = vector.broadcast %cst_104 : f32 to vector<16x1xf32>
    %241 = arith.addf %237, %240 : vector<16x1xf32>
    %242 = math.rsqrt %241 : vector<16x1xf32>
    %243 = vector.broadcast %242 : vector<16x1xf32> to vector<16x32xf32>
    %244 = arith.mulf %239, %243 : vector<16x32xf32>
    %245 = vector.broadcast %224 : vector<1x32xf32> to vector<16x32xf32>
    %246 = arith.mulf %244, %245 : vector<16x32xf32>
    %247 = vector.broadcast %226 : vector<1x32xf32> to vector<16x32xf32>
    %248 = arith.addf %246, %247 : vector<16x32xf32>
    %c0_105 = arith.constant 0 : index
    %c0_106 = arith.constant 0 : index
    %c0_107 = arith.constant 0 : index
    %249 = vector.load %arg28[%c0_105, %c0_106, %c0_107] : memref<1x32x64xf32, #tpu.memory_space<vmem>>, vector<1x32x64xf32>
    %250 = vector.shape_cast %249 : vector<1x32x64xf32> to vector<32x64xf32>
    %cst_108 = arith.constant dense<0.000000e+00> : vector<16x64xf32>
    %251 = tpu.matmul %248, %250, %cst_108 {dimension_numbers = #tpu.dot_dimension_numbers<[1], [0], [0], [1], [0, 0, 1, 1], [], []>} : vector<16x32xf32>, vector<32x64xf32>, vector<16x64xf32> -> vector<16x64xf32>
    %c0_109 = arith.constant 0 : index
    %c0_110 = arith.constant 0 : index
    %c0_111 = arith.constant 0 : index
    %252 = vector.load %arg29[%c0_109, %c0_110, %c0_111] : memref<1x1x64xf32, #tpu.memory_space<vmem>>, vector<1x1x64xf32>
    %253 = vector.shape_cast %252 : vector<1x1x64xf32> to vector<1x64xf32>
    %254 = vector.broadcast %253 : vector<1x64xf32> to vector<16x64xf32>
    %255 = arith.addf %251, %254 : vector<16x64xf32>
    %cst_112 = arith.constant 0.000000e+00 : f32
    %256 = vector.broadcast %cst_112 : f32 to vector<16x64xf32>
    %257 = arith.maximumf %255, %256 : vector<16x64xf32>
    %c0_113 = arith.constant 0 : index
    %c0_114 = arith.constant 0 : index
    %c0_115 = arith.constant 0 : index
    %258 = vector.load %arg30[%c0_113, %c0_114, %c0_115] : memref<1x64x32xf32, #tpu.memory_space<vmem>>, vector<1x64x32xf32>
    %259 = vector.shape_cast %258 : vector<1x64x32xf32> to vector<64x32xf32>
    %cst_116 = arith.constant dense<0.000000e+00> : vector<16x32xf32>
    %260 = tpu.matmul %257, %259, %cst_116 {dimension_numbers = #tpu.dot_dimension_numbers<[1], [0], [0], [1], [0, 0, 1, 1], [], []>} : vector<16x64xf32>, vector<64x32xf32>, vector<16x32xf32> -> vector<16x32xf32>
    %c0_117 = arith.constant 0 : index
    %c0_118 = arith.constant 0 : index
    %c0_119 = arith.constant 0 : index
    %261 = vector.load %arg31[%c0_117, %c0_118, %c0_119] : memref<1x1x32xf32, #tpu.memory_space<vmem>>, vector<1x1x32xf32>
    %262 = vector.shape_cast %261 : vector<1x1x32xf32> to vector<1x32xf32>
    %263 = vector.broadcast %262 : vector<1x32xf32> to vector<16x32xf32>
    %264 = arith.addf %260, %263 : vector<16x32xf32>
    %265 = arith.addf %248, %264 : vector<16x32xf32>
    %c0_120 = arith.constant 0 : index
    %c0_121 = arith.constant 0 : index
    %c0_122 = arith.constant 0 : index
    %266 = vector.load %arg26[%c0_120, %c0_121, %c0_122] : memref<1x1x32xf32, #tpu.memory_space<vmem>>, vector<1x1x32xf32>
    %267 = vector.shape_cast %266 : vector<1x1x32xf32> to vector<1x32xf32>
    %c0_123 = arith.constant 0 : index
    %c0_124 = arith.constant 0 : index
    %c0_125 = arith.constant 0 : index
    %268 = vector.load %arg27[%c0_123, %c0_124, %c0_125] : memref<1x1x32xf32, #tpu.memory_space<vmem>>, vector<1x1x32xf32>
    %269 = vector.shape_cast %268 : vector<1x1x32xf32> to vector<1x32xf32>
    %cst_126 = arith.constant dense<0.000000e+00> : vector<16xf32>
    %270 = vector.multi_reduction <add>, %265, %cst_126 [1] : vector<16x32xf32> to vector<16xf32>
    %271 = vector.shape_cast %270 : vector<16xf32> to vector<16x1xf32>
    %cst_127 = arith.constant 3.200000e+01 : f32
    %272 = vector.broadcast %cst_127 : f32 to vector<16x1xf32>
    %273 = arith.divf %271, %272 : vector<16x1xf32>
    %274 = vector.broadcast %273 : vector<16x1xf32> to vector<16x32xf32>
    %275 = arith.subf %265, %274 : vector<16x32xf32>
    %276 = arith.mulf %275, %275 : vector<16x32xf32>
    %cst_128 = arith.constant dense<0.000000e+00> : vector<16xf32>
    %277 = vector.multi_reduction <add>, %276, %cst_128 [1] : vector<16x32xf32> to vector<16xf32>
    %278 = vector.shape_cast %277 : vector<16xf32> to vector<16x1xf32>
    %cst_129 = arith.constant 3.200000e+01 : f32
    %279 = vector.broadcast %cst_129 : f32 to vector<16x1xf32>
    %280 = arith.divf %278, %279 : vector<16x1xf32>
    %281 = vector.broadcast %273 : vector<16x1xf32> to vector<16x32xf32>
    %282 = arith.subf %265, %281 : vector<16x32xf32>
    %cst_130 = arith.constant 9.99999974E-6 : f32
    %283 = vector.broadcast %cst_130 : f32 to vector<16x1xf32>
    %284 = arith.addf %280, %283 : vector<16x1xf32>
    %285 = math.rsqrt %284 : vector<16x1xf32>
    %286 = vector.broadcast %285 : vector<16x1xf32> to vector<16x32xf32>
    %287 = arith.mulf %282, %286 : vector<16x32xf32>
    %288 = vector.broadcast %267 : vector<1x32xf32> to vector<16x32xf32>
    %289 = arith.mulf %287, %288 : vector<16x32xf32>
    %290 = vector.broadcast %269 : vector<1x32xf32> to vector<16x32xf32>
    %291 = arith.addf %289, %290 : vector<16x32xf32>
    %c0_131 = arith.constant 0 : index
    %c0_132 = arith.constant 0 : index
    %292 = vector.load %arg35[%c0_131, %c0_132] : memref<16x32xf32, #tpu.memory_space<vmem>>, vector<16x32xf32>
    tpu.vector_store %arg35[%c0_131, %c0_132], %291 {strides = array<i32>} : memref<16x32xf32, #tpu.memory_space<vmem>>, vector<16x32xf32>,
    %c1_i32 = arith.constant 1 : i32
    %293 = arith.cmpi eq, %arg0, %c1_i32 : i32
    %294 = arith.extui %293 : i1 to i32
    %c0_i32_133 = arith.constant 0 : i32
    %295 = arith.cmpi ne, %294, %c0_i32_133 : i32
    scf.if %295 {
      %c0_134 = arith.constant 0 : index
      %c0_135 = arith.constant 0 : index
      %296 = vector.load %arg32[%c0_134, %c0_135] : memref<32x128xf32, #tpu.memory_space<vmem>>, vector<32x128xf32>
      %cst_136 = arith.constant dense<0.000000e+00> : vector<16x128xf32>
      %297 = tpu.matmul %291, %296, %cst_136 {dimension_numbers = #tpu.dot_dimension_numbers<[1], [0], [0], [1], [0, 0, 1, 1], [], []>} : vector<16x32xf32>, vector<32x128xf32>, vector<16x128xf32> -> vector<16x128xf32>
      %c0_137 = arith.constant 0 : index
      %c0_138 = arith.constant 0 : index
      %298 = vector.load %arg33[%c0_137, %c0_138] : memref<1x128xf32, #tpu.memory_space<vmem>>, vector<1x128xf32>
      %299 = vector.broadcast %298 : vector<1x128xf32> to vector<16x128xf32>
      %300 = arith.addf %297, %299 : vector<16x128xf32>
      %cst_139 = arith.constant dense<0xFF800000> : vector<16xf32>
      %301 = vector.multi_reduction <maximumf>, %300, %cst_139 [1] : vector<16x128xf32> to vector<16xf32>
      %302 = vector.shape_cast %301 : vector<16xf32> to vector<16x1xf32>
      %303 = vector.broadcast %302 : vector<16x1xf32> to vector<16x128xf32>
      %304 = arith.subf %300, %303 : vector<16x128xf32>
      %305 = math.exp %304 : vector<16x128xf32>
      %cst_140 = arith.constant dense<0.000000e+00> : vector<16xf32>
      %306 = vector.multi_reduction <add>, %305, %cst_140 [1] : vector<16x128xf32> to vector<16xf32>
      %307 = vector.shape_cast %306 : vector<16xf32> to vector<16x1xf32>
      %308 = math.log %307 : vector<16x1xf32>
      %309 = vector.broadcast %308 : vector<16x1xf32> to vector<16x128xf32>
      %310 = arith.subf %304, %309 : vector<16x128xf32>
      %c0_141 = arith.constant 0 : index
      %c0_142 = arith.constant 0 : index
      %311 = vector.load %arg34[%c0_141, %c0_142] : memref<16x128xf32, #tpu.memory_space<vmem>>, vector<16x128xf32>
      tpu.vector_store %arg34[%c0_141, %c0_142], %310 {strides = array<i32>} : memref<16x128xf32, #tpu.memory_space<vmem>>, vector<16x128xf32>,
    } else {
    }
    return
  }
  func.func @transform_0(%arg0: i32) -> (i32, i32) {
    %c0_i32 = arith.constant 0 : i32
    %c0_i32_0 = arith.constant 0 : i32
    %c0_i32_1 = arith.constant 0 : i32
    return %c0_i32, %c0_i32_0 : i32, i32
  }
  func.func @transform_1(%arg0: i32) -> (i32, i32) {
    %c0_i32 = arith.constant 0 : i32
    %c0_i32_0 = arith.constant 0 : i32
    %c0_i32_1 = arith.constant 0 : i32
    return %c0_i32, %c0_i32_0 : i32, i32
  }
  func.func @transform_2(%arg0: i32) -> (i32, i32) {
    %c0_i32 = arith.constant 0 : i32
    %c0_i32_0 = arith.constant 0 : i32
    %c0_i32_1 = arith.constant 0 : i32
    return %c0_i32, %c0_i32_0 : i32, i32
  }
  func.func @transform_3(%arg0: i32) -> (i32, i32, i32) {
    %c0_i32 = arith.constant 0 : i32
    %c0_i32_0 = arith.constant 0 : i32
    %c0_i32_1 = arith.constant 0 : i32
    %c0_i32_2 = arith.constant 0 : i32
    return %c0_i32, %c0_i32_0, %c0_i32_1 : i32, i32, i32
  }
  func.func @transform_4(%arg0: i32) -> (i32, i32, i32) {
    %c0_i32 = arith.constant 0 : i32
    %c0_i32_0 = arith.constant 0 : i32
    %c0_i32_1 = arith.constant 0 : i32
    %c0_i32_2 = arith.constant 0 : i32
    return %c0_i32, %c0_i32_0, %c0_i32_1 : i32, i32, i32
  }
  func.func @transform_5(%arg0: i32) -> (i32, i32, i32) {
    %c0_i32 = arith.constant 0 : i32
    %c0_i32_0 = arith.constant 0 : i32
    %c0_i32_1 = arith.constant 0 : i32
    return %arg0, %c0_i32, %c0_i32_0 : i32, i32, i32
  }
  func.func @transform_6(%arg0: i32) -> (i32, i32, i32) {
    %c0_i32 = arith.constant 0 : i32
    %c0_i32_0 = arith.constant 0 : i32
    %c0_i32_1 = arith.constant 0 : i32
    return %arg0, %c0_i32, %c0_i32_0 : i32, i32, i32
  }
  func.func @transform_7(%arg0: i32) -> (i32, i32, i32) {
    %c0_i32 = arith.constant 0 : i32
    %c0_i32_0 = arith.constant 0 : i32
    %c0_i32_1 = arith.constant 0 : i32
    return %arg0, %c0_i32, %c0_i32_0 : i32, i32, i32
  }
  func.func @transform_8(%arg0: i32) -> (i32, i32, i32) {
    %c0_i32 = arith.constant 0 : i32
    %c0_i32_0 = arith.constant 0 : i32
    %c0_i32_1 = arith.constant 0 : i32
    return %arg0, %c0_i32, %c0_i32_0 : i32, i32, i32
  }
  func.func @transform_9(%arg0: i32) -> (i32, i32, i32) {
    %c0_i32 = arith.constant 0 : i32
    %c0_i32_0 = arith.constant 0 : i32
    %c0_i32_1 = arith.constant 0 : i32
    return %arg0, %c0_i32, %c0_i32_0 : i32, i32, i32
  }
  func.func @transform_10(%arg0: i32) -> (i32, i32, i32) {
    %c0_i32 = arith.constant 0 : i32
    %c0_i32_0 = arith.constant 0 : i32
    %c0_i32_1 = arith.constant 0 : i32
    return %arg0, %c0_i32, %c0_i32_0 : i32, i32, i32
  }
  func.func @transform_11(%arg0: i32) -> (i32, i32, i32) {
    %c0_i32 = arith.constant 0 : i32
    %c0_i32_0 = arith.constant 0 : i32
    %c0_i32_1 = arith.constant 0 : i32
    return %arg0, %c0_i32, %c0_i32_0 : i32, i32, i32
  }
  func.func @transform_12(%arg0: i32) -> (i32, i32, i32) {
    %c0_i32 = arith.constant 0 : i32
    %c0_i32_0 = arith.constant 0 : i32
    %c0_i32_1 = arith.constant 0 : i32
    return %arg0, %c0_i32, %c0_i32_0 : i32, i32, i32
  }
  func.func @transform_13(%arg0: i32) -> (i32, i32, i32) {
    %c0_i32 = arith.constant 0 : i32
    %c0_i32_0 = arith.constant 0 : i32
    %c0_i32_1 = arith.constant 0 : i32
    return %arg0, %c0_i32, %c0_i32_0 : i32, i32, i32
  }
  func.func @transform_14(%arg0: i32) -> (i32, i32, i32) {
    %c0_i32 = arith.constant 0 : i32
    %c0_i32_0 = arith.constant 0 : i32
    %c0_i32_1 = arith.constant 0 : i32
    return %arg0, %c0_i32, %c0_i32_0 : i32, i32, i32
  }
  func.func @transform_15(%arg0: i32) -> (i32, i32, i32) {
    %c0_i32 = arith.constant 0 : i32
    %c0_i32_0 = arith.constant 0 : i32
    %c0_i32_1 = arith.constant 0 : i32
    return %arg0, %c0_i32, %c0_i32_0 : i32, i32, i32
  }
  func.func @transform_16(%arg0: i32) -> (i32, i32, i32) {
    %c0_i32 = arith.constant 0 : i32
    %c0_i32_0 = arith.constant 0 : i32
    %c0_i32_1 = arith.constant 0 : i32
    return %arg0, %c0_i32, %c0_i32_0 : i32, i32, i32
  }
  func.func @transform_17(%arg0: i32) -> (i32, i32, i32) {
    %c0_i32 = arith.constant 0 : i32
    %c0_i32_0 = arith.constant 0 : i32
    %c0_i32_1 = arith.constant 0 : i32
    return %arg0, %c0_i32, %c0_i32_0 : i32, i32, i32
  }
  func.func @transform_18(%arg0: i32) -> (i32, i32, i32) {
    %c0_i32 = arith.constant 0 : i32
    %c0_i32_0 = arith.constant 0 : i32
    %c0_i32_1 = arith.constant 0 : i32
    return %arg0, %c0_i32, %c0_i32_0 : i32, i32, i32
  }
  func.func @transform_19(%arg0: i32) -> (i32, i32, i32) {
    %c0_i32 = arith.constant 0 : i32
    %c0_i32_0 = arith.constant 0 : i32
    %c0_i32_1 = arith.constant 0 : i32
    return %arg0, %c0_i32, %c0_i32_0 : i32, i32, i32
  }
  func.func @transform_20(%arg0: i32) -> (i32, i32, i32) {
    %c0_i32 = arith.constant 0 : i32
    %c0_i32_0 = arith.constant 0 : i32
    %c0_i32_1 = arith.constant 0 : i32
    return %arg0, %c0_i32, %c0_i32_0 : i32, i32, i32
  }
  func.func @transform_21(%arg0: i32) -> (i32, i32, i32) {
    %c0_i32 = arith.constant 0 : i32
    %c0_i32_0 = arith.constant 0 : i32
    %c0_i32_1 = arith.constant 0 : i32
    return %arg0, %c0_i32, %c0_i32_0 : i32, i32, i32
  }
  func.func @transform_22(%arg0: i32) -> (i32, i32, i32) {
    %c0_i32 = arith.constant 0 : i32
    %c0_i32_0 = arith.constant 0 : i32
    %c0_i32_1 = arith.constant 0 : i32
    return %arg0, %c0_i32, %c0_i32_0 : i32, i32, i32
  }
  func.func @transform_23(%arg0: i32) -> (i32, i32, i32) {
    %c0_i32 = arith.constant 0 : i32
    %c0_i32_0 = arith.constant 0 : i32
    %c0_i32_1 = arith.constant 0 : i32
    return %arg0, %c0_i32, %c0_i32_0 : i32, i32, i32
  }
  func.func @transform_24(%arg0: i32) -> (i32, i32, i32) {
    %c0_i32 = arith.constant 0 : i32
    %c0_i32_0 = arith.constant 0 : i32
    %c0_i32_1 = arith.constant 0 : i32
    return %arg0, %c0_i32, %c0_i32_0 : i32, i32, i32
  }
  func.func @transform_25(%arg0: i32) -> (i32, i32, i32) {
    %c0_i32 = arith.constant 0 : i32
    %c0_i32_0 = arith.constant 0 : i32
    %c0_i32_1 = arith.constant 0 : i32
    return %arg0, %c0_i32, %c0_i32_0 : i32, i32, i32
  }
  func.func @transform_26(%arg0: i32) -> (i32, i32, i32) {
    %c0_i32 = arith.constant 0 : i32
    %c0_i32_0 = arith.constant 0 : i32
    %c0_i32_1 = arith.constant 0 : i32
    return %arg0, %c0_i32, %c0_i32_0 : i32, i32, i32
  }
  func.func @transform_27(%arg0: i32) -> (i32, i32, i32) {
    %c0_i32 = arith.constant 0 : i32
    %c0_i32_0 = arith.constant 0 : i32
    %c0_i32_1 = arith.constant 0 : i32
    return %arg0, %c0_i32, %c0_i32_0 : i32, i32, i32
  }
  func.func @transform_28(%arg0: i32) -> (i32, i32, i32) {
    %c0_i32 = arith.constant 0 : i32
    %c0_i32_0 = arith.constant 0 : i32
    %c0_i32_1 = arith.constant 0 : i32
    return %arg0, %c0_i32, %c0_i32_0 : i32, i32, i32
  }
  func.func @transform_29(%arg0: i32) -> (i32, i32, i32) {
    %c0_i32 = arith.constant 0 : i32
    %c0_i32_0 = arith.constant 0 : i32
    %c0_i32_1 = arith.constant 0 : i32
    return %arg0, %c0_i32, %c0_i32_0 : i32, i32, i32
  }
  func.func @transform_30(%arg0: i32) -> (i32, i32, i32) {
    %c0_i32 = arith.constant 0 : i32
    %c0_i32_0 = arith.constant 0 : i32
    %c0_i32_1 = arith.constant 0 : i32
    return %arg0, %c0_i32, %c0_i32_0 : i32, i32, i32
  }
  func.func @transform_31(%arg0: i32) -> (i32, i32) {
    %c0_i32 = arith.constant 0 : i32
    %c0_i32_0 = arith.constant 0 : i32
    %c0_i32_1 = arith.constant 0 : i32
    return %c0_i32, %c0_i32_0 : i32, i32
  }
  func.func @transform_32(%arg0: i32) -> (i32, i32) {
    %c0_i32 = arith.constant 0 : i32
    %c0_i32_0 = arith.constant 0 : i32
    %c0_i32_1 = arith.constant 0 : i32
    return %c0_i32, %c0_i32_0 : i32, i32
  }
  func.func @transform_33(%arg0: i32) -> (i32, i32) {
    %c0_i32 = arith.constant 0 : i32
    %c0_i32_0 = arith.constant 0 : i32
    %c0_i32_1 = arith.constant 0 : i32
    return %c0_i32, %c0_i32_0 : i32, i32
  }
}

</mosaic_0001>

<llo_original>
// kernel: decoder_forward.1
$region0: #{decoder_forward.1}
  #allocation0 [shape = 'u32[]', space=smem, size = 0x4, offset = 0x4, fixed_abs, tag = 'smem constant byte address 0x4 - core index']
  #allocation1 [shape = 'u32[72,128]{1,0:T(1,128)}', space=vmem, size = 0x9000, scoped, tag = 'internal scratch']
  #allocation2 [shape = 'f32[16,32]{1,0:T(8,128)}', space=vmem, size = 0x2000, scoped, tag = 'scratch operand']
  %s0 = inlined_call_operand.smem [shape: u32[34], index: -1, kind: input, shape index: {}]
  %s1 = sld [smem:[%s0]]
  %s2 = scalar_lea.smem %s0, 1
  %s3 = sld [smem:[%s2]]
  %s4 = scalar_lea.smem %s0, 2
  %s5 = sld [smem:[%s4]]
  %s6 = scalar_lea.smem %s0, 3
  %s7 = sld [smem:[%s6]]
  %s8 = scalar_lea.smem %s0, 4
  %s9 = sld [smem:[%s8]]
  %s10 = scalar_lea.smem %s0, 5
  %s11 = sld [smem:[%s10]]
  %s12 = scalar_lea.smem %s0, 6
  %s13 = sld [smem:[%s12]]
  %s14 = scalar_lea.smem %s0, 7
  %s15 = sld [smem:[%s14]]
  %s16 = scalar_lea.smem %s0, 8
  %s17 = sld [smem:[%s16]]
  %s18 = scalar_lea.smem %s0, 9
  %s19 = sld [smem:[%s18]]
  %s20 = scalar_lea.smem %s0, 10
  %s21 = sld [smem:[%s20]]
  %s22 = scalar_lea.smem %s0, 11
  %s23 = sld [smem:[%s22]]
  %s24 = scalar_lea.smem %s0, 12
  %s25 = sld [smem:[%s24]]
  %s26 = scalar_lea.smem %s0, 13
  %s27 = sld [smem:[%s26]]
  %s28 = scalar_lea.smem %s0, 14
  %s29 = sld [smem:[%s28]]
  %s30 = scalar_lea.smem %s0, 15
  %s31 = sld [smem:[%s30]]
  %s32 = scalar_lea.smem %s0, 16
  %s33 = sld [smem:[%s32]]
  %s34 = scalar_lea.smem %s0, 17
  %s35 = sld [smem:[%s34]]
  %s36 = scalar_lea.smem %s0, 18
  %s37 = sld [smem:[%s36]]
  %s38 = scalar_lea.smem %s0, 19
  %s39 = sld [smem:[%s38]]
  %s40 = scalar_lea.smem %s0, 20
  %s41 = sld [smem:[%s40]]
  %s42 = scalar_lea.smem %s0, 21
  %s43 = sld [smem:[%s42]]
  %s44 = scalar_lea.smem %s0, 22
  %s45 = sld [smem:[%s44]]
  %s46 = scalar_lea.smem %s0, 23
  %s47 = sld [smem:[%s46]]
  %s48 = scalar_lea.smem %s0, 24
  %s49 = sld [smem:[%s48]]
  %s50 = scalar_lea.smem %s0, 25
  %s51 = sld [smem:[%s50]]
  %s52 = scalar_lea.smem %s0, 26
  %s53 = sld [smem:[%s52]]
  %s54 = scalar_lea.smem %s0, 27
  %s55 = sld [smem:[%s54]]
  %s56 = scalar_lea.smem %s0, 28
  %s57 = sld [smem:[%s56]]
  %s58 = scalar_lea.smem %s0, 29
  %s59 = sld [smem:[%s58]]
  %s60 = scalar_lea.smem %s0, 30
  %s61 = sld [smem:[%s60]]
  %s62 = scalar_lea.smem %s0, 31
  %s63 = sld [smem:[%s62]]
  %s64 = scalar_lea.smem %s0, 32
  %s65 = sld [smem:[%s64]]
  %s66 = scalar_lea.smem %s0, 33
  %s67 = sld [smem:[%s66]]
  %s68 = sld [smem:[#allocation0]]
  $region173: #{decoder_forward.1} parent=0
    _
  %s70 = ssub.s32 1, %s68
  %s71 = scalar_select 0, %s70, %s68
  loop: start=0, step=1, limit=4
  $region2: #{decoder_forward.1} parent=0 // loop_pre_header
    _
  $region3: #{decoder_forward.1} parent=0 // loop_header
    %s73 = sphi 0, %s77
    %p74 = scmp.ge.s32.totalorder %s73, 4
    %s81 = sphi 0, %s81
    %s83 = sphi 0, %s81
    %s84 = sphi 0, %s83
    %s98 = sphi 0, %s84
    %s102 = sphi 0, %s102
    %s104 = sphi 0, %s102
    %s105 = sphi 0, %s104
    %s119 = sphi 0, %s105
    %s123 = sphi 0, %s123
    %s125 = sphi 0, %s123
    %s126 = sphi 0, %s125
    %s140 = sphi 0, %s126
    %s144 = sphi 0, %s144
    %s146 = sphi 0, %s144
    %s147 = sphi 0, %s146
    %s161 = sphi 0, %s147
    %s165 = sphi 0, %s165
    %s167 = sphi 0, %s165
    %s168 = sphi 0, %s167
    %s182 = sphi 0, %s168
    %s188 = sphi 0, %s190
    %s191 = sphi 0, %s188
    %s192 = sphi 0, %s191
    %s208 = sphi 0, %s192
    %s214 = sphi 0, %s216
    %s217 = sphi 0, %s214
    %s218 = sphi 0, %s217
    %s234 = sphi 0, %s218
    %s240 = sphi 0, %s242
    %s243 = sphi 0, %s240
    %s244 = sphi 0, %s243
    %s260 = sphi 0, %s244
    %s266 = sphi 0, %s268
    %s269 = sphi 0, %s266
    %s270 = sphi 0, %s269
    %s286 = sphi 0, %s270
    %s292 = sphi 0, %s294
    %s295 = sphi 0, %s292
    %s296 = sphi 0, %s295
    %s312 = sphi 0, %s296
    %s318 = sphi 0, %s320
    %s321 = sphi 0, %s318
    %s322 = sphi 0, %s321
    %s338 = sphi 0, %s322
    %s344 = sphi 0, %s346
    %s347 = sphi 0, %s344
    %s348 = sphi 0, %s347
    %s364 = sphi 0, %s348
    %s370 = sphi 0, %s372
    %s373 = sphi 0, %s370
    %s374 = sphi 0, %s373
    %s390 = sphi 0, %s374
    %s396 = sphi 0, %s398
    %s399 = sphi 0, %s396
    %s400 = sphi 0, %s399
    %s416 = sphi 0, %s400
    %s422 = sphi 0, %s424
    %s425 = sphi 0, %s422
    %s426 = sphi 0, %s425
    %s442 = sphi 0, %s426
    %s448 = sphi 0, %s450
    %s451 = sphi 0, %s448
    %s452 = sphi 0, %s451
    %s468 = sphi 0, %s452
    %s474 = sphi 0, %s476
    %s477 = sphi 0, %s474
    %s478 = sphi 0, %s477
    %s494 = sphi 0, %s478
    %s500 = sphi 0, %s502
    %s503 = sphi 0, %s500
    %s504 = sphi 0, %s503
    %s520 = sphi 0, %s504
    %s526 = sphi 0, %s528
    %s529 = sphi 0, %s526
    %s530 = sphi 0, %s529
    %s546 = sphi 0, %s530
    %s552 = sphi 0, %s554
    %s555 = sphi 0, %s552
    %s556 = sphi 0, %s555
    %s572 = sphi 0, %s556
    %s578 = sphi 0, %s580
    %s581 = sphi 0, %s578
    %s582 = sphi 0, %s581
    %s598 = sphi 0, %s582
    %s604 = sphi 0, %s606
    %s607 = sphi 0, %s604
    %s608 = sphi 0, %s607
    %s624 = sphi 0, %s608
    %s630 = sphi 0, %s632
    %s633 = sphi 0, %s630
    %s634 = sphi 0, %s633
    %s650 = sphi 0, %s634
    %s656 = sphi 0, %s658
    %s659 = sphi 0, %s656
    %s660 = sphi 0, %s659
    %s676 = sphi 0, %s660
    %s682 = sphi 0, %s684
    %s685 = sphi 0, %s682
    %s686 = sphi 0, %s685
    %s702 = sphi 0, %s686
    %s708 = sphi 0, %s710
    %s711 = sphi 0, %s708
    %s712 = sphi 0, %s711
    %s728 = sphi 0, %s712
    %s734 = sphi 0, %s736
    %s737 = sphi 0, %s734
    %s738 = sphi 0, %s737
    %s754 = sphi 0, %s738
    %s760 = sphi 0, %s762
    %s763 = sphi 0, %s760
    %s764 = sphi 0, %s763
    %s780 = sphi 0, %s764
    %s786 = sphi 0, %s788
    %s789 = sphi 0, %s786
    %s790 = sphi 0, %s789
    %s806 = sphi 0, %s790
    %s812 = sphi 0, %s814
    %s815 = sphi 0, %s812
    %s816 = sphi 0, %s815
    %s832 = sphi 0, %s816
    %s838 = sphi 0, %s840
    %s841 = sphi 0, %s838
    %s842 = sphi 0, %s841
    %s858 = sphi 0, %s842
    %s862 = sphi 0, %s862
    %s864 = sphi 0, %s862
    %s865 = sphi 0, %s864
    %s879 = sphi 0, %s865
    %s883 = sphi 0, %s883
    %s885 = sphi 0, %s883
    %s886 = sphi 0, %s885
    %s900 = sphi 0, %s886
    %s904 = sphi 0, %s904
    %s906 = sphi 0, %s904
    %s907 = sphi 0, %s906
    %s921 = sphi 0, %s907
  $region4: #{decoder_forward.1} parent=0 // loop_header_branch
    %76 = sbr.rel (%p74) target = $region8
  $region5: #{decoder_forward.1} parent=0 // loop_body
    %s78 = ssub.s32 %s73, 1
    %s79 = ssub.s32 %s73, 2
    %s80 = sadd.s32 %s73, 1
    %s82 = sadd.s32 %s81, 1
    %p85 = scmp.eq.s32.totalorder %s73, 1
    %p86 = scmp.ne.s32.totalorder %s81, %s83
    %p87 = scmp.eq.s32.totalorder %s73, 0
    %p88 = por %p86, %p87
    %p89 = scmp.ne.s32.totalorder %s81, %s83
    %p90 = scmp.eq.s32.totalorder %s78, 1
    %p91 = por %p89, %p90
    %p92 = scmp.ne.s32.totalorder %s83, %s84
    %p93 = scmp.eq.s32.totalorder %s78, 0
    %p94 = por %p92, %p93
    %p95 = scmp.ne.s32.totalorder %s83, %s84
    %p96 = scmp.eq.s32.totalorder %s79, 1
    %p97 = por %p95, %p96
    %p99 = scmp.ne.s32.totalorder %s84, %s98
    %p100 = scmp.eq.s32.totalorder %s79, 0
    %p101 = por %p99, %p100
    %s103 = sadd.s32 %s102, 1
    %p106 = scmp.eq.s32.totalorder %s73, 1
    %p107 = scmp.ne.s32.totalorder %s102, %s104
    %p108 = scmp.eq.s32.totalorder %s73, 0
    %p109 = por %p107, %p108
    %p110 = scmp.ne.s32.totalorder %s102, %s104
    %p111 = scmp.eq.s32.totalorder %s78, 1
    %p112 = por %p110, %p111
    %p113 = scmp.ne.s32.totalorder %s104, %s105
    %p114 = scmp.eq.s32.totalorder %s78, 0
    %p115 = por %p113, %p114
    %p116 = scmp.ne.s32.totalorder %s104, %s105
    %p117 = scmp.eq.s32.totalorder %s79, 1
    %p118 = por %p116, %p117
    %p120 = scmp.ne.s32.totalorder %s105, %s119
    %p121 = scmp.eq.s32.totalorder %s79, 0
    %p122 = por %p120, %p121
    %s124 = sadd.s32 %s123, 1
    %p127 = scmp.eq.s32.totalorder %s73, 1
    %p128 = scmp.ne.s32.totalorder %s123, %s125
    %p129 = scmp.eq.s32.totalorder %s73, 0
    %p130 = por %p128, %p129
    %p131 = scmp.ne.s32.totalorder %s123, %s125
    %p132 = scmp.eq.s32.totalorder %s78, 1
    %p133 = por %p131, %p132
    %p134 = scmp.ne.s32.totalorder %s125, %s126
    %p135 = scmp.eq.s32.totalorder %s78, 0
    %p136 = por %p134, %p135
    %p137 = scmp.ne.s32.totalorder %s125, %s126
    %p138 = scmp.eq.s32.totalorder %s79, 1
    %p139 = por %p137, %p138
    %p141 = scmp.ne.s32.totalorder %s126, %s140
    %p142 = scmp.eq.s32.totalorder %s79, 0
    %p143 = por %p141, %p142
    %s145 = sadd.s32 %s144, 1
    %p148 = scmp.eq.s32.totalorder %s73, 1
    %p149 = scmp.ne.s32.totalorder %s144, %s146
    %p150 = scmp.eq.s32.totalorder %s73, 0
    %p151 = por %p149, %p150
    %p152 = scmp.ne.s32.totalorder %s144, %s146
    %p153 = scmp.eq.s32.totalorder %s78, 1
    %p154 = por %p152, %p153
    %p155 = scmp.ne.s32.totalorder %s146, %s147
    %p156 = scmp.eq.s32.totalorder %s78, 0
    %p157 = por %p155, %p156
    %p158 = scmp.ne.s32.totalorder %s146, %s147
    %p159 = scmp.eq.s32.totalorder %s79, 1
    %p160 = por %p158, %p159
    %p162 = scmp.ne.s32.totalorder %s147, %s161
    %p163 = scmp.eq.s32.totalorder %s79, 0
    %p164 = por %p162, %p163
    %s166 = sadd.s32 %s165, 1
    %p169 = scmp.eq.s32.totalorder %s73, 1
    %p170 = scmp.ne.s32.totalorder %s165, %s167
    %p171 = scmp.eq.s32.totalorder %s73, 0
    %p172 = por %p170, %p171
    %p173 = scmp.ne.s32.totalorder %s165, %s167
    %p174 = scmp.eq.s32.totalorder %s78, 1
    %p175 = por %p173, %p174
    %p176 = scmp.ne.s32.totalorder %s167, %s168
    %p177 = scmp.eq.s32.totalorder %s78, 0
    %p178 = por %p176, %p177
    %p179 = scmp.ne.s32.totalorder %s167, %s168
    %p180 = scmp.eq.s32.totalorder %s79, 1
    %p181 = por %p179, %p180
    %p183 = scmp.ne.s32.totalorder %s168, %s182
    %p184 = scmp.eq.s32.totalorder %s79, 0
    %p185 = por %p183, %p184
    %s186 = ssub.s32 %s73, %s80
    %p187 = scmp.eq.s32.totalorder %s186, 0
    %s189 = sadd.s32 %s188, 1
    %s190 = scalar_select %p187, %s188, %s189
    %p193 = pneg %p187
    %p194 = scmp.eq.s32.totalorder %s73, 1
    %p195 = por %p193, %p194
    %p196 = scmp.ne.s32.totalorder %s188, %s191
    %p197 = scmp.eq.s32.totalorder %s73, 0
    %p198 = por %p196, %p197
    %p199 = scmp.ne.s32.totalorder %s188, %s191
    %p200 = scmp.eq.s32.totalorder %s78, 1
    %p201 = por %p199, %p200
    %p202 = scmp.ne.s32.totalorder %s191, %s192
    %p203 = scmp.eq.s32.totalorder %s78, 0
    %p204 = por %p202, %p203
    %p205 = scmp.ne.s32.totalorder %s191, %s192
    %p206 = scmp.eq.s32.totalorder %s79, 1
    %p207 = por %p205, %p206
    %p209 = scmp.ne.s32.totalorder %s192, %s208
    %p210 = scmp.eq.s32.totalorder %s79, 0
    %p211 = por %p209, %p210
    %s212 = ssub.s32 %s73, %s80
    %p213 = scmp.eq.s32.totalorder %s212, 0
    %s215 = sadd.s32 %s214, 1
    %s216 = scalar_select %p213, %s214, %s215
    %p219 = pneg %p213
    %p220 = scmp.eq.s32.totalorder %s73, 1
    %p221 = por %p219, %p220
    %p222 = scmp.ne.s32.totalorder %s214, %s217
    %p223 = scmp.eq.s32.totalorder %s73, 0
    %p224 = por %p222, %p223
    %p225 = scmp.ne.s32.totalorder %s214, %s217
    %p226 = scmp.eq.s32.totalorder %s78, 1
    %p227 = por %p225, %p226
    %p228 = scmp.ne.s32.totalorder %s217, %s218
    %p229 = scmp.eq.s32.totalorder %s78, 0
    %p230 = por %p228, %p229
    %p231 = scmp.ne.s32.totalorder %s217, %s218
    %p232 = scmp.eq.s32.totalorder %s79, 1
    %p233 = por %p231, %p232
    %p235 = scmp.ne.s32.totalorder %s218, %s234
    %p236 = scmp.eq.s32.totalorder %s79, 0
    %p237 = por %p235, %p236
    %s238 = ssub.s32 %s73, %s80
    %p239 = scmp.eq.s32.totalorder %s238, 0
    %s241 = sadd.s32 %s240, 1
    %s242 = scalar_select %p239, %s240, %s241
    %p245 = pneg %p239
    %p246 = scmp.eq.s32.totalorder %s73, 1
    %p247 = por %p245, %p246
    %p248 = scmp.ne.s32.totalorder %s240, %s243
    %p249 = scmp.eq.s32.totalorder %s73, 0
    %p250 = por %p248, %p249
    %p251 = scmp.ne.s32.totalorder %s240, %s243
    %p252 = scmp.eq.s32.totalorder %s78, 1
    %p253 = por %p251, %p252
    %p254 = scmp.ne.s32.totalorder %s243, %s244
    %p255 = scmp.eq.s32.totalorder %s78, 0
    %p256 = por %p254, %p255
    %p257 = scmp.ne.s32.totalorder %s243, %s244
    %p258 = scmp.eq.s32.totalorder %s79, 1
    %p259 = por %p257, %p258
    %p261 = scmp.ne.s32.totalorder %s244, %s260
    %p262 = scmp.eq.s32.totalorder %s79, 0
    %p263 = por %p261, %p262
    %s264 = ssub.s32 %s73, %s80
    %p265 = scmp.eq.s32.totalorder %s264, 0
    %s267 = sadd.s32 %s266, 1
    %s268 = scalar_select %p265, %s266, %s267
    %p271 = pneg %p265
    %p272 = scmp.eq.s32.totalorder %s73, 1
    %p273 = por %p271, %p272
    %p274 = scmp.ne.s32.totalorder %s266, %s269
    %p275 = scmp.eq.s32.totalorder %s73, 0
    %p276 = por %p274, %p275
    %p277 = scmp.ne.s32.totalorder %s266, %s269
    %p278 = scmp.eq.s32.totalorder %s78, 1
    %p279 = por %p277, %p278
    %p280 = scmp.ne.s32.totalorder %s269, %s270
    %p281 = scmp.eq.s32.totalorder %s78, 0
    %p282 = por %p280, %p281
    %p283 = scmp.ne.s32.totalorder %s269, %s270
    %p284 = scmp.eq.s32.totalorder %s79, 1
    %p285 = por %p283, %p284
    %p287 = scmp.ne.s32.totalorder %s270, %s286
    %p288 = scmp.eq.s32.totalorder %s79, 0
    %p289 = por %p287, %p288
    %s290 = ssub.s32 %s73, %s80
    %p291 = scmp.eq.s32.totalorder %s290, 0
    %s293 = sadd.s32 %s292, 1
    %s294 = scalar_select %p291, %s292, %s293
    %p297 = pneg %p291
    %p298 = scmp.eq.s32.totalorder %s73, 1
    %p299 = por %p297, %p298
    %p300 = scmp.ne.s32.totalorder %s292, %s295
    %p301 = scmp.eq.s32.totalorder %s73, 0
    %p302 = por %p300, %p301
    %p303 = scmp.ne.s32.totalorder %s292, %s295
    %p304 = scmp.eq.s32.totalorder %s78, 1
    %p305 = por %p303, %p304
    %p306 = scmp.ne.s32.totalorder %s295, %s296
    %p307 = scmp.eq.s32.totalorder %s78, 0
    %p308 = por %p306, %p307
    %p309 = scmp.ne.s32.totalorder %s295, %s296
    %p310 = scmp.eq.s32.totalorder %s79, 1
    %p311 = por %p309, %p310
    %p313 = scmp.ne.s32.totalorder %s296, %s312
    %p314 = scmp.eq.s32.totalorder %s79, 0
    %p315 = por %p313, %p314
    %s316 = ssub.s32 %s73, %s80
    %p317 = scmp.eq.s32.totalorder %s316, 0
    %s319 = sadd.s32 %s318, 1
    %s320 = scalar_select %p317, %s318, %s319
    %p323 = pneg %p317
    %p324 = scmp.eq.s32.totalorder %s73, 1
    %p325 = por %p323, %p324
    %p326 = scmp.ne.s32.totalorder %s318, %s321
    %p327 = scmp.eq.s32.totalorder %s73, 0
    %p328 = por %p326, %p327
    %p329 = scmp.ne.s32.totalorder %s318, %s321
    %p330 = scmp.eq.s32.totalorder %s78, 1
    %p331 = por %p329, %p330
    %p332 = scmp.ne.s32.totalorder %s321, %s322
    %p333 = scmp.eq.s32.totalorder %s78, 0
    %p334 = por %p332, %p333
    %p335 = scmp.ne.s32.totalorder %s321, %s322
    %p336 = scmp.eq.s32.totalorder %s79, 1
    %p337 = por %p335, %p336
    %p339 = scmp.ne.s32.totalorder %s322, %s338
    %p340 = scmp.eq.s32.totalorder %s79, 0
    %p341 = por %p339, %p340
    %s342 = ssub.s32 %s73, %s80
    %p343 = scmp.eq.s32.totalorder %s342, 0
    %s345 = sadd.s32 %s344, 1
    %s346 = scalar_select %p343, %s344, %s345
    %p349 = pneg %p343
    %p350 = scmp.eq.s32.totalorder %s73, 1
    %p351 = por %p349, %p350
    %p352 = scmp.ne.s32.totalorder %s344, %s347
    %p353 = scmp.eq.s32.totalorder %s73, 0
    %p354 = por %p352, %p353
    %p355 = scmp.ne.s32.totalorder %s344, %s347
    %p356 = scmp.eq.s32.totalorder %s78, 1
    %p357 = por %p355, %p356
    %p358 = scmp.ne.s32.totalorder %s347, %s348
    %p359 = scmp.eq.s32.totalorder %s78, 0
    %p360 = por %p358, %p359
    %p361 = scmp.ne.s32.totalorder %s347, %s348
    %p362 = scmp.eq.s32.totalorder %s79, 1
    %p363 = por %p361, %p362
    %p365 = scmp.ne.s32.totalorder %s348, %s364
    %p366 = scmp.eq.s32.totalorder %s79, 0
    %p367 = por %p365, %p366
    %s368 = ssub.s32 %s73, %s80
    %p369 = scmp.eq.s32.totalorder %s368, 0
    %s371 = sadd.s32 %s370, 1
    %s372 = scalar_select %p369, %s370, %s371
    %p375 = pneg %p369
    %p376 = scmp.eq.s32.totalorder %s73, 1
    %p377 = por %p375, %p376
    %p378 = scmp.ne.s32.totalorder %s370, %s373
    %p379 = scmp.eq.s32.totalorder %s73, 0
    %p380 = por %p378, %p379
    %p381 = scmp.ne.s32.totalorder %s370, %s373
    %p382 = scmp.eq.s32.totalorder %s78, 1
    %p383 = por %p381, %p382
    %p384 = scmp.ne.s32.totalorder %s373, %s374
    %p385 = scmp.eq.s32.totalorder %s78, 0
    %p386 = por %p384, %p385
    %p387 = scmp.ne.s32.totalorder %s373, %s374
    %p388 = scmp.eq.s32.totalorder %s79, 1
    %p389 = por %p387, %p388
    %p391 = scmp.ne.s32.totalorder %s374, %s390
    %p392 = scmp.eq.s32.totalorder %s79, 0
    %p393 = por %p391, %p392
    %s394 = ssub.s32 %s73, %s80
    %p395 = scmp.eq.s32.totalorder %s394, 0
    %s397 = sadd.s32 %s396, 1
    %s398 = scalar_select %p395, %s396, %s397
    %p401 = pneg %p395
    %p402 = scmp.eq.s32.totalorder %s73, 1
    %p403 = por %p401, %p402
    %p404 = scmp.ne.s32.totalorder %s396, %s399
    %p405 = scmp.eq.s32.totalorder %s73, 0
    %p406 = por %p404, %p405
    %p407 = scmp.ne.s32.totalorder %s396, %s399
    %p408 = scmp.eq.s32.totalorder %s78, 1
    %p409 = por %p407, %p408
    %p410 = scmp.ne.s32.totalorder %s399, %s400
    %p411 = scmp.eq.s32.totalorder %s78, 0
    %p412 = por %p410, %p411
    %p413 = scmp.ne.s32.totalorder %s399, %s400
    %p414 = scmp.eq.s32.totalorder %s79, 1
    %p415 = por %p413, %p414
    %p417 = scmp.ne.s32.totalorder %s400, %s416
    %p418 = scmp.eq.s32.totalorder %s79, 0
    %p419 = por %p417, %p418
    %s420 = ssub.s32 %s73, %s80
    %p421 = scmp.eq.s32.totalorder %s420, 0
    %s423 = sadd.s32 %s422, 1
    %s424 = scalar_select %p421, %s422, %s423
    %p427 = pneg %p421
    %p428 = scmp.eq.s32.totalorder %s73, 1
    %p429 = por %p427, %p428
    %p430 = scmp.ne.s32.totalorder %s422, %s425
    %p431 = scmp.eq.s32.totalorder %s73, 0
    %p432 = por %p430, %p431
    %p433 = scmp.ne.s32.totalorder %s422, %s425
    %p434 = scmp.eq.s32.totalorder %s78, 1
    %p435 = por %p433, %p434
    %p436 = scmp.ne.s32.totalorder %s425, %s426
    %p437 = scmp.eq.s32.totalorder %s78, 0
    %p438 = por %p436, %p437
    %p439 = scmp.ne.s32.totalorder %s425, %s426
    %p440 = scmp.eq.s32.totalorder %s79, 1
    %p441 = por %p439, %p440
    %p443 = scmp.ne.s32.totalorder %s426, %s442
    %p444 = scmp.eq.s32.totalorder %s79, 0
    %p445 = por %p443, %p444
    %s446 = ssub.s32 %s73, %s80
    %p447 = scmp.eq.s32.totalorder %s446, 0
    %s449 = sadd.s32 %s448, 1
    %s450 = scalar_select %p447, %s448, %s449
    %p453 = pneg %p447
    %p454 = scmp.eq.s32.totalorder %s73, 1
    %p455 = por %p453, %p454
    %p456 = scmp.ne.s32.totalorder %s448, %s451
    %p457 = scmp.eq.s32.totalorder %s73, 0
    %p458 = por %p456, %p457
    %p459 = scmp.ne.s32.totalorder %s448, %s451
    %p460 = scmp.eq.s32.totalorder %s78, 1
    %p461 = por %p459, %p460
    %p462 = scmp.ne.s32.totalorder %s451, %s452
    %p463 = scmp.eq.s32.totalorder %s78, 0
    %p464 = por %p462, %p463
    %p465 = scmp.ne.s32.totalorder %s451, %s452
    %p466 = scmp.eq.s32.totalorder %s79, 1
    %p467 = por %p465, %p466
    %p469 = scmp.ne.s32.totalorder %s452, %s468
    %p470 = scmp.eq.s32.totalorder %s79, 0
    %p471 = por %p469, %p470
    %s472 = ssub.s32 %s73, %s80
    %p473 = scmp.eq.s32.totalorder %s472, 0
    %s475 = sadd.s32 %s474, 1
    %s476 = scalar_select %p473, %s474, %s475
    %p479 = pneg %p473
    %p480 = scmp.eq.s32.totalorder %s73, 1
    %p481 = por %p479, %p480
    %p482 = scmp.ne.s32.totalorder %s474, %s477
    %p483 = scmp.eq.s32.totalorder %s73, 0
    %p484 = por %p482, %p483
    %p485 = scmp.ne.s32.totalorder %s474, %s477
    %p486 = scmp.eq.s32.totalorder %s78, 1
    %p487 = por %p485, %p486
    %p488 = scmp.ne.s32.totalorder %s477, %s478
    %p489 = scmp.eq.s32.totalorder %s78, 0
    %p490 = por %p488, %p489
    %p491 = scmp.ne.s32.totalorder %s477, %s478
    %p492 = scmp.eq.s32.totalorder %s79, 1
    %p493 = por %p491, %p492
    %p495 = scmp.ne.s32.totalorder %s478, %s494
    %p496 = scmp.eq.s32.totalorder %s79, 0
    %p497 = por %p495, %p496
    %s498 = ssub.s32 %s73, %s80
    %p499 = scmp.eq.s32.totalorder %s498, 0
    %s501 = sadd.s32 %s500, 1
    %s502 = scalar_select %p499, %s500, %s501
    %p505 = pneg %p499
    %p506 = scmp.eq.s32.totalorder %s73, 1
    %p507 = por %p505, %p506
    %p508 = scmp.ne.s32.totalorder %s500, %s503
    %p509 = scmp.eq.s32.totalorder %s73, 0
    %p510 = por %p508, %p509
    %p511 = scmp.ne.s32.totalorder %s500, %s503
    %p512 = scmp.eq.s32.totalorder %s78, 1
    %p513 = por %p511, %p512
    %p514 = scmp.ne.s32.totalorder %s503, %s504
    %p515 = scmp.eq.s32.totalorder %s78, 0
    %p516 = por %p514, %p515
    %p517 = scmp.ne.s32.totalorder %s503, %s504
    %p518 = scmp.eq.s32.totalorder %s79, 1
    %p519 = por %p517, %p518
    %p521 = scmp.ne.s32.totalorder %s504, %s520
    %p522 = scmp.eq.s32.totalorder %s79, 0
    %p523 = por %p521, %p522
    %s524 = ssub.s32 %s73, %s80
    %p525 = scmp.eq.s32.totalorder %s524, 0
    %s527 = sadd.s32 %s526, 1
    %s528 = scalar_select %p525, %s526, %s527
    %p531 = pneg %p525
    %p532 = scmp.eq.s32.totalorder %s73, 1
    %p533 = por %p531, %p532
    %p534 = scmp.ne.s32.totalorder %s526, %s529
    %p535 = scmp.eq.s32.totalorder %s73, 0
    %p536 = por %p534, %p535
    %p537 = scmp.ne.s32.totalorder %s526, %s529
    %p538 = scmp.eq.s32.totalorder %s78, 1
    %p539 = por %p537, %p538
    %p540 = scmp.ne.s32.totalorder %s529, %s530
    %p541 = scmp.eq.s32.totalorder %s78, 0
    %p542 = por %p540, %p541
    %p543 = scmp.ne.s32.totalorder %s529, %s530
    %p544 = scmp.eq.s32.totalorder %s79, 1
    %p545 = por %p543, %p544
    %p547 = scmp.ne.s32.totalorder %s530, %s546
    %p548 = scmp.eq.s32.totalorder %s79, 0
    %p549 = por %p547, %p548
    %s550 = ssub.s32 %s73, %s80
    %p551 = scmp.eq.s32.totalorder %s550, 0
    %s553 = sadd.s32 %s552, 1
    %s554 = scalar_select %p551, %s552, %s553
    %p557 = pneg %p551
    %p558 = scmp.eq.s32.totalorder %s73, 1
    %p559 = por %p557, %p558
    %p560 = scmp.ne.s32.totalorder %s552, %s555
    %p561 = scmp.eq.s32.totalorder %s73, 0
    %p562 = por %p560, %p561
    %p563 = scmp.ne.s32.totalorder %s552, %s555
    %p564 = scmp.eq.s32.totalorder %s78, 1
    %p565 = por %p563, %p564
    %p566 = scmp.ne.s32.totalorder %s555, %s556
    %p567 = scmp.eq.s32.totalorder %s78, 0
    %p568 = por %p566, %p567
    %p569 = scmp.ne.s32.totalorder %s555, %s556
    %p570 = scmp.eq.s32.totalorder %s79, 1
    %p571 = por %p569, %p570
    %p573 = scmp.ne.s32.totalorder %s556, %s572
    %p574 = scmp.eq.s32.totalorder %s79, 0
    %p575 = por %p573, %p574
    %s576 = ssub.s32 %s73, %s80
    %p577 = scmp.eq.s32.totalorder %s576, 0
    %s579 = sadd.s32 %s578, 1
    %s580 = scalar_select %p577, %s578, %s579
    %p583 = pneg %p577
    %p584 = scmp.eq.s32.totalorder %s73, 1
    %p585 = por %p583, %p584
    %p586 = scmp.ne.s32.totalorder %s578, %s581
    %p587 = scmp.eq.s32.totalorder %s73, 0
    %p588 = por %p586, %p587
    %p589 = scmp.ne.s32.totalorder %s578, %s581
    %p590 = scmp.eq.s32.totalorder %s78, 1
    %p591 = por %p589, %p590
    %p592 = scmp.ne.s32.totalorder %s581, %s582
    %p593 = scmp.eq.s32.totalorder %s78, 0
    %p594 = por %p592, %p593
    %p595 = scmp.ne.s32.totalorder %s581, %s582
    %p596 = scmp.eq.s32.totalorder %s79, 1
    %p597 = por %p595, %p596
    %p599 = scmp.ne.s32.totalorder %s582, %s598
    %p600 = scmp.eq.s32.totalorder %s79, 0
    %p601 = por %p599, %p600
    %s602 = ssub.s32 %s73, %s80
    %p603 = scmp.eq.s32.totalorder %s602, 0
    %s605 = sadd.s32 %s604, 1
    %s606 = scalar_select %p603, %s604, %s605
    %p609 = pneg %p603
    %p610 = scmp.eq.s32.totalorder %s73, 1
    %p611 = por %p609, %p610
    %p612 = scmp.ne.s32.totalorder %s604, %s607
    %p613 = scmp.eq.s32.totalorder %s73, 0
    %p614 = por %p612, %p613
    %p615 = scmp.ne.s32.totalorder %s604, %s607
    %p616 = scmp.eq.s32.totalorder %s78, 1
    %p617 = por %p615, %p616
    %p618 = scmp.ne.s32.totalorder %s607, %s608
    %p619 = scmp.eq.s32.totalorder %s78, 0
    %p620 = por %p618, %p619
    %p621 = scmp.ne.s32.totalorder %s607, %s608
    %p622 = scmp.eq.s32.totalorder %s79, 1
    %p623 = por %p621, %p622
    %p625 = scmp.ne.s32.totalorder %s608, %s624
    %p626 = scmp.eq.s32.totalorder %s79, 0
    %p627 = por %p625, %p626
    %s628 = ssub.s32 %s73, %s80
    %p629 = scmp.eq.s32.totalorder %s628, 0
    %s631 = sadd.s32 %s630, 1
    %s632 = scalar_select %p629, %s630, %s631
    %p635 = pneg %p629
    %p636 = scmp.eq.s32.totalorder %s73, 1
    %p637 = por %p635, %p636
    %p638 = scmp.ne.s32.totalorder %s630, %s633
    %p639 = scmp.eq.s32.totalorder %s73, 0
    %p640 = por %p638, %p639
    %p641 = scmp.ne.s32.totalorder %s630, %s633
    %p642 = scmp.eq.s32.totalorder %s78, 1
    %p643 = por %p641, %p642
    %p644 = scmp.ne.s32.totalorder %s633, %s634
    %p645 = scmp.eq.s32.totalorder %s78, 0
    %p646 = por %p644, %p645
    %p647 = scmp.ne.s32.totalorder %s633, %s634
    %p648 = scmp.eq.s32.totalorder %s79, 1
    %p649 = por %p647, %p648
    %p651 = scmp.ne.s32.totalorder %s634, %s650
    %p652 = scmp.eq.s32.totalorder %s79, 0
    %p653 = por %p651, %p652
    %s654 = ssub.s32 %s73, %s80
    %p655 = scmp.eq.s32.totalorder %s654, 0
    %s657 = sadd.s32 %s656, 1
    %s658 = scalar_select %p655, %s656, %s657
    %p661 = pneg %p655
    %p662 = scmp.eq.s32.totalorder %s73, 1
    %p663 = por %p661, %p662
    %p664 = scmp.ne.s32.totalorder %s656, %s659
    %p665 = scmp.eq.s32.totalorder %s73, 0
    %p666 = por %p664, %p665
    %p667 = scmp.ne.s32.totalorder %s656, %s659
    %p668 = scmp.eq.s32.totalorder %s78, 1
    %p669 = por %p667, %p668
    %p670 = scmp.ne.s32.totalorder %s659, %s660
    %p671 = scmp.eq.s32.totalorder %s78, 0
    %p672 = por %p670, %p671
    %p673 = scmp.ne.s32.totalorder %s659, %s660
    %p674 = scmp.eq.s32.totalorder %s79, 1
    %p675 = por %p673, %p674
    %p677 = scmp.ne.s32.totalorder %s660, %s676
    %p678 = scmp.eq.s32.totalorder %s79, 0
    %p679 = por %p677, %p678
    %s680 = ssub.s32 %s73, %s80
    %p681 = scmp.eq.s32.totalorder %s680, 0
    %s683 = sadd.s32 %s682, 1
    %s684 = scalar_select %p681, %s682, %s683
    %p687 = pneg %p681
    %p688 = scmp.eq.s32.totalorder %s73, 1
    %p689 = por %p687, %p688
    %p690 = scmp.ne.s32.totalorder %s682, %s685
    %p691 = scmp.eq.s32.totalorder %s73, 0
    %p692 = por %p690, %p691
    %p693 = scmp.ne.s32.totalorder %s682, %s685
    %p694 = scmp.eq.s32.totalorder %s78, 1
    %p695 = por %p693, %p694
    %p696 = scmp.ne.s32.totalorder %s685, %s686
    %p697 = scmp.eq.s32.totalorder %s78, 0
    %p698 = por %p696, %p697
    %p699 = scmp.ne.s32.totalorder %s685, %s686
    %p700 = scmp.eq.s32.totalorder %s79, 1
    %p701 = por %p699, %p700
    %p703 = scmp.ne.s32.totalorder %s686, %s702
    %p704 = scmp.eq.s32.totalorder %s79, 0
    %p705 = por %p703, %p704
    %s706 = ssub.s32 %s73, %s80
    %p707 = scmp.eq.s32.totalorder %s706, 0
    %s709 = sadd.s32 %s708, 1
    %s710 = scalar_select %p707, %s708, %s709
    %p713 = pneg %p707
    %p714 = scmp.eq.s32.totalorder %s73, 1
    %p715 = por %p713, %p714
    %p716 = scmp.ne.s32.totalorder %s708, %s711
    %p717 = scmp.eq.s32.totalorder %s73, 0
    %p718 = por %p716, %p717
    %p719 = scmp.ne.s32.totalorder %s708, %s711
    %p720 = scmp.eq.s32.totalorder %s78, 1
    %p721 = por %p719, %p720
    %p722 = scmp.ne.s32.totalorder %s711, %s712
    %p723 = scmp.eq.s32.totalorder %s78, 0
    %p724 = por %p722, %p723
    %p725 = scmp.ne.s32.totalorder %s711, %s712
    %p726 = scmp.eq.s32.totalorder %s79, 1
    %p727 = por %p725, %p726
    %p729 = scmp.ne.s32.totalorder %s712, %s728
    %p730 = scmp.eq.s32.totalorder %s79, 0
    %p731 = por %p729, %p730
    %s732 = ssub.s32 %s73, %s80
    %p733 = scmp.eq.s32.totalorder %s732, 0
    %s735 = sadd.s32 %s734, 1
    %s736 = scalar_select %p733, %s734, %s735
    %p739 = pneg %p733
    %p740 = scmp.eq.s32.totalorder %s73, 1
    %p741 = por %p739, %p740
    %p742 = scmp.ne.s32.totalorder %s734, %s737
    %p743 = scmp.eq.s32.totalorder %s73, 0
    %p744 = por %p742, %p743
    %p745 = scmp.ne.s32.totalorder %s734, %s737
    %p746 = scmp.eq.s32.totalorder %s78, 1
    %p747 = por %p745, %p746
    %p748 = scmp.ne.s32.totalorder %s737, %s738
    %p749 = scmp.eq.s32.totalorder %s78, 0
    %p750 = por %p748, %p749
    %p751 = scmp.ne.s32.totalorder %s737, %s738
    %p752 = scmp.eq.s32.totalorder %s79, 1
    %p753 = por %p751, %p752
    %p755 = scmp.ne.s32.totalorder %s738, %s754
    %p756 = scmp.eq.s32.totalorder %s79, 0
    %p757 = por %p755, %p756
    %s758 = ssub.s32 %s73, %s80
    %p759 = scmp.eq.s32.totalorder %s758, 0
    %s761 = sadd.s32 %s760, 1
    %s762 = scalar_select %p759, %s760, %s761
    %p765 = pneg %p759
    %p766 = scmp.eq.s32.totalorder %s73, 1
    %p767 = por %p765, %p766
    %p768 = scmp.ne.s32.totalorder %s760, %s763
    %p769 = scmp.eq.s32.totalorder %s73, 0
    %p770 = por %p768, %p769
    %p771 = scmp.ne.s32.totalorder %s760, %s763
    %p772 = scmp.eq.s32.totalorder %s78, 1
    %p773 = por %p771, %p772
    %p774 = scmp.ne.s32.totalorder %s763, %s764
    %p775 = scmp.eq.s32.totalorder %s78, 0
    %p776 = por %p774, %p775
    %p777 = scmp.ne.s32.totalorder %s763, %s764
    %p778 = scmp.eq.s32.totalorder %s79, 1
    %p779 = por %p777, %p778
    %p781 = scmp.ne.s32.totalorder %s764, %s780
    %p782 = scmp.eq.s32.totalorder %s79, 0
    %p783 = por %p781, %p782
    %s784 = ssub.s32 %s73, %s80
    %p785 = scmp.eq.s32.totalorder %s784, 0
    %s787 = sadd.s32 %s786, 1
    %s788 = scalar_select %p785, %s786, %s787
    %p791 = pneg %p785
    %p792 = scmp.eq.s32.totalorder %s73, 1
    %p793 = por %p791, %p792
    %p794 = scmp.ne.s32.totalorder %s786, %s789
    %p795 = scmp.eq.s32.totalorder %s73, 0
    %p796 = por %p794, %p795
    %p797 = scmp.ne.s32.totalorder %s786, %s789
    %p798 = scmp.eq.s32.totalorder %s78, 1
    %p799 = por %p797, %p798
    %p800 = scmp.ne.s32.totalorder %s789, %s790
    %p801 = scmp.eq.s32.totalorder %s78, 0
    %p802 = por %p800, %p801
    %p803 = scmp.ne.s32.totalorder %s789, %s790
    %p804 = scmp.eq.s32.totalorder %s79, 1
    %p805 = por %p803, %p804
    %p807 = scmp.ne.s32.totalorder %s790, %s806
    %p808 = scmp.eq.s32.totalorder %s79, 0
    %p809 = por %p807, %p808
    %s810 = ssub.s32 %s73, %s80
    %p811 = scmp.eq.s32.totalorder %s810, 0
    %s813 = sadd.s32 %s812, 1
    %s814 = scalar_select %p811, %s812, %s813
    %p817 = pneg %p811
    %p818 = scmp.eq.s32.totalorder %s73, 1
    %p819 = por %p817, %p818
    %p820 = scmp.ne.s32.totalorder %s812, %s815
    %p821 = scmp.eq.s32.totalorder %s73, 0
    %p822 = por %p820, %p821
    %p823 = scmp.ne.s32.totalorder %s812, %s815
    %p824 = scmp.eq.s32.totalorder %s78, 1
    %p825 = por %p823, %p824
    %p826 = scmp.ne.s32.totalorder %s815, %s816
    %p827 = scmp.eq.s32.totalorder %s78, 0
    %p828 = por %p826, %p827
    %p829 = scmp.ne.s32.totalorder %s815, %s816
    %p830 = scmp.eq.s32.totalorder %s79, 1
    %p831 = por %p829, %p830
    %p833 = scmp.ne.s32.totalorder %s816, %s832
    %p834 = scmp.eq.s32.totalorder %s79, 0
    %p835 = por %p833, %p834
    %s836 = ssub.s32 %s73, %s80
    %p837 = scmp.eq.s32.totalorder %s836, 0
    %s839 = sadd.s32 %s838, 1
    %s840 = scalar_select %p837, %s838, %s839
    %p843 = pneg %p837
    %p844 = scmp.eq.s32.totalorder %s73, 1
    %p845 = por %p843, %p844
    %p846 = scmp.ne.s32.totalorder %s838, %s841
    %p847 = scmp.eq.s32.totalorder %s73, 0
    %p848 = por %p846, %p847
    %p849 = scmp.ne.s32.totalorder %s838, %s841
    %p850 = scmp.eq.s32.totalorder %s78, 1
    %p851 = por %p849, %p850
    %p852 = scmp.ne.s32.totalorder %s841, %s842
    %p853 = scmp.eq.s32.totalorder %s78, 0
    %p854 = por %p852, %p853
    %p855 = scmp.ne.s32.totalorder %s841, %s842
    %p856 = scmp.eq.s32.totalorder %s79, 1
    %p857 = por %p855, %p856
    %p859 = scmp.ne.s32.totalorder %s842, %s858
    %p860 = scmp.eq.s32.totalorder %s79, 0
    %p861 = por %p859, %p860
    %s863 = sadd.s32 %s862, 1
    %p866 = scmp.eq.s32.totalorder %s73, 1
    %p867 = scmp.ne.s32.totalorder %s862, %s864
    %p868 = scmp.eq.s32.totalorder %s73, 0
    %p869 = por %p867, %p868
    %p870 = scmp.ne.s32.totalorder %s862, %s864
    %p871 = scmp.eq.s32.totalorder %s78, 1
    %p872 = por %p870, %p871
    %p873 = scmp.ne.s32.totalorder %s864, %s865
    %p874 = scmp.eq.s32.totalorder %s78, 0
    %p875 = por %p873, %p874
    %p876 = scmp.ne.s32.totalorder %s864, %s865
    %p877 = scmp.eq.s32.totalorder %s79, 1
    %p878 = por %p876, %p877
    %p880 = scmp.ne.s32.totalorder %s865, %s879
    %p881 = scmp.eq.s32.totalorder %s79, 0
    %p882 = por %p880, %p881
    %s884 = sadd.s32 %s883, 1
    %p887 = scmp.eq.s32.totalorder %s73, 1
    %p888 = scmp.ne.s32.totalorder %s883, %s885
    %p889 = scmp.eq.s32.totalorder %s73, 0
    %p890 = por %p888, %p889
    %p891 = scmp.ne.s32.totalorder %s883, %s885
    %p892 = scmp.eq.s32.totalorder %s78, 1
    %p893 = por %p891, %p892
    %p894 = scmp.ne.s32.totalorder %s885, %s886
    %p895 = scmp.eq.s32.totalorder %s78, 0
    %p896 = por %p894, %p895
    %p897 = scmp.ne.s32.totalorder %s885, %s886
    %p898 = scmp.eq.s32.totalorder %s79, 1
    %p899 = por %p897, %p898
    %p901 = scmp.ne.s32.totalorder %s886, %s900
    %p902 = scmp.eq.s32.totalorder %s79, 0
    %p903 = por %p901, %p902
    %s905 = sadd.s32 %s904, 1
    %p908 = scmp.eq.s32.totalorder %s73, 1
    %p909 = scmp.ne.s32.totalorder %s904, %s906
    %p910 = scmp.eq.s32.totalorder %s73, 0
    %p911 = por %p909, %p910
    %p912 = scmp.ne.s32.totalorder %s904, %s906
    %p913 = scmp.eq.s32.totalorder %s78, 1
    %p914 = por %p912, %p913
    %p915 = scmp.ne.s32.totalorder %s906, %s907
    %p916 = scmp.eq.s32.totalorder %s78, 0
    %p917 = por %p915, %p916
    %p918 = scmp.ne.s32.totalorder %s906, %s907
    %p919 = scmp.eq.s32.totalorder %s79, 1
    %p920 = por %p918, %p919
    %p922 = scmp.ne.s32.totalorder %s907, %s921
    %p923 = scmp.eq.s32.totalorder %s79, 0
    %p924 = por %p922, %p923
    %p925 = scmp.le.s32.totalorder 1, %s73
    %p926 = scmp.lt.s32.totalorder %s73, 3
    %p927 = pnand %p925, %p926
    %p928 = pneg %p927
    // Predicated region
    $region9: #{decoder_forward.1} parent=5 // pred_check
      _
    $region10: #{decoder_forward.1} parent=5 // pred_check_branch
      %930 = sbr.rel (%p927) target = $region12
    $region11: #{decoder_forward.1} parent=5 // pred_region
      %s931 = ssub.s32 %s73, 1
      // Predicated region
      $region13: #{decoder_forward.1} parent=11 // pred_check
        %p932 = pneg %p94
      $region14: #{decoder_forward.1} parent=11 // pred_check_branch
        %934 = sbr.rel (%p932) target = $region16
      $region15: #{decoder_forward.1} parent=11 // pred_region
        _
      $region16: #{decoder_forward.1} parent=11 // pred_fallthru
        _
      // Predicated region
      $region17: #{decoder_forward.1} parent=11 // pred_check
        %p935 = pneg %p115
      $region18: #{decoder_forward.1} parent=11 // pred_check_branch
        %937 = sbr.rel (%p935) target = $region20
      $region19: #{decoder_forward.1} parent=11 // pred_region
        _
      $region20: #{decoder_forward.1} parent=11 // pred_fallthru
        _
      // Predicated region
      $region21: #{decoder_forward.1} parent=11 // pred_check
        %p938 = pneg %p136
      $region22: #{decoder_forward.1} parent=11 // pred_check_branch
        %940 = sbr.rel (%p938) target = $region24
      $region23: #{decoder_forward.1} parent=11 // pred_region
        _
      $region24: #{decoder_forward.1} parent=11 // pred_fallthru
        _
      // Predicated region
      $region25: #{decoder_forward.1} parent=11 // pred_check
        %p941 = pneg %p157
      $region26: #{decoder_forward.1} parent=11 // pred_check_branch
        %943 = sbr.rel (%p941) target = $region28
      $region27: #{decoder_forward.1} parent=11 // pred_region
        _
      $region28: #{decoder_forward.1} parent=11 // pred_fallthru
        _
      // Predicated region
      $region29: #{decoder_forward.1} parent=11 // pred_check
        %p944 = pneg %p178
      $region30: #{decoder_forward.1} parent=11 // pred_check_branch
        %946 = sbr.rel (%p944) target = $region32
      $region31: #{decoder_forward.1} parent=11 // pred_region
        _
      $region32: #{decoder_forward.1} parent=11 // pred_fallthru
        _
      // Predicated region
      $region33: #{decoder_forward.1} parent=11 // pred_check
        %p947 = pneg %p875
      $region34: #{decoder_forward.1} parent=11 // pred_check_branch
        %949 = sbr.rel (%p947) target = $region36
      $region35: #{decoder_forward.1} parent=11 // pred_region
        _
      $region36: #{decoder_forward.1} parent=11 // pred_fallthru
        _
      // Predicated region
      $region37: #{decoder_forward.1} parent=11 // pred_check
        %p950 = pneg %p896
      $region38: #{decoder_forward.1} parent=11 // pred_check_branch
        %952 = sbr.rel (%p950) target = $region40
      $region39: #{decoder_forward.1} parent=11 // pred_region
        _
      $region40: #{decoder_forward.1} parent=11 // pred_fallthru
        _
    $region12: #{decoder_forward.1} parent=5 // pred_fallthru
      _
    %p953 = scmp.lt.s32.totalorder %s73, 2
    // Predicated region
    $region41: #{decoder_forward.1} parent=5 // pred_check
      %p954 = pneg %p953
    $region42: #{decoder_forward.1} parent=5 // pred_check_branch
      %956 = sbr.rel (%p954) target = $region44
    $region43: #{decoder_forward.1} parent=5 // pred_region
      // Predicated region
      $region45: #{decoder_forward.1} parent=43 // pred_check
        %p957 = pneg %p198
      $region46: #{decoder_forward.1} parent=43 // pred_check_branch
        %959 = sbr.rel (%p957) target = $region48
      $region47: #{decoder_forward.1} parent=43 // pred_region
        %p960 = scmp.lt.s32.totalorder %s73, 1
        %s961 = scalar_select %p960, %s73, 1
        %s962 = smul.addr %s961, 4
        %s963 = smul.addr %s962, 8
        %s964 = scalar_lea.vmem %s11, %s963
      $region48: #{decoder_forward.1} parent=43 // pred_fallthru
        _
      // Predicated region
      $region49: #{decoder_forward.1} parent=43 // pred_check
        %p965 = pneg %p224
      $region50: #{decoder_forward.1} parent=43 // pred_check_branch
        %967 = sbr.rel (%p965) target = $region52
      $region51: #{decoder_forward.1} parent=43 // pred_region
        %p968 = scmp.lt.s32.totalorder %s73, 1
        %s969 = scalar_select %p968, %s73, 1
        %s970 = scalar_lea.vmem %s13, %s969
      $region52: #{decoder_forward.1} parent=43 // pred_fallthru
        _
      // Predicated region
      $region53: #{decoder_forward.1} parent=43 // pred_check
        %p971 = pneg %p250
      $region54: #{decoder_forward.1} parent=43 // pred_check_branch
        %973 = sbr.rel (%p971) target = $region56
      $region55: #{decoder_forward.1} parent=43 // pred_region
        %p974 = scmp.lt.s32.totalorder %s73, 1
        %s975 = scalar_select %p974, %s73, 1
        %s976 = smul.addr %s975, 4
        %s977 = smul.addr %s976, 8
        %s978 = scalar_lea.vmem %s15, %s977
      $region56: #{decoder_forward.1} parent=43 // pred_fallthru
        _
      // Predicated region
      $region57: #{decoder_forward.1} parent=43 // pred_check
        %p979 = pneg %p276
      $region58: #{decoder_forward.1} parent=43 // pred_check_branch
        %981 = sbr.rel (%p979) target = $region60
      $region59: #{decoder_forward.1} parent=43 // pred_region
        %p982 = scmp.lt.s32.totalorder %s73, 1
        %s983 = scalar_select %p982, %s73, 1
        %s984 = scalar_lea.vmem %s17, %s983
      $region60: #{decoder_forward.1} parent=43 // pred_fallthru
        _
      // Predicated region
      $region61: #{decoder_forward.1} parent=43 // pred_check
        %p985 = pneg %p302
      $region62: #{decoder_forward.1} parent=43 // pred_check_branch
        %987 = sbr.rel (%p985) target = $region64
      $region63: #{decoder_forward.1} parent=43 // pred_region
        %p988 = scmp.lt.s32.totalorder %s73, 1
        %s989 = scalar_select %p988, %s73, 1
        %s990 = smul.addr %s989, 4
        %s991 = smul.addr %s990, 8
        %s992 = scalar_lea.vmem %s19, %s991
      $region64: #{decoder_forward.1} parent=43 // pred_fallthru
        _
      // Predicated region
      $region65: #{decoder_forward.1} parent=43 // pred_check
        %p993 = pneg %p328
      $region66: #{decoder_forward.1} parent=43 // pred_check_branch
        %995 = sbr.rel (%p993) target = $region68
      $region67: #{decoder_forward.1} parent=43 // pred_region
        %p996 = scmp.lt.s32.totalorder %s73, 1
        %s997 = scalar_select %p996, %s73, 1
        %s998 = scalar_lea.vmem %s21, %s997
      $region68: #{decoder_forward.1} parent=43 // pred_fallthru
        _
      // Predicated region
      $region69: #{decoder_forward.1} parent=43 // pred_check
        %p999 = pneg %p354
      $region70: #{decoder_forward.1} parent=43 // pred_check_branch
        %1001 = sbr.rel (%p999) target = $region72
      $region71: #{decoder_forward.1} parent=43 // pred_region
        %p1002 = scmp.lt.s32.totalorder %s73, 1
        %s1003 = scalar_select %p1002, %s73, 1
        %s1004 = smul.addr %s1003, 4
        %s1005 = smul.addr %s1004, 8
        %s1006 = scalar_lea.vmem %s23, %s1005
      $region72: #{decoder_forward.1} parent=43 // pred_fallthru
        _
      // Predicated region
      $region73: #{decoder_forward.1} parent=43 // pred_check
        %p1007 = pneg %p380
      $region74: #{decoder_forward.1} parent=43 // pred_check_branch
        %1009 = sbr.rel (%p1007) target = $region76
      $region75: #{decoder_forward.1} parent=43 // pred_region
        %p1010 = scmp.lt.s32.totalorder %s73, 1
        %s1011 = scalar_select %p1010, %s73, 1
        %s1012 = scalar_lea.vmem %s25, %s1011
      $region76: #{decoder_forward.1} parent=43 // pred_fallthru
        _
      // Predicated region
      $region77: #{decoder_forward.1} parent=43 // pred_check
        %p1013 = pneg %p406
      $region78: #{decoder_forward.1} parent=43 // pred_check_branch
        %1015 = sbr.rel (%p1013) target = $region80
      $region79: #{decoder_forward.1} parent=43 // pred_region
        %p1016 = scmp.lt.s32.totalorder %s73, 1
        %s1017 = scalar_select %p1016, %s73, 1
        %s1018 = smul.addr %s1017, 4
        %s1019 = smul.addr %s1018, 8
        %s1020 = scalar_lea.vmem %s27, %s1019
      $region80: #{decoder_forward.1} parent=43 // pred_fallthru
        _
      // Predicated region
      $region81: #{decoder_forward.1} parent=43 // pred_check
        %p1021 = pneg %p432
      $region82: #{decoder_forward.1} parent=43 // pred_check_branch
        %1023 = sbr.rel (%p1021) target = $region84
      $region83: #{decoder_forward.1} parent=43 // pred_region
        %p1024 = scmp.lt.s32.totalorder %s73, 1
        %s1025 = scalar_select %p1024, %s73, 1
        %s1026 = scalar_lea.vmem %s29, %s1025
      $region84: #{decoder_forward.1} parent=43 // pred_fallthru
        _
      // Predicated region
      $region85: #{decoder_forward.1} parent=43 // pred_check
        %p1027 = pneg %p458
      $region86: #{decoder_forward.1} parent=43 // pred_check_branch
        %1029 = sbr.rel (%p1027) target = $region88
      $region87: #{decoder_forward.1} parent=43 // pred_region
        %p1030 = scmp.lt.s32.totalorder %s73, 1
        %s1031 = scalar_select %p1030, %s73, 1
        %s1032 = smul.addr %s1031, 4
        %s1033 = smul.addr %s1032, 8
        %s1034 = scalar_lea.vmem %s31, %s1033
      $region88: #{decoder_forward.1} parent=43 // pred_fallthru
        _
      // Predicated region
      $region89: #{decoder_forward.1} parent=43 // pred_check
        %p1035 = pneg %p484
      $region90: #{decoder_forward.1} parent=43 // pred_check_branch
        %1037 = sbr.rel (%p1035) target = $region92
      $region91: #{decoder_forward.1} parent=43 // pred_region
        %p1038 = scmp.lt.s32.totalorder %s73, 1
        %s1039 = scalar_select %p1038, %s73, 1
        %s1040 = scalar_lea.vmem %s33, %s1039
      $region92: #{decoder_forward.1} parent=43 // pred_fallthru
        _
      // Predicated region
      $region93: #{decoder_forward.1} parent=43 // pred_check
        %p1041 = pneg %p510
      $region94: #{decoder_forward.1} parent=43 // pred_check_branch
        %1043 = sbr.rel (%p1041) target = $region96
      $region95: #{decoder_forward.1} parent=43 // pred_region
        %p1044 = scmp.lt.s32.totalorder %s73, 1
        %s1045 = scalar_select %p1044, %s73, 1
        %s1046 = smul.addr %s1045, 4
        %s1047 = smul.addr %s1046, 8
        %s1048 = scalar_lea.vmem %s35, %s1047
      $region96: #{decoder_forward.1} parent=43 // pred_fallthru
        _
      // Predicated region
      $region97: #{decoder_forward.1} parent=43 // pred_check
        %p1049 = pneg %p536
      $region98: #{decoder_forward.1} parent=43 // pred_check_branch
        %1051 = sbr.rel (%p1049) target = $region100
      $region99: #{decoder_forward.1} parent=43 // pred_region
        %p1052 = scmp.lt.s32.totalorder %s73, 1
        %s1053 = scalar_select %p1052, %s73, 1
        %s1054 = scalar_lea.vmem %s37, %s1053
      $region100: #{decoder_forward.1} parent=43 // pred_fallthru
        _
      // Predicated region
      $region101: #{decoder_forward.1} parent=43 // pred_check
        %p1055 = pneg %p562
      $region102: #{decoder_forward.1} parent=43 // pred_check_branch
        %1057 = sbr.rel (%p1055) target = $region104
      $region103: #{decoder_forward.1} parent=43 // pred_region
        %p1058 = scmp.lt.s32.totalorder %s73, 1
        %s1059 = scalar_select %p1058, %s73, 1
        %s1060 = smul.addr %s1059, 4
        %s1061 = smul.addr %s1060, 8
        %s1062 = scalar_lea.vmem %s39, %s1061
      $region104: #{decoder_forward.1} parent=43 // pred_fallthru
        _
      // Predicated region
      $region105: #{decoder_forward.1} parent=43 // pred_check
        %p1063 = pneg %p588
      $region106: #{decoder_forward.1} parent=43 // pred_check_branch
        %1065 = sbr.rel (%p1063) target = $region108
      $region107: #{decoder_forward.1} parent=43 // pred_region
        %p1066 = scmp.lt.s32.totalorder %s73, 1
        %s1067 = scalar_select %p1066, %s73, 1
        %s1068 = scalar_lea.vmem %s41, %s1067
      $region108: #{decoder_forward.1} parent=43 // pred_fallthru
        _
      // Predicated region
      $region109: #{decoder_forward.1} parent=43 // pred_check
        %p1069 = pneg %p614
      $region110: #{decoder_forward.1} parent=43 // pred_check_branch
        %1071 = sbr.rel (%p1069) target = $region112
      $region111: #{decoder_forward.1} parent=43 // pred_region
        %p1072 = scmp.lt.s32.totalorder %s73, 1
        %s1073 = scalar_select %p1072, %s73, 1
        %s1074 = scalar_lea.vmem %s43, %s1073
      $region112: #{decoder_forward.1} parent=43 // pred_fallthru
        _
      // Predicated region
      $region113: #{decoder_forward.1} parent=43 // pred_check
        %p1075 = pneg %p640
      $region114: #{decoder_forward.1} parent=43 // pred_check_branch
        %1077 = sbr.rel (%p1075) target = $region116
      $region115: #{decoder_forward.1} parent=43 // pred_region
        %p1078 = scmp.lt.s32.totalorder %s73, 1
        %s1079 = scalar_select %p1078, %s73, 1
        %s1080 = scalar_lea.vmem %s45, %s1079
      $region116: #{decoder_forward.1} parent=43 // pred_fallthru
        _
      // Predicated region
      $region117: #{decoder_forward.1} parent=43 // pred_check
        %p1081 = pneg %p666
      $region118: #{decoder_forward.1} parent=43 // pred_check_branch
        %1083 = sbr.rel (%p1081) target = $region120
      $region119: #{decoder_forward.1} parent=43 // pred_region
        %p1084 = scmp.lt.s32.totalorder %s73, 1
        %s1085 = scalar_select %p1084, %s73, 1
        %s1086 = scalar_lea.vmem %s47, %s1085
      $region120: #{decoder_forward.1} parent=43 // pred_fallthru
        _
      // Predicated region
      $region121: #{decoder_forward.1} parent=43 // pred_check
        %p1087 = pneg %p692
      $region122: #{decoder_forward.1} parent=43 // pred_check_branch
        %1089 = sbr.rel (%p1087) target = $region124
      $region123: #{decoder_forward.1} parent=43 // pred_region
        %p1090 = scmp.lt.s32.totalorder %s73, 1
        %s1091 = scalar_select %p1090, %s73, 1
        %s1092 = scalar_lea.vmem %s49, %s1091
      $region124: #{decoder_forward.1} parent=43 // pred_fallthru
        _
      // Predicated region
      $region125: #{decoder_forward.1} parent=43 // pred_check
        %p1093 = pneg %p718
      $region126: #{decoder_forward.1} parent=43 // pred_check_branch
        %1095 = sbr.rel (%p1093) target = $region128
      $region127: #{decoder_forward.1} parent=43 // pred_region
        %p1096 = scmp.lt.s32.totalorder %s73, 1
        %s1097 = scalar_select %p1096, %s73, 1
        %s1098 = scalar_lea.vmem %s51, %s1097
      $region128: #{decoder_forward.1} parent=43 // pred_fallthru
        _
      // Predicated region
      $region129: #{decoder_forward.1} parent=43 // pred_check
        %p1099 = pneg %p744
      $region130: #{decoder_forward.1} parent=43 // pred_check_branch
        %1101 = sbr.rel (%p1099) target = $region132
      $region131: #{decoder_forward.1} parent=43 // pred_region
        %p1102 = scmp.lt.s32.totalorder %s73, 1
        %s1103 = scalar_select %p1102, %s73, 1
        %s1104 = scalar_lea.vmem %s53, %s1103
      $region132: #{decoder_forward.1} parent=43 // pred_fallthru
        _
      // Predicated region
      $region133: #{decoder_forward.1} parent=43 // pred_check
        %p1105 = pneg %p770
      $region134: #{decoder_forward.1} parent=43 // pred_check_branch
        %1107 = sbr.rel (%p1105) target = $region136
      $region135: #{decoder_forward.1} parent=43 // pred_region
        %p1108 = scmp.lt.s32.totalorder %s73, 1
        %s1109 = scalar_select %p1108, %s73, 1
        %s1110 = smul.addr %s1109, 4
        %s1111 = smul.addr %s1110, 8
        %s1112 = scalar_lea.vmem %s55, %s1111
      $region136: #{decoder_forward.1} parent=43 // pred_fallthru
        _
      // Predicated region
      $region137: #{decoder_forward.1} parent=43 // pred_check
        %p1113 = pneg %p796
      $region138: #{decoder_forward.1} parent=43 // pred_check_branch
        %1115 = sbr.rel (%p1113) target = $region140
      $region139: #{decoder_forward.1} parent=43 // pred_region
        %p1116 = scmp.lt.s32.totalorder %s73, 1
        %s1117 = scalar_select %p1116, %s73, 1
        %s1118 = scalar_lea.vmem %s57, %s1117
      $region140: #{decoder_forward.1} parent=43 // pred_fallthru
        _
      // Predicated region
      $region141: #{decoder_forward.1} parent=43 // pred_check
        %p1119 = pneg %p822
      $region142: #{decoder_forward.1} parent=43 // pred_check_branch
        %1121 = sbr.rel (%p1119) target = $region144
      $region143: #{decoder_forward.1} parent=43 // pred_region
        %p1122 = scmp.lt.s32.totalorder %s73, 1
        %s1123 = scalar_select %p1122, %s73, 1
        %s1124 = smul.addr %s1123, 8
        %s1125 = smul.addr %s1124, 8
        %s1126 = scalar_lea.vmem %s59, %s1125
      $region144: #{decoder_forward.1} parent=43 // pred_fallthru
        _
      // Predicated region
      $region145: #{decoder_forward.1} parent=43 // pred_check
        %p1127 = pneg %p848
      $region146: #{decoder_forward.1} parent=43 // pred_check_branch
        %1129 = sbr.rel (%p1127) target = $region148
      $region147: #{decoder_forward.1} parent=43 // pred_region
        %p1130 = scmp.lt.s32.totalorder %s73, 1
        %s1131 = scalar_select %p1130, %s73, 1
        %s1132 = scalar_lea.vmem %s61, %s1131
      $region148: #{decoder_forward.1} parent=43 // pred_fallthru
        _
    $region44: #{decoder_forward.1} parent=5 // pred_fallthru
      _
    %p1133 = scmp.le.s32.totalorder 1, %s73
    %p1134 = scmp.lt.s32.totalorder %s73, 3
    %p1135 = pnand %p1133, %p1134
    %p1136 = pneg %p1135
    // Predicated region
    $region149: #{decoder_forward.1} parent=5 // pred_check
      _
    $region150: #{decoder_forward.1} parent=5 // pred_check_branch
      %1138 = sbr.rel (%p1135) target = $region152
    $region151: #{decoder_forward.1} parent=5 // pred_region
      %s1139 = ssub.s32 %s73, 1
      %p1140 = pneg %p94
      %p1141 = pneg %p91
      %p1142 = pneg %p115
      %p1143 = pneg %p112
      %p1144 = pneg %p136
      %p1145 = pneg %p133
      %p1146 = pneg %p157
      %p1147 = pneg %p154
      %p1148 = pneg %p178
      %p1149 = pneg %p175
      %p1150 = scmp.lt.s32.totalorder %s78, 1
      %s1151 = scalar_select %p1150, %s78, 1
      %s1152 = smul.addr %s1151, 4
      %s1153 = smul.addr %s1152, 8
      %s1154 = scalar_lea.vmem %s11, %s1153
      %p1155 = pneg %p204
      %p1156 = pneg %p201
      %p1157 = scmp.lt.s32.totalorder %s78, 1
      %s1158 = scalar_select %p1157, %s78, 1
      %s1159 = scalar_lea.vmem %s13, %s1158
      %p1160 = pneg %p230
      %p1161 = pneg %p227
      %p1162 = scmp.lt.s32.totalorder %s78, 1
      %s1163 = scalar_select %p1162, %s78, 1
      %s1164 = smul.addr %s1163, 4
      %s1165 = smul.addr %s1164, 8
      %s1166 = scalar_lea.vmem %s15, %s1165
      %p1167 = pneg %p256
      %p1168 = pneg %p253
      %p1169 = scmp.lt.s32.totalorder %s78, 1
      %s1170 = scalar_select %p1169, %s78, 1
      %s1171 = scalar_lea.vmem %s17, %s1170
      %p1172 = pneg %p282
      %p1173 = pneg %p279
      %p1174 = scmp.lt.s32.totalorder %s78, 1
      %s1175 = scalar_select %p1174, %s78, 1
      %s1176 = smul.addr %s1175, 4
      %s1177 = smul.addr %s1176, 8
      %s1178 = scalar_lea.vmem %s19, %s1177
      %p1179 = pneg %p308
      %p1180 = pneg %p305
      %p1181 = scmp.lt.s32.totalorder %s78, 1
      %s1182 = scalar_select %p1181, %s78, 1
      %s1183 = scalar_lea.vmem %s21, %s1182
      %p1184 = pneg %p334
      %p1185 = pneg %p331
      %p1186 = scmp.lt.s32.totalorder %s78, 1
      %s1187 = scalar_select %p1186, %s78, 1
      %s1188 = smul.addr %s1187, 4
      %s1189 = smul.addr %s1188, 8
      %s1190 = scalar_lea.vmem %s23, %s1189
      %p1191 = pneg %p360
      %p1192 = pneg %p357
      %p1193 = scmp.lt.s32.totalorder %s78, 1
      %s1194 = scalar_select %p1193, %s78, 1
      %s1195 = scalar_lea.vmem %s25, %s1194
      %p1196 = pneg %p386
      %p1197 = pneg %p383
      %p1198 = scmp.lt.s32.totalorder %s78, 1
      %s1199 = scalar_select %p1198, %s78, 1
      %s1200 = smul.addr %s1199, 4
      %s1201 = smul.addr %s1200, 8
      %s1202 = scalar_lea.vmem %s27, %s1201
      %p1203 = pneg %p412
      %p1204 = pneg %p409
      %p1205 = scmp.lt.s32.totalorder %s78, 1
      %s1206 = scalar_select %p1205, %s78, 1
      %s1207 = scalar_lea.vmem %s29, %s1206
      %p1208 = pneg %p438
      %p1209 = pneg %p435
      %p1210 = scmp.lt.s32.totalorder %s78, 1
      %s1211 = scalar_select %p1210, %s78, 1
      %s1212 = smul.addr %s1211, 4
      %s1213 = smul.addr %s1212, 8
      %s1214 = scalar_lea.vmem %s31, %s1213
      %p1215 = pneg %p464
      %p1216 = pneg %p461
      %p1217 = scmp.lt.s32.totalorder %s78, 1
      %s1218 = scalar_select %p1217, %s78, 1
      %s1219 = scalar_lea.vmem %s33, %s1218
      %p1220 = pneg %p490
      %p1221 = pneg %p487
      %p1222 = scmp.lt.s32.totalorder %s78, 1
      %s1223 = scalar_select %p1222, %s78, 1
      %s1224 = smul.addr %s1223, 4
      %s1225 = smul.addr %s1224, 8
      %s1226 = scalar_lea.vmem %s35, %s1225
      %p1227 = pneg %p516
      %p1228 = pneg %p513
      %p1229 = scmp.lt.s32.totalorder %s78, 1
      %s1230 = scalar_select %p1229, %s78, 1
      %s1231 = scalar_lea.vmem %s37, %s1230
      %p1232 = pneg %p542
      %p1233 = pneg %p539
      %p1234 = scmp.lt.s32.totalorder %s78, 1
      %s1235 = scalar_select %p1234, %s78, 1
      %s1236 = smul.addr %s1235, 4
      %s1237 = smul.addr %s1236, 8
      %s1238 = scalar_lea.vmem %s39, %s1237
      %p1239 = pneg %p568
      %p1240 = pneg %p565
      %p1241 = scmp.lt.s32.totalorder %s78, 1
      %s1242 = scalar_select %p1241, %s78, 1
      %s1243 = scalar_lea.vmem %s41, %s1242
      %p1244 = pneg %p594
      %p1245 = pneg %p591
      %p1246 = scmp.lt.s32.totalorder %s78, 1
      %s1247 = scalar_select %p1246, %s78, 1
      %s1248 = scalar_lea.vmem %s43, %s1247
      %p1249 = pneg %p620
      %p1250 = pneg %p617
      %p1251 = scmp.lt.s32.totalorder %s78, 1
      %s1252 = scalar_select %p1251, %s78, 1
      %s1253 = scalar_lea.vmem %s45, %s1252
      %p1254 = pneg %p646
      %p1255 = pneg %p643
      %p1256 = scmp.lt.s32.totalorder %s78, 1
      %s1257 = scalar_select %p1256, %s78, 1
      %s1258 = scalar_lea.vmem %s47, %s1257
      %p1259 = pneg %p672
      %p1260 = pneg %p669
      %p1261 = scmp.lt.s32.totalorder %s78, 1
      %s1262 = scalar_select %p1261, %s78, 1
      %s1263 = scalar_lea.vmem %s49, %s1262
      %p1264 = pneg %p698
      %p1265 = pneg %p695
      %p1266 = scmp.lt.s32.totalorder %s78, 1
      %s1267 = scalar_select %p1266, %s78, 1
      %s1268 = scalar_lea.vmem %s51, %s1267
      %p1269 = pneg %p724
      %p1270 = pneg %p721
      %p1271 = scmp.lt.s32.totalorder %s78, 1
      %s1272 = scalar_select %p1271, %s78, 1
      %s1273 = scalar_lea.vmem %s53, %s1272
      %p1274 = pneg %p750
      %p1275 = pneg %p747
      %p1276 = scmp.lt.s32.totalorder %s78, 1
      %s1277 = scalar_select %p1276, %s78, 1
      %s1278 = smul.addr %s1277, 4
      %s1279 = smul.addr %s1278, 8
      %s1280 = scalar_lea.vmem %s55, %s1279
      %p1281 = pneg %p776
      %p1282 = pneg %p773
      %p1283 = scmp.lt.s32.totalorder %s78, 1
      %s1284 = scalar_select %p1283, %s78, 1
      %s1285 = scalar_lea.vmem %s57, %s1284
      %p1286 = pneg %p802
      %p1287 = pneg %p799
      %p1288 = scmp.lt.s32.totalorder %s78, 1
      %s1289 = scalar_select %p1288, %s78, 1
      %s1290 = smul.addr %s1289, 8
      %s1291 = smul.addr %s1290, 8
      %s1292 = scalar_lea.vmem %s59, %s1291
      %p1293 = pneg %p828
      %p1294 = pneg %p825
      %p1295 = scmp.lt.s32.totalorder %s78, 1
      %s1296 = scalar_select %p1295, %s78, 1
      %s1297 = scalar_lea.vmem %s61, %s1296
      %p1298 = pneg %p854
      %p1299 = pneg %p851
      %p1300 = pneg %p875
      %p1301 = pneg %p872
      %p1302 = pneg %p896
      %p1303 = pneg %p893
      %p1304 = pneg %p917
      %p1305 = pneg %p914
      %p1306 = scmp.lt.s32.totalorder %s78, 1
      %s1307 = scalar_select %p1306, %s78, 1
      %s1308 = smul.addr %s1307, 4
      %s1309 = smul.addr %s1308, 8
      %s1310 = scalar_lea.vmem %s11, %s1309
      %p1311 = scmp.lt.s32.totalorder %s78, 1
      %s1312 = scalar_select %p1311, %s78, 1
      %s1313 = scalar_lea.vmem %s13, %s1312
      %p1314 = scmp.lt.s32.totalorder %s78, 1
      %s1315 = scalar_select %p1314, %s78, 1
      %s1316 = smul.addr %s1315, 4
      %s1317 = smul.addr %s1316, 8
      %s1318 = scalar_lea.vmem %s15, %s1317
      %p1319 = scmp.lt.s32.totalorder %s78, 1
      %s1320 = scalar_select %p1319, %s78, 1
      %s1321 = scalar_lea.vmem %s17, %s1320
      %p1322 = scmp.lt.s32.totalorder %s78, 1
      %s1323 = scalar_select %p1322, %s78, 1
      %s1324 = smul.addr %s1323, 4
      %s1325 = smul.addr %s1324, 8
      %s1326 = scalar_lea.vmem %s19, %s1325
      %p1327 = scmp.lt.s32.totalorder %s78, 1
      %s1328 = scalar_select %p1327, %s78, 1
      %s1329 = scalar_lea.vmem %s21, %s1328
      %p1330 = scmp.lt.s32.totalorder %s78, 1
      %s1331 = scalar_select %p1330, %s78, 1
      %s1332 = smul.addr %s1331, 4
      %s1333 = smul.addr %s1332, 8
      %s1334 = scalar_lea.vmem %s23, %s1333
      %p1335 = scmp.lt.s32.totalorder %s78, 1
      %s1336 = scalar_select %p1335, %s78, 1
      %s1337 = scalar_lea.vmem %s25, %s1336
      %p1338 = scmp.lt.s32.totalorder %s78, 1
      %s1339 = scalar_select %p1338, %s78, 1
      %s1340 = smul.addr %s1339, 4
      %s1341 = smul.addr %s1340, 8
      %s1342 = scalar_lea.vmem %s27, %s1341
      %p1343 = scmp.lt.s32.totalorder %s78, 1
      %s1344 = scalar_select %p1343, %s78, 1
      %s1345 = scalar_lea.vmem %s29, %s1344
      %p1346 = scmp.lt.s32.totalorder %s78, 1
      %s1347 = scalar_select %p1346, %s78, 1
      %s1348 = smul.addr %s1347, 4
      %s1349 = smul.addr %s1348, 8
      %s1350 = scalar_lea.vmem %s31, %s1349
      %p1351 = scmp.lt.s32.totalorder %s78, 1
      %s1352 = scalar_select %p1351, %s78, 1
      %s1353 = scalar_lea.vmem %s33, %s1352
      %p1354 = scmp.lt.s32.totalorder %s78, 1
      %s1355 = scalar_select %p1354, %s78, 1
      %s1356 = smul.addr %s1355, 4
      %s1357 = smul.addr %s1356, 8
      %s1358 = scalar_lea.vmem %s35, %s1357
      %p1359 = scmp.lt.s32.totalorder %s78, 1
      %s1360 = scalar_select %p1359, %s78, 1
      %s1361 = scalar_lea.vmem %s37, %s1360
      %p1362 = scmp.lt.s32.totalorder %s78, 1
      %s1363 = scalar_select %p1362, %s78, 1
      %s1364 = smul.addr %s1363, 4
      %s1365 = smul.addr %s1364, 8
      %s1366 = scalar_lea.vmem %s39, %s1365
      %p1367 = scmp.lt.s32.totalorder %s78, 1
      %s1368 = scalar_select %p1367, %s78, 1
      %s1369 = scalar_lea.vmem %s41, %s1368
      %p1370 = scmp.lt.s32.totalorder %s78, 1
      %s1371 = scalar_select %p1370, %s78, 1
      %s1372 = scalar_lea.vmem %s43, %s1371
      %p1373 = scmp.lt.s32.totalorder %s78, 1
      %s1374 = scalar_select %p1373, %s78, 1
      %s1375 = scalar_lea.vmem %s45, %s1374
      %p1376 = scmp.lt.s32.totalorder %s78, 1
      %s1377 = scalar_select %p1376, %s78, 1
      %s1378 = scalar_lea.vmem %s47, %s1377
      %p1379 = scmp.lt.s32.totalorder %s78, 1
      %s1380 = scalar_select %p1379, %s78, 1
      %s1381 = scalar_lea.vmem %s49, %s1380
      %p1382 = scmp.lt.s32.totalorder %s78, 1
      %s1383 = scalar_select %p1382, %s78, 1
      %s1384 = scalar_lea.vmem %s51, %s1383
      %p1385 = scmp.lt.s32.totalorder %s78, 1
      %s1386 = scalar_select %p1385, %s78, 1
      %s1387 = scalar_lea.vmem %s53, %s1386
      %p1388 = scmp.lt.s32.totalorder %s78, 1
      %s1389 = scalar_select %p1388, %s78, 1
      %s1390 = smul.addr %s1389, 4
      %s1391 = smul.addr %s1390, 8
      %s1392 = scalar_lea.vmem %s55, %s1391
      %p1393 = scmp.lt.s32.totalorder %s78, 1
      %s1394 = scalar_select %p1393, %s78, 1
      %s1395 = scalar_lea.vmem %s57, %s1394
      %p1396 = scmp.lt.s32.totalorder %s78, 1
      %s1397 = scalar_select %p1396, %s78, 1
      %s1398 = smul.addr %s1397, 8
      %s1399 = smul.addr %s1398, 8
      %s1400 = scalar_lea.vmem %s59, %s1399
      %p1401 = scmp.lt.s32.totalorder %s78, 1
      %s1402 = scalar_select %p1401, %s78, 1
      %s1403 = scalar_lea.vmem %s61, %s1402
      %p1404 = scmp.eq.s32.totalorder %s78, 0
      // Predicated region
      $region153: #{decoder_forward.1} parent=151 // pred_check
        %p1405 = pneg %p1404
      $region154: #{decoder_forward.1} parent=151 // pred_check_branch
        %1407 = sbr.rel (%p1405) target = $region156
      $region155: #{decoder_forward.1} parent=151 // pred_region
        %v1408 = vld [vmem:[%s1] sm:$0xff]
        %v1409 = vld [vmem:[%s1 + $0x8] sm:$0xff]
        %vm1410 = vcmask 261120
        %1411 = vst.msk [vmem:[#allocation2] sm:$0xff] %vm1410, %v1408
        %1412 = vst.msk [vmem:[#allocation2 + $0x8] sm:$0xff] %vm1410, %v1409
      $region156: #{decoder_forward.1} parent=151 // pred_fallthru
        _
      %v1413 = vld [vmem:[#allocation2] sm:$0xff]
      %v1414 = vld [vmem:[#allocation2 + $0x8] sm:$0xff]
      %v1415 = vld [vmem:[%s3] sm:$0xff]
      %v1416 = vld [vmem:[%s3 + $0x8] sm:$0xff]
      %v1417 = vld [vmem:[%s5] sm:$0xff]
      %v1418 = vld [vmem:[%s5 + $0x8] sm:$0xff]
      %v1419 = vld [vmem:[%s7] sm:$0xff]
      %v1420 = vld [vmem:[%s7 + $0x8] sm:$0xff]
      %v1421 = vld [vmem:[%s7 + $0x10] sm:$0xff]
      %v1422 = vld [vmem:[%s7 + $0x18] sm:$0xff]
      %v1423 = vld [vmem:[%s7 + $0x20] sm:$0xff]
      %v1424 = vld [vmem:[%s7 + $0x28] sm:$0xff]
      %v1425 = vld [vmem:[%s7 + $0x30] sm:$0xff]
      %v1426 = vld [vmem:[%s7 + $0x38] sm:$0xff]
      %v1427 = vld [vmem:[%s9] sm:$0xff]
      %v1428 = vld [vmem:[%s9 + $0x8] sm:$0xff]
      %v1429 = vld [vmem:[%s9 + $0x10] sm:$0xff]
      %v1430 = vld [vmem:[%s9 + $0x18] sm:$0xff]
      %v1431 = vld [vmem:[%s9 + $0x20] sm:$0xff]
      %v1432 = vld [vmem:[%s9 + $0x28] sm:$0xff]
      %v1433 = vld [vmem:[%s9 + $0x30] sm:$0xff]
      %v1434 = vld [vmem:[%s9 + $0x38] sm:$0xff]
      %v1435 = vld [vmem:[%s1310] sm:$0xff]
      %v1436 = vld [vmem:[%s1310 + $0x8] sm:$0xff]
      %v1437 = vld [vmem:[%s1310 + $0x10] sm:$0xff]
      %v1438 = vld [vmem:[%s1310 + $0x18] sm:$0xff]
      %v1439 = vld [vmem:[%s1313] sm:$0x1]
      %v1441 = vperm.slane %v1439, 0
      %vm1443 = vcmask 261120
      %v1445 = vsel %vm1443, %v1417, 0
      %v1448 = vsel %vm1443, %v1418, 0
      %1450 = vmatpush.msra.mxu0 0.0
      %1451 = vmatpush.msra.mxu0 0.0
      %1452 = vmatpush.msra.mxu0 0.0
      %1453 = vmatpush.msra.mxu0 0.0
      %1454 = vmatpush.msra.mxu0 0.0
      %1455 = vmatpush.msra.mxu0 0.0
      %1456 = vmatpush.msra.mxu0 0.0
      %1457 = vmatpush.msra.mxu0 0.0
      %1458 = vmatpush.msra.mxu0 0.0
      %1459 = vmatpush.msra.mxu0 0.0
      %1460 = vmatpush.msra.mxu0 0.0
      %1461 = vmatpush.msra.mxu0 0.0
      %1462 = vmatpush.msra.mxu0 %v1438
      %1463 = vmatpush.msra.mxu0 %v1437
      %1464 = vmatpush.msra.mxu0 %v1436
      %1465 = vmatpush.msra.mxu0 %v1435
      %1466 = vmatmul.f32.gmra.mxu0 %v1445
      %v1467 = vpop.f32.mrf.mxu0
      %v1468 = vadd.f32 %v1441, %v1467
      %1469 = vmatmul.f32.gmra.mxu0 %v1448
      %v1470 = vpop.f32.mrf.mxu0
      %v1471 = vadd.f32 %v1441, %v1470
      %1472 = vdwg.mxu0
      %v1473 = vmax.f32 %v1468, 0.0
      %v1474 = vmax.f32 %v1471, 0.0
      %v1475 = vld [vmem:[%s1318] sm:$0xff]
      %v1476 = vld [vmem:[%s1318 + $0x8] sm:$0xff]
      %v1477 = vld [vmem:[%s1318 + $0x10] sm:$0xff]
      %v1478 = vld [vmem:[%s1318 + $0x18] sm:$0xff]
      %v1479 = vld [vmem:[%s1321] sm:$0x1]
      %v1481 = vperm.slane %v1479, 0
      %v1484 = vsel %vm1443, %v1413, 0
      %v1487 = vsel %vm1443, %v1414, 0
      %1489 = vmatpush.msra.mxu0 0.0
      %1490 = vmatpush.msra.mxu0 0.0
      %1491 = vmatpush.msra.mxu0 0.0
      %1492 = vmatpush.msra.mxu0 0.0
      %1493 = vmatpush.msra.mxu0 0.0
      %1494 = vmatpush.msra.mxu0 0.0
      %1495 = vmatpush.msra.mxu0 0.0
      %1496 = vmatpush.msra.mxu0 0.0
      %1497 = vmatpush.msra.mxu0 0.0
      %1498 = vmatpush.msra.mxu0 0.0
      %1499 = vmatpush.msra.mxu0 0.0
      %1500 = vmatpush.msra.mxu0 0.0
      %1501 = vmatpush.msra.mxu0 %v1478
      %1502 = vmatpush.msra.mxu0 %v1477
      %1503 = vmatpush.msra.mxu0 %v1476
      %1504 = vmatpush.msra.mxu0 %v1475
      %1505 = vmatmul.f32.gmra.mxu0 %v1484
      %v1506 = vpop.f32.mrf.mxu0
      %v1507 = vadd.f32 %v1481, %v1506
      %1508 = vmatmul.f32.gmra.mxu0 %v1487
      %v1509 = vpop.f32.mrf.mxu0
      %v1510 = vadd.f32 %v1481, %v1509
      %1511 = vdwg.mxu0
      %v1512 = vld [vmem:[%s1326] sm:$0xff]
      %v1513 = vld [vmem:[%s1326 + $0x8] sm:$0xff]
      %v1514 = vld [vmem:[%s1326 + $0x10] sm:$0xff]
      %v1515 = vld [vmem:[%s1326 + $0x18] sm:$0xff]
      %v1516 = vld [vmem:[%s1329] sm:$0x1]
      %1519 = vrot.lane.b32.xlu0 %v1507, 120
      %v1520 = vpop.permute.xlu0 %1519
      %1521 = vrot.lane.b32.xlu0 %v1510, 120
      %v1522 = vpop.permute.xlu0 %1521
      %1523 = vrot.lane.b32.xlu0 %v1507, 112
      %v1524 = vpop.permute.xlu0 %1523
      %1525 = vrot.lane.b32.xlu0 %v1510, 112
      %v1526 = vpop.permute.xlu0 %1525
      %1527 = vrot.lane.b32.xlu0 %v1507, 104
      %v1528 = vpop.permute.xlu0 %1527
      %1529 = vrot.lane.b32.xlu0 %v1510, 104
      %v1530 = vpop.permute.xlu0 %1529
      %1531 = vrot.lane.b32.xlu0 %v1507, 96
      %v1532 = vpop.permute.xlu0 %1531
      %vm1533 = vcmask 64512
      %v1534 = vsel %vm1533, %v1507, 0
      %v1536 = vsel %vm1533, %v1532, 0
      %1538 = vmatpush.xpose.msra.mxu0 0.0
      %1539 = vmatpush.xpose.msra.mxu0 0.0
      %1540 = vmatpush.xpose.msra.mxu0 0.0
      %1541 = vmatpush.xpose.msra.mxu0 0.0
      %1542 = vmatpush.xpose.msra.mxu0 0.0
      %1543 = vmatpush.xpose.msra.mxu0 0.0
      %1544 = vmatpush.xpose.msra.mxu0 0.0
      %1545 = vmatpush.xpose.msra.mxu0 0.0
      %1546 = vmatpush.xpose.msra.mxu0 0.0
      %1547 = vmatpush.xpose.msra.mxu0 0.0
      %1548 = vmatpush.xpose.msra.mxu0 0.0
      %1549 = vmatpush.xpose.msra.mxu0 0.0
      %1550 = vmatpush.xpose.msra.mxu0 0.0
      %1551 = vmatpush.xpose.msra.mxu0 0.0
      %1552 = vmatpush.xpose.msra.mxu0 0.0
      %1553 = vmatpush.xpose.msra.mxu0 %v1536
      %1554 = vmatmul.f32.gmra.mxu0 %v1534
      %v1555 = vpop.f32.mrf.mxu0
      %v1556 = vadd.f32 0.0, %v1555
      %1557 = vdwg.mxu0
      %1558 = vrot.lane.b32.xlu0 %v1510, 96
      %v1559 = vpop.permute.xlu0 %1558
      %v1560 = vsel %vm1533, %v1510, 0
      %v1562 = vsel %vm1533, %v1559, 0
      %1564 = vmatpush.xpose.msra.mxu0 0.0
      %1565 = vmatpush.xpose.msra.mxu0 0.0
      %1566 = vmatpush.xpose.msra.mxu0 0.0
      %1567 = vmatpush.xpose.msra.mxu0 0.0
      %1568 = vmatpush.xpose.msra.mxu0 0.0
      %1569 = vmatpush.xpose.msra.mxu0 0.0
      %1570 = vmatpush.xpose.msra.mxu0 0.0
      %1571 = vmatpush.xpose.msra.mxu0 0.0
      %1572 = vmatpush.xpose.msra.mxu0 0.0
      %1573 = vmatpush.xpose.msra.mxu0 0.0
      %1574 = vmatpush.xpose.msra.mxu0 0.0
      %1575 = vmatpush.xpose.msra.mxu0 0.0
      %1576 = vmatpush.xpose.msra.mxu0 0.0
      %1577 = vmatpush.xpose.msra.mxu0 0.0
      %1578 = vmatpush.xpose.msra.mxu0 0.0
      %1579 = vmatpush.xpose.msra.mxu0 %v1562
      %1580 = vmatmul.f32.gmra.mxu0 %v1560
      %v1581 = vpop.f32.mrf.mxu0
      %v1582 = vadd.f32 0.0, %v1581
      %1583 = vdwg.mxu0
      %1584 = vrot.lane.b32.xlu0 %v1520, 96
      %v1585 = vpop.permute.xlu0 %1584
      %v1586 = vsel %vm1533, %v1520, 0
      %v1588 = vsel %vm1533, %v1585, 0
      %1590 = vmatpush.xpose.msra.mxu0 0.0
      %1591 = vmatpush.xpose.msra.mxu0 0.0
      %1592 = vmatpush.xpose.msra.mxu0 0.0
      %1593 = vmatpush.xpose.msra.mxu0 0.0
      %1594 = vmatpush.xpose.msra.mxu0 0.0
      %1595 = vmatpush.xpose.msra.mxu0 0.0
      %1596 = vmatpush.xpose.msra.mxu0 0.0
      %1597 = vmatpush.xpose.msra.mxu0 0.0
      %1598 = vmatpush.xpose.msra.mxu0 0.0
      %1599 = vmatpush.xpose.msra.mxu0 0.0
      %1600 = vmatpush.xpose.msra.mxu0 0.0
      %1601 = vmatpush.xpose.msra.mxu0 0.0
      %1602 = vmatpush.xpose.msra.mxu0 0.0
      %1603 = vmatpush.xpose.msra.mxu0 0.0
      %1604 = vmatpush.xpose.msra.mxu0 0.0
      %1605 = vmatpush.xpose.msra.mxu0 %v1588
      %1606 = vmatmul.f32.gmra.mxu0 %v1586
      %v1607 = vpop.f32.mrf.mxu0
      %v1608 = vadd.f32 0.0, %v1607
      %1609 = vdwg.mxu0
      %1610 = vrot.lane.b32.xlu0 %v1522, 96
      %v1611 = vpop.permute.xlu0 %1610
      %v1612 = vsel %vm1533, %v1522, 0
      %v1614 = vsel %vm1533, %v1611, 0
      %1616 = vmatpush.xpose.msra.mxu0 0.0
      %1617 = vmatpush.xpose.msra.mxu0 0.0
      %1618 = vmatpush.xpose.msra.mxu0 0.0
      %1619 = vmatpush.xpose.msra.mxu0 0.0
      %1620 = vmatpush.xpose.msra.mxu0 0.0
      %1621 = vmatpush.xpose.msra.mxu0 0.0
      %1622 = vmatpush.xpose.msra.mxu0 0.0
      %1623 = vmatpush.xpose.msra.mxu0 0.0
      %1624 = vmatpush.xpose.msra.mxu0 0.0
      %1625 = vmatpush.xpose.msra.mxu0 0.0
      %1626 = vmatpush.xpose.msra.mxu0 0.0
      %1627 = vmatpush.xpose.msra.mxu0 0.0
      %1628 = vmatpush.xpose.msra.mxu0 0.0
      %1629 = vmatpush.xpose.msra.mxu0 0.0
      %1630 = vmatpush.xpose.msra.mxu0 0.0
      %1631 = vmatpush.xpose.msra.mxu0 %v1614
      %1632 = vmatmul.f32.gmra.mxu0 %v1612
      %v1633 = vpop.f32.mrf.mxu0
      %v1634 = vadd.f32 0.0, %v1633
      %1635 = vdwg.mxu0
      %1636 = vrot.lane.b32.xlu0 %v1524, 96
      %v1637 = vpop.permute.xlu0 %1636
      %v1638 = vsel %vm1533, %v1524, 0
      %v1640 = vsel %vm1533, %v1637, 0
      %1642 = vmatpush.xpose.msra.mxu0 0.0
      %1643 = vmatpush.xpose.msra.mxu0 0.0
      %1644 = vmatpush.xpose.msra.mxu0 0.0
      %1645 = vmatpush.xpose.msra.mxu0 0.0
      %1646 = vmatpush.xpose.msra.mxu0 0.0
      %1647 = vmatpush.xpose.msra.mxu0 0.0
      %1648 = vmatpush.xpose.msra.mxu0 0.0
      %1649 = vmatpush.xpose.msra.mxu0 0.0
      %1650 = vmatpush.xpose.msra.mxu0 0.0
      %1651 = vmatpush.xpose.msra.mxu0 0.0
      %1652 = vmatpush.xpose.msra.mxu0 0.0
      %1653 = vmatpush.xpose.msra.mxu0 0.0
      %1654 = vmatpush.xpose.msra.mxu0 0.0
      %1655 = vmatpush.xpose.msra.mxu0 0.0
      %1656 = vmatpush.xpose.msra.mxu0 0.0
      %1657 = vmatpush.xpose.msra.mxu0 %v1640
      %1658 = vmatmul.f32.gmra.mxu0 %v1638
      %v1659 = vpop.f32.mrf.mxu0
      %v1660 = vadd.f32 0.0, %v1659
      %1661 = vdwg.mxu0
      %1662 = vrot.lane.b32.xlu0 %v1526, 96
      %v1663 = vpop.permute.xlu0 %1662
      %v1664 = vsel %vm1533, %v1526, 0
      %v1666 = vsel %vm1533, %v1663, 0
      %1668 = vmatpush.xpose.msra.mxu0 0.0
      %1669 = vmatpush.xpose.msra.mxu0 0.0
      %1670 = vmatpush.xpose.msra.mxu0 0.0
      %1671 = vmatpush.xpose.msra.mxu0 0.0
      %1672 = vmatpush.xpose.msra.mxu0 0.0
      %1673 = vmatpush.xpose.msra.mxu0 0.0
      %1674 = vmatpush.xpose.msra.mxu0 0.0
      %1675 = vmatpush.xpose.msra.mxu0 0.0
      %1676 = vmatpush.xpose.msra.mxu0 0.0
      %1677 = vmatpush.xpose.msra.mxu0 0.0
      %1678 = vmatpush.xpose.msra.mxu0 0.0
      %1679 = vmatpush.xpose.msra.mxu0 0.0
      %1680 = vmatpush.xpose.msra.mxu0 0.0
      %1681 = vmatpush.xpose.msra.mxu0 0.0
      %1682 = vmatpush.xpose.msra.mxu0 0.0
      %1683 = vmatpush.xpose.msra.mxu0 %v1666
      %1684 = vmatmul.f32.gmra.mxu0 %v1664
      %v1685 = vpop.f32.mrf.mxu0
      %v1686 = vadd.f32 0.0, %v1685
      %1687 = vdwg.mxu0
      %1688 = vrot.lane.b32.xlu0 %v1528, 96
      %v1689 = vpop.permute.xlu0 %1688
      %v1690 = vsel %vm1533, %v1528, 0
      %v1692 = vsel %vm1533, %v1689, 0
      %1694 = vmatpush.xpose.msra.mxu0 0.0
      %1695 = vmatpush.xpose.msra.mxu0 0.0
      %1696 = vmatpush.xpose.msra.mxu0 0.0
      %1697 = vmatpush.xpose.msra.mxu0 0.0
      %1698 = vmatpush.xpose.msra.mxu0 0.0
      %1699 = vmatpush.xpose.msra.mxu0 0.0
      %1700 = vmatpush.xpose.msra.mxu0 0.0
      %1701 = vmatpush.xpose.msra.mxu0 0.0
      %1702 = vmatpush.xpose.msra.mxu0 0.0
      %1703 = vmatpush.xpose.msra.mxu0 0.0
      %1704 = vmatpush.xpose.msra.mxu0 0.0
      %1705 = vmatpush.xpose.msra.mxu0 0.0
      %1706 = vmatpush.xpose.msra.mxu0 0.0
      %1707 = vmatpush.xpose.msra.mxu0 0.0
      %1708 = vmatpush.xpose.msra.mxu0 0.0
      %1709 = vmatpush.xpose.msra.mxu0 %v1692
      %1710 = vmatmul.f32.gmra.mxu0 %v1690
      %v1711 = vpop.f32.mrf.mxu0
      %v1712 = vadd.f32 0.0, %v1711
      %1713 = vdwg.mxu0
      %1714 = vrot.lane.b32.xlu0 %v1530, 96
      %v1715 = vpop.permute.xlu0 %1714
      %v1716 = vsel %vm1533, %v1530, 0
      %v1718 = vsel %vm1533, %v1715, 0
      %1720 = vmatpush.xpose.msra.mxu0 0.0
      %1721 = vmatpush.xpose.msra.mxu0 0.0
      %1722 = vmatpush.xpose.msra.mxu0 0.0
      %1723 = vmatpush.xpose.msra.mxu0 0.0
      %1724 = vmatpush.xpose.msra.mxu0 0.0
      %1725 = vmatpush.xpose.msra.mxu0 0.0
      %1726 = vmatpush.xpose.msra.mxu0 0.0
      %1727 = vmatpush.xpose.msra.mxu0 0.0
      %1728 = vmatpush.xpose.msra.mxu0 0.0
      %1729 = vmatpush.xpose.msra.mxu0 0.0
      %1730 = vmatpush.xpose.msra.mxu0 0.0
      %1731 = vmatpush.xpose.msra.mxu0 0.0
      %1732 = vmatpush.xpose.msra.mxu0 0.0
      %1733 = vmatpush.xpose.msra.mxu0 0.0
      %1734 = vmatpush.xpose.msra.mxu0 0.0
      %1735 = vmatpush.xpose.msra.mxu0 %v1718
      %1736 = vmatmul.f32.gmra.mxu0 %v1716
      %v1737 = vpop.f32.mrf.mxu0
      %v1738 = vadd.f32 0.0, %v1737
      %1739 = vdwg.mxu0
      %v1740 = vmul.f32 %v1556, 0.35355338
      %v1741 = vmul.f32 %v1582, 0.35355338
      %v1742 = vmul.f32 %v1608, 0.35355338
      %v1743 = vmul.f32 %v1634, 0.35355338
      %v1744 = vmul.f32 %v1660, 0.35355338
      %v1745 = vmul.f32 %v1686, 0.35355338
      %v1746 = vmul.f32 %v1712, 0.35355338
      %v1747 = vmul.f32 %v1738, 0.35355338
      %v1748 = vadd.f32 %v1740, %v1419
      %v1749 = vadd.f32 %v1741, %v1420
      %v1750 = vadd.f32 %v1742, %v1421
      %v1751 = vadd.f32 %v1743, %v1422
      %v1752 = vadd.f32 %v1744, %v1423
      %v1753 = vadd.f32 %v1745, %v1424
      %v1754 = vadd.f32 %v1746, %v1425
      %v1755 = vadd.f32 %v1747, %v1426
      %v1756 = vsel %vm1533, %v1748, -inf
      %1757 = vmax.xlane.f32.xlu0 %v1756
      %v1758 = vpop.xlane.xlu0 %1757
      %v1759 = vsel %vm1533, %v1749, -inf
      %1760 = vmax.xlane.f32.xlu0 %v1759
      %v1761 = vpop.xlane.xlu0 %1760
      %v1762 = vsel %vm1533, %v1750, -inf
      %1763 = vmax.xlane.f32.xlu0 %v1762
      %v1764 = vpop.xlane.xlu0 %1763
      %v1765 = vsel %vm1533, %v1751, -inf
      %1766 = vmax.xlane.f32.xlu0 %v1765
      %v1767 = vpop.xlane.xlu0 %1766
      %v1768 = vsel %vm1533, %v1752, -inf
      %1769 = vmax.xlane.f32.xlu0 %v1768
      %v1770 = vpop.xlane.xlu0 %1769
      %v1771 = vsel %vm1533, %v1753, -inf
      %1772 = vmax.xlane.f32.xlu0 %v1771
      %v1773 = vpop.xlane.xlu0 %1772
      %v1774 = vsel %vm1533, %v1754, -inf
      %1775 = vmax.xlane.f32.xlu0 %v1774
      %v1776 = vpop.xlane.xlu0 %1775
      %v1777 = vsel %vm1533, %v1755, -inf
      %1778 = vmax.xlane.f32.xlu0 %v1777
      %v1779 = vpop.xlane.xlu0 %1778
      %v1780 = vsub.f32 %v1748, %v1758
      %v1781 = vsub.f32 %v1749, %v1761
      %v1782 = vsub.f32 %v1750, %v1764
      %v1783 = vsub.f32 %v1751, %v1767
      %v1784 = vsub.f32 %v1752, %v1770
      %v1785 = vsub.f32 %v1753, %v1773
      %v1786 = vsub.f32 %v1754, %v1776
      %v1787 = vsub.f32 %v1755, %v1779
      %v1788 = vmul.f32 %v1780, 1.442695
      %v1789 = vpow.pop %v1788
      %v1790 = vmul.f32 %v1781, 1.442695
      %v1791 = vpow.pop %v1790
      %v1792 = vmul.f32 %v1782, 1.442695
      %v1793 = vpow.pop %v1792
      %v1794 = vmul.f32 %v1783, 1.442695
      %v1795 = vpow.pop %v1794
      %v1796 = vmul.f32 %v1784, 1.442695
      %v1797 = vpow.pop %v1796
      %v1798 = vmul.f32 %v1785, 1.442695
      %v1799 = vpow.pop %v1798
      %v1800 = vmul.f32 %v1786, 1.442695
      %v1801 = vpow.pop %v1800
      %v1802 = vmul.f32 %v1787, 1.442695
      %v1803 = vpow.pop %v1802
      %v1804 = vsel %vm1533, %v1789, 0.0
      %1805 = vadd.xlane.f32.xlu0 %v1804
      %v1806 = vpop.xlane.xlu0 %1805
      %v1807 = vsel %vm1533, %v1791, 0.0
      %1808 = vadd.xlane.f32.xlu0 %v1807
      %v1809 = vpop.xlane.xlu0 %1808
      %v1810 = vsel %vm1533, %v1793, 0.0
      %1811 = vadd.xlane.f32.xlu0 %v1810
      %v1812 = vpop.xlane.xlu0 %1811
      %v1813 = vsel %vm1533, %v1795, 0.0
      %1814 = vadd.xlane.f32.xlu0 %v1813
      %v1815 = vpop.xlane.xlu0 %1814
      %v1816 = vsel %vm1533, %v1797, 0.0
      %1817 = vadd.xlane.f32.xlu0 %v1816
      %v1818 = vpop.xlane.xlu0 %1817
      %v1819 = vsel %vm1533, %v1799, 0.0
      %1820 = vadd.xlane.f32.xlu0 %v1819
      %v1821 = vpop.xlane.xlu0 %1820
      %v1822 = vsel %vm1533, %v1801, 0.0
      %1823 = vadd.xlane.f32.xlu0 %v1822
      %v1824 = vpop.xlane.xlu0 %1823
      %v1825 = vsel %vm1533, %v1803, 0.0
      %1826 = vadd.xlane.f32.xlu0 %v1825
      %v1827 = vpop.xlane.xlu0 %1826
      %v1828 = vrcp.pop %v1806
      %v1829 = vrcp.pop %v1809
      %v1830 = vrcp.pop %v1812
      %v1831 = vrcp.pop %v1815
      %v1832 = vrcp.pop %v1818
      %v1833 = vrcp.pop %v1821
      %v1834 = vrcp.pop %v1824
      %v1835 = vrcp.pop %v1827
      %v1836 = vmul.f32 %v1789, %v1828
      %v1837 = vmul.f32 %v1791, %v1829
      %v1838 = vmul.f32 %v1793, %v1830
      %v1839 = vmul.f32 %v1795, %v1831
      %v1840 = vmul.f32 %v1797, %v1832
      %v1841 = vmul.f32 %v1799, %v1833
      %v1842 = vmul.f32 %v1801, %v1834
      %v1843 = vmul.f32 %v1803, %v1835
      %1844 = vrot.lane.b32.xlu0 %v1507, 64
      %v1845 = vpop.permute.xlu0 %1844
      %v1848 = vsel %vm1533, %v1836, 0
      %1850 = vmatpush.msra.mxu0 0.0
      %1851 = vmatpush.msra.mxu0 0.0
      %1852 = vmatpush.msra.mxu0 0.0
      %1853 = vmatpush.msra.mxu0 0.0
      %1854 = vmatpush.msra.mxu0 0.0
      %1855 = vmatpush.msra.mxu0 0.0
      %1856 = vmatpush.msra.mxu0 0.0
      %1857 = vmatpush.msra.mxu0 0.0
      %1858 = vmatpush.msra.mxu0 0.0
      %1859 = vmatpush.msra.mxu0 0.0
      %1860 = vmatpush.msra.mxu0 0.0
      %1861 = vmatpush.msra.mxu0 0.0
      %1862 = vmatpush.msra.mxu0 0.0
      %1863 = vmatpush.msra.mxu0 0.0
      %1864 = vmatpush.msra.mxu0 0.0
      %1865 = vmatpush.msra.mxu0 %v1845
      %1866 = vmatmul.f32.gmra.mxu0 %v1848
      %v1867 = vpop.f32.mrf.mxu0
      %v1868 = vadd.f32 0.0, %v1867
      %1869 = vdwg.mxu0
      %1870 = vrot.lane.b32.xlu0 %v1510, 64
      %v1871 = vpop.permute.xlu0 %1870
      %v1874 = vsel %vm1533, %v1837, 0
      %1876 = vmatpush.msra.mxu0 0.0
      %1877 = vmatpush.msra.mxu0 0.0
      %1878 = vmatpush.msra.mxu0 0.0
      %1879 = vmatpush.msra.mxu0 0.0
      %1880 = vmatpush.msra.mxu0 0.0
      %1881 = vmatpush.msra.mxu0 0.0
      %1882 = vmatpush.msra.mxu0 0.0
      %1883 = vmatpush.msra.mxu0 0.0
      %1884 = vmatpush.msra.mxu0 0.0
      %1885 = vmatpush.msra.mxu0 0.0
      %1886 = vmatpush.msra.mxu0 0.0
      %1887 = vmatpush.msra.mxu0 0.0
      %1888 = vmatpush.msra.mxu0 0.0
      %1889 = vmatpush.msra.mxu0 0.0
      %1890 = vmatpush.msra.mxu0 0.0
      %1891 = vmatpush.msra.mxu0 %v1871
      %1892 = vmatmul.f32.gmra.mxu0 %v1874
      %v1893 = vpop.f32.mrf.mxu0
      %v1894 = vadd.f32 0.0, %v1893
      %1895 = vdwg.mxu0
      %1896 = vrot.lane.b32.xlu0 %v1520, 64
      %v1897 = vpop.permute.xlu0 %1896
      %v1900 = vsel %vm1533, %v1838, 0
      %1902 = vmatpush.msra.mxu0 0.0
      %1903 = vmatpush.msra.mxu0 0.0
      %1904 = vmatpush.msra.mxu0 0.0
      %1905 = vmatpush.msra.mxu0 0.0
      %1906 = vmatpush.msra.mxu0 0.0
      %1907 = vmatpush.msra.mxu0 0.0
      %1908 = vmatpush.msra.mxu0 0.0
      %1909 = vmatpush.msra.mxu0 0.0
      %1910 = vmatpush.msra.mxu0 0.0
      %1911 = vmatpush.msra.mxu0 0.0
      %1912 = vmatpush.msra.mxu0 0.0
      %1913 = vmatpush.msra.mxu0 0.0
      %1914 = vmatpush.msra.mxu0 0.0
      %1915 = vmatpush.msra.mxu0 0.0
      %1916 = vmatpush.msra.mxu0 0.0
      %1917 = vmatpush.msra.mxu0 %v1897
      %1918 = vmatmul.f32.gmra.mxu0 %v1900
      %v1919 = vpop.f32.mrf.mxu0
      %v1920 = vadd.f32 0.0, %v1919
      %1921 = vdwg.mxu0
      %1922 = vrot.lane.b32.xlu0 %v1522, 64
      %v1923 = vpop.permute.xlu0 %1922
      %v1926 = vsel %vm1533, %v1839, 0
      %1928 = vmatpush.msra.mxu0 0.0
      %1929 = vmatpush.msra.mxu0 0.0
      %1930 = vmatpush.msra.mxu0 0.0
      %1931 = vmatpush.msra.mxu0 0.0
      %1932 = vmatpush.msra.mxu0 0.0
      %1933 = vmatpush.msra.mxu0 0.0
      %1934 = vmatpush.msra.mxu0 0.0
      %1935 = vmatpush.msra.mxu0 0.0
      %1936 = vmatpush.msra.mxu0 0.0
      %1937 = vmatpush.msra.mxu0 0.0
      %1938 = vmatpush.msra.mxu0 0.0
      %1939 = vmatpush.msra.mxu0 0.0
      %1940 = vmatpush.msra.mxu0 0.0
      %1941 = vmatpush.msra.mxu0 0.0
      %1942 = vmatpush.msra.mxu0 0.0
      %1943 = vmatpush.msra.mxu0 %v1923
      %1944 = vmatmul.f32.gmra.mxu0 %v1926
      %v1945 = vpop.f32.mrf.mxu0
      %v1946 = vadd.f32 0.0, %v1945
      %1947 = vdwg.mxu0
      %1948 = vrot.lane.b32.xlu0 %v1524, 64
      %v1949 = vpop.permute.xlu0 %1948
      %v1952 = vsel %vm1533, %v1840, 0
      %1954 = vmatpush.msra.mxu0 0.0
      %1955 = vmatpush.msra.mxu0 0.0
      %1956 = vmatpush.msra.mxu0 0.0
      %1957 = vmatpush.msra.mxu0 0.0
      %1958 = vmatpush.msra.mxu0 0.0
      %1959 = vmatpush.msra.mxu0 0.0
      %1960 = vmatpush.msra.mxu0 0.0
      %1961 = vmatpush.msra.mxu0 0.0
      %1962 = vmatpush.msra.mxu0 0.0
      %1963 = vmatpush.msra.mxu0 0.0
      %1964 = vmatpush.msra.mxu0 0.0
      %1965 = vmatpush.msra.mxu0 0.0
      %1966 = vmatpush.msra.mxu0 0.0
      %1967 = vmatpush.msra.mxu0 0.0
      %1968 = vmatpush.msra.mxu0 0.0
      %1969 = vmatpush.msra.mxu0 %v1949
      %1970 = vmatmul.f32.gmra.mxu0 %v1952
      %v1971 = vpop.f32.mrf.mxu0
      %v1972 = vadd.f32 0.0, %v1971
      %1973 = vdwg.mxu0
      %1974 = vrot.lane.b32.xlu0 %v1526, 64
      %v1975 = vpop.permute.xlu0 %1974
      %v1978 = vsel %vm1533, %v1841, 0
      %1980 = vmatpush.msra.mxu0 0.0
      %1981 = vmatpush.msra.mxu0 0.0
      %1982 = vmatpush.msra.mxu0 0.0
      %1983 = vmatpush.msra.mxu0 0.0
      %1984 = vmatpush.msra.mxu0 0.0
      %1985 = vmatpush.msra.mxu0 0.0
      %1986 = vmatpush.msra.mxu0 0.0
      %1987 = vmatpush.msra.mxu0 0.0
      %1988 = vmatpush.msra.mxu0 0.0
      %1989 = vmatpush.msra.mxu0 0.0
      %1990 = vmatpush.msra.mxu0 0.0
      %1991 = vmatpush.msra.mxu0 0.0
      %1992 = vmatpush.msra.mxu0 0.0
      %1993 = vmatpush.msra.mxu0 0.0
      %1994 = vmatpush.msra.mxu0 0.0
      %1995 = vmatpush.msra.mxu0 %v1975
      %1996 = vmatmul.f32.gmra.mxu0 %v1978
      %v1997 = vpop.f32.mrf.mxu0
      %v1998 = vadd.f32 0.0, %v1997
      %1999 = vdwg.mxu0
      %2000 = vrot.lane.b32.xlu0 %v1528, 64
      %v2001 = vpop.permute.xlu0 %2000
      %v2004 = vsel %vm1533, %v1842, 0
      %2006 = vmatpush.msra.mxu0 0.0
      %2007 = vmatpush.msra.mxu0 0.0
      %2008 = vmatpush.msra.mxu0 0.0
      %2009 = vmatpush.msra.mxu0 0.0
      %2010 = vmatpush.msra.mxu0 0.0
      %2011 = vmatpush.msra.mxu0 0.0
      %2012 = vmatpush.msra.mxu0 0.0
      %2013 = vmatpush.msra.mxu0 0.0
      %2014 = vmatpush.msra.mxu0 0.0
      %2015 = vmatpush.msra.mxu0 0.0
      %2016 = vmatpush.msra.mxu0 0.0
      %2017 = vmatpush.msra.mxu0 0.0
      %2018 = vmatpush.msra.mxu0 0.0
      %2019 = vmatpush.msra.mxu0 0.0
      %2020 = vmatpush.msra.mxu0 0.0
      %2021 = vmatpush.msra.mxu0 %v2001
      %2022 = vmatmul.f32.gmra.mxu0 %v2004
      %v2023 = vpop.f32.mrf.mxu0
      %v2024 = vadd.f32 0.0, %v2023
      %2025 = vdwg.mxu0
      %2026 = vrot.lane.b32.xlu0 %v1530, 64
      %v2027 = vpop.permute.xlu0 %2026
      %v2030 = vsel %vm1533, %v1843, 0
      %2032 = vmatpush.msra.mxu0 0.0
      %2033 = vmatpush.msra.mxu0 0.0
      %2034 = vmatpush.msra.mxu0 0.0
      %2035 = vmatpush.msra.mxu0 0.0
      %2036 = vmatpush.msra.mxu0 0.0
      %2037 = vmatpush.msra.mxu0 0.0
      %2038 = vmatpush.msra.mxu0 0.0
      %2039 = vmatpush.msra.mxu0 0.0
      %2040 = vmatpush.msra.mxu0 0.0
      %2041 = vmatpush.msra.mxu0 0.0
      %2042 = vmatpush.msra.mxu0 0.0
      %2043 = vmatpush.msra.mxu0 0.0
      %2044 = vmatpush.msra.mxu0 0.0
      %2045 = vmatpush.msra.mxu0 0.0
      %2046 = vmatpush.msra.mxu0 0.0
      %2047 = vmatpush.msra.mxu0 %v2027
      %2048 = vmatmul.f32.gmra.mxu0 %v2030
      %v2049 = vpop.f32.mrf.mxu0
      %v2050 = vadd.f32 0.0, %v2049
      %2051 = vdwg.mxu0
      %2054 = vrot.lane.b32.xlu0 %v1920, 8
      %v2055 = vpop.permute.xlu0 %2054
      %2056 = vrot.lane.b32.xlu0 %v1946, 8
      %v2057 = vpop.permute.xlu0 %2056
      %2062 = vrot.lane.b32.xlu0 %v1972, 16
      %v2063 = vpop.permute.xlu0 %2062
      %2064 = vrot.lane.b32.xlu0 %v1998, 16
      %v2065 = vpop.permute.xlu0 %2064
      %2070 = vrot.lane.b32.xlu0 %v2024, 24
      %v2071 = vpop.permute.xlu0 %2070
      %2072 = vrot.lane.b32.xlu0 %v2050, 24
      %v2073 = vpop.permute.xlu0 %2072
      %v2076 = vsel %vm1533, %v1868, %v2055
      %v2077 = vsel %vm1533, %v1894, %v2057
      %vm2078 = vcmask 130048
      %v2079 = vsel %vm2078, %v2076, %v2063
      %v2080 = vsel %vm2078, %v2077, %v2065
      %vm2081 = vcmask 195584
      %v2082 = vsel %vm2081, %v2079, %v2071
      %v2083 = vsel %vm2081, %v2080, %v2073
      %v2085 = vperm.slane %v1516, 0
      %v2088 = vsel %vm1443, %v2082, 0
      %v2091 = vsel %vm1443, %v2083, 0
      %2093 = vmatpush.msra.mxu0 0.0
      %2094 = vmatpush.msra.mxu0 0.0
      %2095 = vmatpush.msra.mxu0 0.0
      %2096 = vmatpush.msra.mxu0 0.0
      %2097 = vmatpush.msra.mxu0 0.0
      %2098 = vmatpush.msra.mxu0 0.0
      %2099 = vmatpush.msra.mxu0 0.0
      %2100 = vmatpush.msra.mxu0 0.0
      %2101 = vmatpush.msra.mxu0 0.0
      %2102 = vmatpush.msra.mxu0 0.0
      %2103 = vmatpush.msra.mxu0 0.0
      %2104 = vmatpush.msra.mxu0 0.0
      %2105 = vmatpush.msra.mxu0 %v1515
      %2106 = vmatpush.msra.mxu0 %v1514
      %2107 = vmatpush.msra.mxu0 %v1513
      %2108 = vmatpush.msra.mxu0 %v1512
      %2109 = vmatmul.f32.gmra.mxu0 %v2088
      %v2110 = vpop.f32.mrf.mxu0
      %v2111 = vadd.f32 %v2085, %v2110
      %2112 = vmatmul.f32.gmra.mxu0 %v2091
      %v2113 = vpop.f32.mrf.mxu0
      %v2114 = vadd.f32 %v2085, %v2113
      %2115 = vdwg.mxu0
      %v2116 = vadd.f32 %v1413, %v2111
      %v2117 = vadd.f32 %v1414, %v2114
      %v2118 = vld [vmem:[%s1372] sm:$0x1]
      %v2119 = vld [vmem:[%s1375] sm:$0x1]
      %v2120 = vsel %vm1443, %v2116, 0.0
      %2121 = vadd.xlane.f32.xlu0 %v2120
      %v2122 = vpop.xlane.xlu0 %2121
      %v2123 = vsel %vm1443, %v2117, 0.0
      %2124 = vadd.xlane.f32.xlu0 %v2123
      %v2125 = vpop.xlane.xlu0 %2124
      %v2126 = vrcp.pop 32.0
      %v2127 = vmul.f32 32.0, %v2126
      %v2128 = vsub.f32 1.0, %v2127
      %v2129 = vmul.f32 %v2126, %v2128
      %v2130 = vadd.f32 %v2126, %v2129
      %vm2131 = vweird.f32 %v2126
      %v2132 = vsel %vm2131, %v2126, %v2130
      %v2133 = vmul.f32 %v2122, %v2132
      %v2134 = vmul.f32 %v2125, %v2132
      %v2135 = vsub.f32 %v2116, %v2133
      %v2136 = vsub.f32 %v2117, %v2134
      %v2137 = vmul.f32 %v2135, %v2135
      %v2138 = vmul.f32 %v2136, %v2136
      %v2139 = vsel %vm1443, %v2137, 0.0
      %2140 = vadd.xlane.f32.xlu0 %v2139
      %v2141 = vpop.xlane.xlu0 %2140
      %v2142 = vsel %vm1443, %v2138, 0.0
      %2143 = vadd.xlane.f32.xlu0 %v2142
      %v2144 = vpop.xlane.xlu0 %2143
      %v2145 = vmul.f32 %v2141, %v2132
      %v2146 = vmul.f32 %v2144, %v2132
      %v2147 = vadd.f32 %v2145, 1e-05
      %v2148 = vadd.f32 %v2146, 1e-05
      %v2149 = vrsqrt.pop %v2147
      %v2150 = vmul.f32 %v2149, %v2147
      %v2151 = vmul.f32 %v2150, %v2149
      %v2152 = vmul.f32 0.5, %v2151
      %v2153 = vsub.f32 1.5, %v2152
      %v2154 = vmul.f32 %v2149, %v2153
      %vm2155 = vweird.f32 %v2147
      %vm2156 = vweird.f32 %v2149
      %vm2157 = vmor %vm2155, %vm2156
      %v2158 = vsel %vm2157, %v2149, %v2154
      %v2159 = vrsqrt.pop %v2148
      %v2160 = vmul.f32 %v2159, %v2148
      %v2161 = vmul.f32 %v2160, %v2159
      %v2162 = vmul.f32 0.5, %v2161
      %v2163 = vsub.f32 1.5, %v2162
      %v2164 = vmul.f32 %v2159, %v2163
      %vm2165 = vweird.f32 %v2148
      %vm2166 = vweird.f32 %v2159
      %vm2167 = vmor %vm2165, %vm2166
      %v2168 = vsel %vm2167, %v2159, %v2164
      %v2169 = vmul.f32 %v2135, %v2158
      %v2170 = vmul.f32 %v2136, %v2168
      %v2172 = vperm.slane %v2118, 0
      %v2174 = vmul.f32 %v2169, %v2172
      %v2175 = vmul.f32 %v2170, %v2172
      %v2177 = vperm.slane %v2119, 0
      %v2179 = vadd.f32 %v2174, %v2177
      %v2180 = vadd.f32 %v2175, %v2177
      %v2181 = vld [vmem:[%s1334] sm:$0xff]
      %v2182 = vld [vmem:[%s1334 + $0x8] sm:$0xff]
      %v2183 = vld [vmem:[%s1334 + $0x10] sm:$0xff]
      %v2184 = vld [vmem:[%s1334 + $0x18] sm:$0xff]
      %v2185 = vld [vmem:[%s1337] sm:$0x1]
      %v2187 = vperm.slane %v2185, 0
      %v2190 = vsel %vm1443, %v2179, 0
      %v2193 = vsel %vm1443, %v2180, 0
      %2195 = vmatpush.msra.mxu0 0.0
      %2196 = vmatpush.msra.mxu0 0.0
      %2197 = vmatpush.msra.mxu0 0.0
      %2198 = vmatpush.msra.mxu0 0.0
      %2199 = vmatpush.msra.mxu0 0.0
      %2200 = vmatpush.msra.mxu0 0.0
      %2201 = vmatpush.msra.mxu0 0.0
      %2202 = vmatpush.msra.mxu0 0.0
      %2203 = vmatpush.msra.mxu0 0.0
      %2204 = vmatpush.msra.mxu0 0.0
      %2205 = vmatpush.msra.mxu0 0.0
      %2206 = vmatpush.msra.mxu0 0.0
      %2207 = vmatpush.msra.mxu0 %v2184
      %2208 = vmatpush.msra.mxu0 %v2183
      %2209 = vmatpush.msra.mxu0 %v2182
      %2210 = vmatpush.msra.mxu0 %v2181
      %2211 = vmatmul.f32.gmra.mxu0 %v2190
      %v2212 = vpop.f32.mrf.mxu0
      %v2213 = vadd.f32 %v2187, %v2212
      %2214 = vmatmul.f32.gmra.mxu0 %v2193
      %v2215 = vpop.f32.mrf.mxu0
      %v2216 = vadd.f32 %v2187, %v2215
      %2217 = vdwg.mxu0
      %v2218 = vld [vmem:[%s1342] sm:$0xff]
      %v2219 = vld [vmem:[%s1342 + $0x8] sm:$0xff]
      %v2220 = vld [vmem:[%s1342 + $0x10] sm:$0xff]
      %v2221 = vld [vmem:[%s1342 + $0x18] sm:$0xff]
      %v2222 = vld [vmem:[%s1345] sm:$0x1]
      %v2224 = vperm.slane %v2222, 0
      %v2227 = vsel %vm1443, %v1415, 0
      %v2230 = vsel %vm1443, %v1416, 0
      %2232 = vmatpush.msra.mxu0 0.0
      %2233 = vmatpush.msra.mxu0 0.0
      %2234 = vmatpush.msra.mxu0 0.0
      %2235 = vmatpush.msra.mxu0 0.0
      %2236 = vmatpush.msra.mxu0 0.0
      %2237 = vmatpush.msra.mxu0 0.0
      %2238 = vmatpush.msra.mxu0 0.0
      %2239 = vmatpush.msra.mxu0 0.0
      %2240 = vmatpush.msra.mxu0 0.0
      %2241 = vmatpush.msra.mxu0 0.0
      %2242 = vmatpush.msra.mxu0 0.0
      %2243 = vmatpush.msra.mxu0 0.0
      %2244 = vmatpush.msra.mxu0 %v2221
      %2245 = vmatpush.msra.mxu0 %v2220
      %2246 = vmatpush.msra.mxu0 %v2219
      %2247 = vmatpush.msra.mxu0 %v2218
      %2248 = vmatmul.f32.gmra.mxu0 %v2227
      %v2249 = vpop.f32.mrf.mxu0
      %v2250 = vadd.f32 %v2224, %v2249
      %2251 = vmatmul.f32.gmra.mxu0 %v2230
      %v2252 = vpop.f32.mrf.mxu0
      %v2253 = vadd.f32 %v2224, %v2252
      %2254 = vdwg.mxu0
      %v2255 = vld [vmem:[%s1358] sm:$0xff]
      %v2256 = vld [vmem:[%s1358 + $0x8] sm:$0xff]
      %v2257 = vld [vmem:[%s1358 + $0x10] sm:$0xff]
      %v2258 = vld [vmem:[%s1358 + $0x18] sm:$0xff]
      %v2259 = vld [vmem:[%s1361] sm:$0x1]
      %v2261 = vperm.slane %v2259, 0
      %v2264 = vsel %vm1443, %v1473, 0
      %v2267 = vsel %vm1443, %v1474, 0
      %2269 = vmatpush.msra.mxu0 0.0
      %2270 = vmatpush.msra.mxu0 0.0
      %2271 = vmatpush.msra.mxu0 0.0
      %2272 = vmatpush.msra.mxu0 0.0
      %2273 = vmatpush.msra.mxu0 0.0
      %2274 = vmatpush.msra.mxu0 0.0
      %2275 = vmatpush.msra.mxu0 0.0
      %2276 = vmatpush.msra.mxu0 0.0
      %2277 = vmatpush.msra.mxu0 0.0
      %2278 = vmatpush.msra.mxu0 0.0
      %2279 = vmatpush.msra.mxu0 0.0
      %2280 = vmatpush.msra.mxu0 0.0
      %2281 = vmatpush.msra.mxu0 %v2258
      %2282 = vmatpush.msra.mxu0 %v2257
      %2283 = vmatpush.msra.mxu0 %v2256
      %2284 = vmatpush.msra.mxu0 %v2255
      %2285 = vmatmul.f32.gmra.mxu0 %v2264
      %v2286 = vpop.f32.mrf.mxu0
      %v2287 = vadd.f32 %v2261, %v2286
      %2288 = vmatmul.f32.gmra.mxu0 %v2267
      %v2289 = vpop.f32.mrf.mxu0
      %v2290 = vadd.f32 %v2261, %v2289
      %2291 = vdwg.mxu0
      %v2292 = vld [vmem:[%s1350] sm:$0xff]
      %v2293 = vld [vmem:[%s1350 + $0x8] sm:$0xff]
      %v2294 = vld [vmem:[%s1350 + $0x10] sm:$0xff]
      %v2295 = vld [vmem:[%s1350 + $0x18] sm:$0xff]
      %v2296 = vld [vmem:[%s1353] sm:$0x1]
      %2299 = vrot.lane.b32.xlu0 %v2213, 120
      %v2300 = vpop.permute.xlu0 %2299
      %2301 = vrot.lane.b32.xlu0 %v2216, 120
      %v2302 = vpop.permute.xlu0 %2301
      %2303 = vrot.lane.b32.xlu0 %v2213, 112
      %v2304 = vpop.permute.xlu0 %2303
      %2305 = vrot.lane.b32.xlu0 %v2216, 112
      %v2306 = vpop.permute.xlu0 %2305
      %2307 = vrot.lane.b32.xlu0 %v2213, 104
      %v2308 = vpop.permute.xlu0 %2307
      %2309 = vrot.lane.b32.xlu0 %v2216, 104
      %v2310 = vpop.permute.xlu0 %2309
      %2313 = vrot.lane.b32.xlu0 %v2250, 120
      %v2314 = vpop.permute.xlu0 %2313
      %2315 = vrot.lane.b32.xlu0 %v2253, 120
      %v2316 = vpop.permute.xlu0 %2315
      %2317 = vrot.lane.b32.xlu0 %v2250, 112
      %v2318 = vpop.permute.xlu0 %2317
      %2319 = vrot.lane.b32.xlu0 %v2253, 112
      %v2320 = vpop.permute.xlu0 %2319
      %2321 = vrot.lane.b32.xlu0 %v2250, 104
      %v2322 = vpop.permute.xlu0 %2321
      %2323 = vrot.lane.b32.xlu0 %v2253, 104
      %v2324 = vpop.permute.xlu0 %2323
      %v2325 = vsel %vm1533, %v2213, 0
      %v2327 = vsel %vm1533, %v2250, 0
      %2329 = vmatpush.xpose.msra.mxu0 0.0
      %2330 = vmatpush.xpose.msra.mxu0 0.0
      %2331 = vmatpush.xpose.msra.mxu0 0.0
      %2332 = vmatpush.xpose.msra.mxu0 0.0
      %2333 = vmatpush.xpose.msra.mxu0 0.0
      %2334 = vmatpush.xpose.msra.mxu0 0.0
      %2335 = vmatpush.xpose.msra.mxu0 0.0
      %2336 = vmatpush.xpose.msra.mxu0 0.0
      %2337 = vmatpush.xpose.msra.mxu0 0.0
      %2338 = vmatpush.xpose.msra.mxu0 0.0
      %2339 = vmatpush.xpose.msra.mxu0 0.0
      %2340 = vmatpush.xpose.msra.mxu0 0.0
      %2341 = vmatpush.xpose.msra.mxu0 0.0
      %2342 = vmatpush.xpose.msra.mxu0 0.0
      %2343 = vmatpush.xpose.msra.mxu0 0.0
      %2344 = vmatpush.xpose.msra.mxu0 %v2327
      %2345 = vmatmul.f32.gmra.mxu0 %v2325
      %v2346 = vpop.f32.mrf.mxu0
      %v2347 = vadd.f32 0.0, %v2346
      %2348 = vdwg.mxu0
      %v2349 = vsel %vm1533, %v2216, 0
      %v2351 = vsel %vm1533, %v2253, 0
      %2353 = vmatpush.xpose.msra.mxu0 0.0
      %2354 = vmatpush.xpose.msra.mxu0 0.0
      %2355 = vmatpush.xpose.msra.mxu0 0.0
      %2356 = vmatpush.xpose.msra.mxu0 0.0
      %2357 = vmatpush.xpose.msra.mxu0 0.0
      %2358 = vmatpush.xpose.msra.mxu0 0.0
      %2359 = vmatpush.xpose.msra.mxu0 0.0
      %2360 = vmatpush.xpose.msra.mxu0 0.0
      %2361 = vmatpush.xpose.msra.mxu0 0.0
      %2362 = vmatpush.xpose.msra.mxu0 0.0
      %2363 = vmatpush.xpose.msra.mxu0 0.0
      %2364 = vmatpush.xpose.msra.mxu0 0.0
      %2365 = vmatpush.xpose.msra.mxu0 0.0
      %2366 = vmatpush.xpose.msra.mxu0 0.0
      %2367 = vmatpush.xpose.msra.mxu0 0.0
      %2368 = vmatpush.xpose.msra.mxu0 %v2351
      %2369 = vmatmul.f32.gmra.mxu0 %v2349
      %v2370 = vpop.f32.mrf.mxu0
      %v2371 = vadd.f32 0.0, %v2370
      %2372 = vdwg.mxu0
      %v2373 = vsel %vm1533, %v2300, 0
      %v2375 = vsel %vm1533, %v2314, 0
      %2377 = vmatpush.xpose.msra.mxu0 0.0
      %2378 = vmatpush.xpose.msra.mxu0 0.0
      %2379 = vmatpush.xpose.msra.mxu0 0.0
      %2380 = vmatpush.xpose.msra.mxu0 0.0
      %2381 = vmatpush.xpose.msra.mxu0 0.0
      %2382 = vmatpush.xpose.msra.mxu0 0.0
      %2383 = vmatpush.xpose.msra.mxu0 0.0
      %2384 = vmatpush.xpose.msra.mxu0 0.0
      %2385 = vmatpush.xpose.msra.mxu0 0.0
      %2386 = vmatpush.xpose.msra.mxu0 0.0
      %2387 = vmatpush.xpose.msra.mxu0 0.0
      %2388 = vmatpush.xpose.msra.mxu0 0.0
      %2389 = vmatpush.xpose.msra.mxu0 0.0
      %2390 = vmatpush.xpose.msra.mxu0 0.0
      %2391 = vmatpush.xpose.msra.mxu0 0.0
      %2392 = vmatpush.xpose.msra.mxu0 %v2375
      %2393 = vmatmul.f32.gmra.mxu0 %v2373
      %v2394 = vpop.f32.mrf.mxu0
      %v2395 = vadd.f32 0.0, %v2394
      %2396 = vdwg.mxu0
      %v2397 = vsel %vm1533, %v2302, 0
      %v2399 = vsel %vm1533, %v2316, 0
      %2401 = vmatpush.xpose.msra.mxu0 0.0
      %2402 = vmatpush.xpose.msra.mxu0 0.0
      %2403 = vmatpush.xpose.msra.mxu0 0.0
      %2404 = vmatpush.xpose.msra.mxu0 0.0
      %2405 = vmatpush.xpose.msra.mxu0 0.0
      %2406 = vmatpush.xpose.msra.mxu0 0.0
      %2407 = vmatpush.xpose.msra.mxu0 0.0
      %2408 = vmatpush.xpose.msra.mxu0 0.0
      %2409 = vmatpush.xpose.msra.mxu0 0.0
      %2410 = vmatpush.xpose.msra.mxu0 0.0
      %2411 = vmatpush.xpose.msra.mxu0 0.0
      %2412 = vmatpush.xpose.msra.mxu0 0.0
      %2413 = vmatpush.xpose.msra.mxu0 0.0
      %2414 = vmatpush.xpose.msra.mxu0 0.0
      %2415 = vmatpush.xpose.msra.mxu0 0.0
      %2416 = vmatpush.xpose.msra.mxu0 %v2399
      %2417 = vmatmul.f32.gmra.mxu0 %v2397
      %v2418 = vpop.f32.mrf.mxu0
      %v2419 = vadd.f32 0.0, %v2418
      %2420 = vdwg.mxu0
      %v2421 = vsel %vm1533, %v2304, 0
      %v2423 = vsel %vm1533, %v2318, 0
      %2425 = vmatpush.xpose.msra.mxu0 0.0
      %2426 = vmatpush.xpose.msra.mxu0 0.0
      %2427 = vmatpush.xpose.msra.mxu0 0.0
      %2428 = vmatpush.xpose.msra.mxu0 0.0
      %2429 = vmatpush.xpose.msra.mxu0 0.0
      %2430 = vmatpush.xpose.msra.mxu0 0.0
      %2431 = vmatpush.xpose.msra.mxu0 0.0
      %2432 = vmatpush.xpose.msra.mxu0 0.0
      %2433 = vmatpush.xpose.msra.mxu0 0.0
      %2434 = vmatpush.xpose.msra.mxu0 0.0
      %2435 = vmatpush.xpose.msra.mxu0 0.0
      %2436 = vmatpush.xpose.msra.mxu0 0.0
      %2437 = vmatpush.xpose.msra.mxu0 0.0
      %2438 = vmatpush.xpose.msra.mxu0 0.0
      %2439 = vmatpush.xpose.msra.mxu0 0.0
      %2440 = vmatpush.xpose.msra.mxu0 %v2423
      %2441 = vmatmul.f32.gmra.mxu0 %v2421
      %v2442 = vpop.f32.mrf.mxu0
      %v2443 = vadd.f32 0.0, %v2442
      %2444 = vdwg.mxu0
      %v2445 = vsel %vm1533, %v2306, 0
      %v2447 = vsel %vm1533, %v2320, 0
      %2449 = vmatpush.xpose.msra.mxu0 0.0
      %2450 = vmatpush.xpose.msra.mxu0 0.0
      %2451 = vmatpush.xpose.msra.mxu0 0.0
      %2452 = vmatpush.xpose.msra.mxu0 0.0
      %2453 = vmatpush.xpose.msra.mxu0 0.0
      %2454 = vmatpush.xpose.msra.mxu0 0.0
      %2455 = vmatpush.xpose.msra.mxu0 0.0
      %2456 = vmatpush.xpose.msra.mxu0 0.0
      %2457 = vmatpush.xpose.msra.mxu0 0.0
      %2458 = vmatpush.xpose.msra.mxu0 0.0
      %2459 = vmatpush.xpose.msra.mxu0 0.0
      %2460 = vmatpush.xpose.msra.mxu0 0.0
      %2461 = vmatpush.xpose.msra.mxu0 0.0
      %2462 = vmatpush.xpose.msra.mxu0 0.0
      %2463 = vmatpush.xpose.msra.mxu0 0.0
      %2464 = vmatpush.xpose.msra.mxu0 %v2447
      %2465 = vmatmul.f32.gmra.mxu0 %v2445
      %v2466 = vpop.f32.mrf.mxu0
      %v2467 = vadd.f32 0.0, %v2466
      %2468 = vdwg.mxu0
      %v2469 = vsel %vm1533, %v2308, 0
      %v2471 = vsel %vm1533, %v2322, 0
      %2473 = vmatpush.xpose.msra.mxu0 0.0
      %2474 = vmatpush.xpose.msra.mxu0 0.0
      %2475 = vmatpush.xpose.msra.mxu0 0.0
      %2476 = vmatpush.xpose.msra.mxu0 0.0
      %2477 = vmatpush.xpose.msra.mxu0 0.0
      %2478 = vmatpush.xpose.msra.mxu0 0.0
      %2479 = vmatpush.xpose.msra.mxu0 0.0
      %2480 = vmatpush.xpose.msra.mxu0 0.0
      %2481 = vmatpush.xpose.msra.mxu0 0.0
      %2482 = vmatpush.xpose.msra.mxu0 0.0
      %2483 = vmatpush.xpose.msra.mxu0 0.0
      %2484 = vmatpush.xpose.msra.mxu0 0.0
      %2485 = vmatpush.xpose.msra.mxu0 0.0
      %2486 = vmatpush.xpose.msra.mxu0 0.0
      %2487 = vmatpush.xpose.msra.mxu0 0.0
      %2488 = vmatpush.xpose.msra.mxu0 %v2471
      %2489 = vmatmul.f32.gmra.mxu0 %v2469
      %v2490 = vpop.f32.mrf.mxu0
      %v2491 = vadd.f32 0.0, %v2490
      %2492 = vdwg.mxu0
      %v2493 = vsel %vm1533, %v2310, 0
      %v2495 = vsel %vm1533, %v2324, 0
      %2497 = vmatpush.xpose.msra.mxu0 0.0
      %2498 = vmatpush.xpose.msra.mxu0 0.0
      %2499 = vmatpush.xpose.msra.mxu0 0.0
      %2500 = vmatpush.xpose.msra.mxu0 0.0
      %2501 = vmatpush.xpose.msra.mxu0 0.0
      %2502 = vmatpush.xpose.msra.mxu0 0.0
      %2503 = vmatpush.xpose.msra.mxu0 0.0
      %2504 = vmatpush.xpose.msra.mxu0 0.0
      %2505 = vmatpush.xpose.msra.mxu0 0.0
      %2506 = vmatpush.xpose.msra.mxu0 0.0
      %2507 = vmatpush.xpose.msra.mxu0 0.0
      %2508 = vmatpush.xpose.msra.mxu0 0.0
      %2509 = vmatpush.xpose.msra.mxu0 0.0
      %2510 = vmatpush.xpose.msra.mxu0 0.0
      %2511 = vmatpush.xpose.msra.mxu0 0.0
      %2512 = vmatpush.xpose.msra.mxu0 %v2495
      %2513 = vmatmul.f32.gmra.mxu0 %v2493
      %v2514 = vpop.f32.mrf.mxu0
      %v2515 = vadd.f32 0.0, %v2514
      %2516 = vdwg.mxu0
      %v2517 = vmul.f32 %v2347, 0.35355338
      %v2518 = vmul.f32 %v2371, 0.35355338
      %v2519 = vmul.f32 %v2395, 0.35355338
      %v2520 = vmul.f32 %v2419, 0.35355338
      %v2521 = vmul.f32 %v2443, 0.35355338
      %v2522 = vmul.f32 %v2467, 0.35355338
      %v2523 = vmul.f32 %v2491, 0.35355338
      %v2524 = vmul.f32 %v2515, 0.35355338
      %v2525 = vadd.f32 %v2517, %v1427
      %v2526 = vadd.f32 %v2518, %v1428
      %v2527 = vadd.f32 %v2519, %v1429
      %v2528 = vadd.f32 %v2520, %v1430
      %v2529 = vadd.f32 %v2521, %v1431
      %v2530 = vadd.f32 %v2522, %v1432
      %v2531 = vadd.f32 %v2523, %v1433
      %v2532 = vadd.f32 %v2524, %v1434
      %v2533 = vsel %vm1533, %v2525, -inf
      %2534 = vmax.xlane.f32.xlu0 %v2533
      %v2535 = vpop.xlane.xlu0 %2534
      %v2536 = vsel %vm1533, %v2526, -inf
      %2537 = vmax.xlane.f32.xlu0 %v2536
      %v2538 = vpop.xlane.xlu0 %2537
      %v2539 = vsel %vm1533, %v2527, -inf
      %2540 = vmax.xlane.f32.xlu0 %v2539
      %v2541 = vpop.xlane.xlu0 %2540
      %v2542 = vsel %vm1533, %v2528, -inf
      %2543 = vmax.xlane.f32.xlu0 %v2542
      %v2544 = vpop.xlane.xlu0 %2543
      %v2545 = vsel %vm1533, %v2529, -inf
      %2546 = vmax.xlane.f32.xlu0 %v2545
      %v2547 = vpop.xlane.xlu0 %2546
      %v2548 = vsel %vm1533, %v2530, -inf
      %2549 = vmax.xlane.f32.xlu0 %v2548
      %v2550 = vpop.xlane.xlu0 %2549
      %v2551 = vsel %vm1533, %v2531, -inf
      %2552 = vmax.xlane.f32.xlu0 %v2551
      %v2553 = vpop.xlane.xlu0 %2552
      %v2554 = vsel %vm1533, %v2532, -inf
      %2555 = vmax.xlane.f32.xlu0 %v2554
      %v2556 = vpop.xlane.xlu0 %2555
      %v2557 = vsub.f32 %v2525, %v2535
      %v2558 = vsub.f32 %v2526, %v2538
      %v2559 = vsub.f32 %v2527, %v2541
      %v2560 = vsub.f32 %v2528, %v2544
      %v2561 = vsub.f32 %v2529, %v2547
      %v2562 = vsub.f32 %v2530, %v2550
      %v2563 = vsub.f32 %v2531, %v2553
      %v2564 = vsub.f32 %v2532, %v2556
      %v2565 = vmul.f32 %v2557, 1.442695
      %v2566 = vpow.pop %v2565
      %v2567 = vmul.f32 %v2558, 1.442695
      %v2568 = vpow.pop %v2567
      %v2569 = vmul.f32 %v2559, 1.442695
      %v2570 = vpow.pop %v2569
      %v2571 = vmul.f32 %v2560, 1.442695
      %v2572 = vpow.pop %v2571
      %v2573 = vmul.f32 %v2561, 1.442695
      %v2574 = vpow.pop %v2573
      %v2575 = vmul.f32 %v2562, 1.442695
      %v2576 = vpow.pop %v2575
      %v2577 = vmul.f32 %v2563, 1.442695
      %v2578 = vpow.pop %v2577
      %v2579 = vmul.f32 %v2564, 1.442695
      %v2580 = vpow.pop %v2579
      %v2581 = vsel %vm1533, %v2566, 0.0
      %2582 = vadd.xlane.f32.xlu0 %v2581
      %v2583 = vpop.xlane.xlu0 %2582
      %v2584 = vsel %vm1533, %v2568, 0.0
      %2585 = vadd.xlane.f32.xlu0 %v2584
      %v2586 = vpop.xlane.xlu0 %2585
      %v2587 = vsel %vm1533, %v2570, 0.0
      %2588 = vadd.xlane.f32.xlu0 %v2587
      %v2589 = vpop.xlane.xlu0 %2588
      %v2590 = vsel %vm1533, %v2572, 0.0
      %2591 = vadd.xlane.f32.xlu0 %v2590
      %v2592 = vpop.xlane.xlu0 %2591
      %v2593 = vsel %vm1533, %v2574, 0.0
      %2594 = vadd.xlane.f32.xlu0 %v2593
      %v2595 = vpop.xlane.xlu0 %2594
      %v2596 = vsel %vm1533, %v2576, 0.0
      %2597 = vadd.xlane.f32.xlu0 %v2596
      %v2598 = vpop.xlane.xlu0 %2597
      %v2599 = vsel %vm1533, %v2578, 0.0
      %2600 = vadd.xlane.f32.xlu0 %v2599
      %v2601 = vpop.xlane.xlu0 %2600
      %v2602 = vsel %vm1533, %v2580, 0.0
      %2603 = vadd.xlane.f32.xlu0 %v2602
      %v2604 = vpop.xlane.xlu0 %2603
      %v2605 = vrcp.pop %v2583
      %v2606 = vrcp.pop %v2586
      %v2607 = vrcp.pop %v2589
      %v2608 = vrcp.pop %v2592
      %v2609 = vrcp.pop %v2595
      %v2610 = vrcp.pop %v2598
      %v2611 = vrcp.pop %v2601
      %v2612 = vrcp.pop %v2604
      %v2613 = vmul.f32 %v2566, %v2605
      %v2614 = vmul.f32 %v2568, %v2606
      %v2615 = vmul.f32 %v2570, %v2607
      %v2616 = vmul.f32 %v2572, %v2608
      %v2617 = vmul.f32 %v2574, %v2609
      %v2618 = vmul.f32 %v2576, %v2610
      %v2619 = vmul.f32 %v2578, %v2611
      %v2620 = vmul.f32 %v2580, %v2612
      %2621 = vrot.lane.b32.xlu0 %v2250, 96
      %v2622 = vpop.permute.xlu0 %2621
      %v2625 = vsel %vm1533, %v2613, 0
      %2627 = vmatpush.msra.mxu0 0.0
      %2628 = vmatpush.msra.mxu0 0.0
      %2629 = vmatpush.msra.mxu0 0.0
      %2630 = vmatpush.msra.mxu0 0.0
      %2631 = vmatpush.msra.mxu0 0.0
      %2632 = vmatpush.msra.mxu0 0.0
      %2633 = vmatpush.msra.mxu0 0.0
      %2634 = vmatpush.msra.mxu0 0.0
      %2635 = vmatpush.msra.mxu0 0.0
      %2636 = vmatpush.msra.mxu0 0.0
      %2637 = vmatpush.msra.mxu0 0.0
      %2638 = vmatpush.msra.mxu0 0.0
      %2639 = vmatpush.msra.mxu0 0.0
      %2640 = vmatpush.msra.mxu0 0.0
      %2641 = vmatpush.msra.mxu0 0.0
      %2642 = vmatpush.msra.mxu0 %v2622
      %2643 = vmatmul.f32.gmra.mxu0 %v2625
      %v2644 = vpop.f32.mrf.mxu0
      %v2645 = vadd.f32 0.0, %v2644
      %2646 = vdwg.mxu0
      %2647 = vrot.lane.b32.xlu0 %v2253, 96
      %v2648 = vpop.permute.xlu0 %2647
      %v2651 = vsel %vm1533, %v2614, 0
      %2653 = vmatpush.msra.mxu0 0.0
      %2654 = vmatpush.msra.mxu0 0.0
      %2655 = vmatpush.msra.mxu0 0.0
      %2656 = vmatpush.msra.mxu0 0.0
      %2657 = vmatpush.msra.mxu0 0.0
      %2658 = vmatpush.msra.mxu0 0.0
      %2659 = vmatpush.msra.mxu0 0.0
      %2660 = vmatpush.msra.mxu0 0.0
      %2661 = vmatpush.msra.mxu0 0.0
      %2662 = vmatpush.msra.mxu0 0.0
      %2663 = vmatpush.msra.mxu0 0.0
      %2664 = vmatpush.msra.mxu0 0.0
      %2665 = vmatpush.msra.mxu0 0.0
      %2666 = vmatpush.msra.mxu0 0.0
      %2667 = vmatpush.msra.mxu0 0.0
      %2668 = vmatpush.msra.mxu0 %v2648
      %2669 = vmatmul.f32.gmra.mxu0 %v2651
      %v2670 = vpop.f32.mrf.mxu0
      %v2671 = vadd.f32 0.0, %v2670
      %2672 = vdwg.mxu0
      %2673 = vrot.lane.b32.xlu0 %v2314, 96
      %v2674 = vpop.permute.xlu0 %2673
      %v2677 = vsel %vm1533, %v2615, 0
      %2679 = vmatpush.msra.mxu0 0.0
      %2680 = vmatpush.msra.mxu0 0.0
      %2681 = vmatpush.msra.mxu0 0.0
      %2682 = vmatpush.msra.mxu0 0.0
      %2683 = vmatpush.msra.mxu0 0.0
      %2684 = vmatpush.msra.mxu0 0.0
      %2685 = vmatpush.msra.mxu0 0.0
      %2686 = vmatpush.msra.mxu0 0.0
      %2687 = vmatpush.msra.mxu0 0.0
      %2688 = vmatpush.msra.mxu0 0.0
      %2689 = vmatpush.msra.mxu0 0.0
      %2690 = vmatpush.msra.mxu0 0.0
      %2691 = vmatpush.msra.mxu0 0.0
      %2692 = vmatpush.msra.mxu0 0.0
      %2693 = vmatpush.msra.mxu0 0.0
      %2694 = vmatpush.msra.mxu0 %v2674
      %2695 = vmatmul.f32.gmra.mxu0 %v2677
      %v2696 = vpop.f32.mrf.mxu0
      %v2697 = vadd.f32 0.0, %v2696
      %2698 = vdwg.mxu0
      %2699 = vrot.lane.b32.xlu0 %v2316, 96
      %v2700 = vpop.permute.xlu0 %2699
      %v2703 = vsel %vm1533, %v2616, 0
      %2705 = vmatpush.msra.mxu0 0.0
      %2706 = vmatpush.msra.mxu0 0.0
      %2707 = vmatpush.msra.mxu0 0.0
      %2708 = vmatpush.msra.mxu0 0.0
      %2709 = vmatpush.msra.mxu0 0.0
      %2710 = vmatpush.msra.mxu0 0.0
      %2711 = vmatpush.msra.mxu0 0.0
      %2712 = vmatpush.msra.mxu0 0.0
      %2713 = vmatpush.msra.mxu0 0.0
      %2714 = vmatpush.msra.mxu0 0.0
      %2715 = vmatpush.msra.mxu0 0.0
      %2716 = vmatpush.msra.mxu0 0.0
      %2717 = vmatpush.msra.mxu0 0.0
      %2718 = vmatpush.msra.mxu0 0.0
      %2719 = vmatpush.msra.mxu0 0.0
      %2720 = vmatpush.msra.mxu0 %v2700
      %2721 = vmatmul.f32.gmra.mxu0 %v2703
      %v2722 = vpop.f32.mrf.mxu0
      %v2723 = vadd.f32 0.0, %v2722
      %2724 = vdwg.mxu0
      %2725 = vrot.lane.b32.xlu0 %v2318, 96
      %v2726 = vpop.permute.xlu0 %2725
      %v2729 = vsel %vm1533, %v2617, 0
      %2731 = vmatpush.msra.mxu0 0.0
      %2732 = vmatpush.msra.mxu0 0.0
      %2733 = vmatpush.msra.mxu0 0.0
      %2734 = vmatpush.msra.mxu0 0.0
      %2735 = vmatpush.msra.mxu0 0.0
      %2736 = vmatpush.msra.mxu0 0.0
      %2737 = vmatpush.msra.mxu0 0.0
      %2738 = vmatpush.msra.mxu0 0.0
      %2739 = vmatpush.msra.mxu0 0.0
      %2740 = vmatpush.msra.mxu0 0.0
      %2741 = vmatpush.msra.mxu0 0.0
      %2742 = vmatpush.msra.mxu0 0.0
      %2743 = vmatpush.msra.mxu0 0.0
      %2744 = vmatpush.msra.mxu0 0.0
      %2745 = vmatpush.msra.mxu0 0.0
      %2746 = vmatpush.msra.mxu0 %v2726
      %2747 = vmatmul.f32.gmra.mxu0 %v2729
      %v2748 = vpop.f32.mrf.mxu0
      %v2749 = vadd.f32 0.0, %v2748
      %2750 = vdwg.mxu0
      %2751 = vrot.lane.b32.xlu0 %v2320, 96
      %v2752 = vpop.permute.xlu0 %2751
      %v2755 = vsel %vm1533, %v2618, 0
      %2757 = vmatpush.msra.mxu0 0.0
      %2758 = vmatpush.msra.mxu0 0.0
      %2759 = vmatpush.msra.mxu0 0.0
      %2760 = vmatpush.msra.mxu0 0.0
      %2761 = vmatpush.msra.mxu0 0.0
      %2762 = vmatpush.msra.mxu0 0.0
      %2763 = vmatpush.msra.mxu0 0.0
      %2764 = vmatpush.msra.mxu0 0.0
      %2765 = vmatpush.msra.mxu0 0.0
      %2766 = vmatpush.msra.mxu0 0.0
      %2767 = vmatpush.msra.mxu0 0.0
      %2768 = vmatpush.msra.mxu0 0.0
      %2769 = vmatpush.msra.mxu0 0.0
      %2770 = vmatpush.msra.mxu0 0.0
      %2771 = vmatpush.msra.mxu0 0.0
      %2772 = vmatpush.msra.mxu0 %v2752
      %2773 = vmatmul.f32.gmra.mxu0 %v2755
      %v2774 = vpop.f32.mrf.mxu0
      %v2775 = vadd.f32 0.0, %v2774
      %2776 = vdwg.mxu0
      %2777 = vrot.lane.b32.xlu0 %v2322, 96
      %v2778 = vpop.permute.xlu0 %2777
      %v2781 = vsel %vm1533, %v2619, 0
      %2783 = vmatpush.msra.mxu0 0.0
      %2784 = vmatpush.msra.mxu0 0.0
      %2785 = vmatpush.msra.mxu0 0.0
      %2786 = vmatpush.msra.mxu0 0.0
      %2787 = vmatpush.msra.mxu0 0.0
      %2788 = vmatpush.msra.mxu0 0.0
      %2789 = vmatpush.msra.mxu0 0.0
      %2790 = vmatpush.msra.mxu0 0.0
      %2791 = vmatpush.msra.mxu0 0.0
      %2792 = vmatpush.msra.mxu0 0.0
      %2793 = vmatpush.msra.mxu0 0.0
      %2794 = vmatpush.msra.mxu0 0.0
      %2795 = vmatpush.msra.mxu0 0.0
      %2796 = vmatpush.msra.mxu0 0.0
      %2797 = vmatpush.msra.mxu0 0.0
      %2798 = vmatpush.msra.mxu0 %v2778
      %2799 = vmatmul.f32.gmra.mxu0 %v2781
      %v2800 = vpop.f32.mrf.mxu0
      %v2801 = vadd.f32 0.0, %v2800
      %2802 = vdwg.mxu0
      %2803 = vrot.lane.b32.xlu0 %v2324, 96
      %v2804 = vpop.permute.xlu0 %2803
      %v2807 = vsel %vm1533, %v2620, 0
      %2809 = vmatpush.msra.mxu0 0.0
      %2810 = vmatpush.msra.mxu0 0.0
      %2811 = vmatpush.msra.mxu0 0.0
      %2812 = vmatpush.msra.mxu0 0.0
      %2813 = vmatpush.msra.mxu0 0.0
      %2814 = vmatpush.msra.mxu0 0.0
      %2815 = vmatpush.msra.mxu0 0.0
      %2816 = vmatpush.msra.mxu0 0.0
      %2817 = vmatpush.msra.mxu0 0.0
      %2818 = vmatpush.msra.mxu0 0.0
      %2819 = vmatpush.msra.mxu0 0.0
      %2820 = vmatpush.msra.mxu0 0.0
      %2821 = vmatpush.msra.mxu0 0.0
      %2822 = vmatpush.msra.mxu0 0.0
      %2823 = vmatpush.msra.mxu0 0.0
      %2824 = vmatpush.msra.mxu0 %v2804
      %2825 = vmatmul.f32.gmra.mxu0 %v2807
      %v2826 = vpop.f32.mrf.mxu0
      %v2827 = vadd.f32 0.0, %v2826
      %2828 = vdwg.mxu0
      %2831 = vrot.lane.b32.xlu0 %v2697, 8
      %v2832 = vpop.permute.xlu0 %2831
      %2833 = vrot.lane.b32.xlu0 %v2723, 8
      %v2834 = vpop.permute.xlu0 %2833
      %2839 = vrot.lane.b32.xlu0 %v2749, 16
      %v2840 = vpop.permute.xlu0 %2839
      %2841 = vrot.lane.b32.xlu0 %v2775, 16
      %v2842 = vpop.permute.xlu0 %2841
      %2847 = vrot.lane.b32.xlu0 %v2801, 24
      %v2848 = vpop.permute.xlu0 %2847
      %2849 = vrot.lane.b32.xlu0 %v2827, 24
      %v2850 = vpop.permute.xlu0 %2849
      %v2853 = vsel %vm1533, %v2645, %v2832
      %v2854 = vsel %vm1533, %v2671, %v2834
      %v2855 = vsel %vm2078, %v2853, %v2840
      %v2856 = vsel %vm2078, %v2854, %v2842
      %v2857 = vsel %vm2081, %v2855, %v2848
      %v2858 = vsel %vm2081, %v2856, %v2850
      %v2860 = vperm.slane %v2296, 0
      %v2863 = vsel %vm1443, %v2857, 0
      %v2866 = vsel %vm1443, %v2858, 0
      %2868 = vmatpush.msra.mxu0 0.0
      %2869 = vmatpush.msra.mxu0 0.0
      %2870 = vmatpush.msra.mxu0 0.0
      %2871 = vmatpush.msra.mxu0 0.0
      %2872 = vmatpush.msra.mxu0 0.0
      %2873 = vmatpush.msra.mxu0 0.0
      %2874 = vmatpush.msra.mxu0 0.0
      %2875 = vmatpush.msra.mxu0 0.0
      %2876 = vmatpush.msra.mxu0 0.0
      %2877 = vmatpush.msra.mxu0 0.0
      %2878 = vmatpush.msra.mxu0 0.0
      %2879 = vmatpush.msra.mxu0 0.0
      %2880 = vmatpush.msra.mxu0 %v2295
      %2881 = vmatpush.msra.mxu0 %v2294
      %2882 = vmatpush.msra.mxu0 %v2293
      %2883 = vmatpush.msra.mxu0 %v2292
      %2884 = vmatmul.f32.gmra.mxu0 %v2863
      %v2885 = vpop.f32.mrf.mxu0
      %v2886 = vadd.f32 %v2860, %v2885
      %2887 = vmatmul.f32.gmra.mxu0 %v2866
      %v2888 = vpop.f32.mrf.mxu0
      %v2889 = vadd.f32 %v2860, %v2888
      %2890 = vdwg.mxu0
      %v2891 = vld [vmem:[%s1366] sm:$0xff]
      %v2892 = vld [vmem:[%s1366 + $0x8] sm:$0xff]
      %v2893 = vld [vmem:[%s1366 + $0x10] sm:$0xff]
      %v2894 = vld [vmem:[%s1366 + $0x18] sm:$0xff]
      %v2895 = vld [vmem:[%s1369] sm:$0x1]
      %2898 = vrot.lane.b32.xlu0 %v2287, 120
      %v2899 = vpop.permute.xlu0 %2898
      %2900 = vrot.lane.b32.xlu0 %v2290, 120
      %v2901 = vpop.permute.xlu0 %2900
      %2902 = vrot.lane.b32.xlu0 %v2287, 112
      %v2903 = vpop.permute.xlu0 %2902
      %2904 = vrot.lane.b32.xlu0 %v2290, 112
      %v2905 = vpop.permute.xlu0 %2904
      %2906 = vrot.lane.b32.xlu0 %v2287, 104
      %v2907 = vpop.permute.xlu0 %2906
      %2908 = vrot.lane.b32.xlu0 %v2290, 104
      %v2909 = vpop.permute.xlu0 %2908
      %2910 = vrot.lane.b32.xlu0 %v2213, 96
      %v2911 = vpop.permute.xlu0 %2910
      %v2912 = vsel %vm1533, %v2911, 0
      %v2914 = vsel %vm1533, %v2287, 0
      %2916 = vmatpush.xpose.msra.mxu0 0.0
      %2917 = vmatpush.xpose.msra.mxu0 0.0
      %2918 = vmatpush.xpose.msra.mxu0 0.0
      %2919 = vmatpush.xpose.msra.mxu0 0.0
      %2920 = vmatpush.xpose.msra.mxu0 0.0
      %2921 = vmatpush.xpose.msra.mxu0 0.0
      %2922 = vmatpush.xpose.msra.mxu0 0.0
      %2923 = vmatpush.xpose.msra.mxu0 0.0
      %2924 = vmatpush.xpose.msra.mxu0 0.0
      %2925 = vmatpush.xpose.msra.mxu0 0.0
      %2926 = vmatpush.xpose.msra.mxu0 0.0
      %2927 = vmatpush.xpose.msra.mxu0 0.0
      %2928 = vmatpush.xpose.msra.mxu0 0.0
      %2929 = vmatpush.xpose.msra.mxu0 0.0
      %2930 = vmatpush.xpose.msra.mxu0 0.0
      %2931 = vmatpush.xpose.msra.mxu0 %v2914
      %2932 = vmatmul.f32.gmra.mxu0 %v2912
      %v2933 = vpop.f32.mrf.mxu0
      %v2934 = vadd.f32 0.0, %v2933
      %2935 = vdwg.mxu0
      %2936 = vrot.lane.b32.xlu0 %v2216, 96
      %v2937 = vpop.permute.xlu0 %2936
      %v2938 = vsel %vm1533, %v2937, 0
      %v2940 = vsel %vm1533, %v2290, 0
      %2942 = vmatpush.xpose.msra.mxu0 0.0
      %2943 = vmatpush.xpose.msra.mxu0 0.0
      %2944 = vmatpush.xpose.msra.mxu0 0.0
      %2945 = vmatpush.xpose.msra.mxu0 0.0
      %2946 = vmatpush.xpose.msra.mxu0 0.0
      %2947 = vmatpush.xpose.msra.mxu0 0.0
      %2948 = vmatpush.xpose.msra.mxu0 0.0
      %2949 = vmatpush.xpose.msra.mxu0 0.0
      %2950 = vmatpush.xpose.msra.mxu0 0.0
      %2951 = vmatpush.xpose.msra.mxu0 0.0
      %2952 = vmatpush.xpose.msra.mxu0 0.0
      %2953 = vmatpush.xpose.msra.mxu0 0.0
      %2954 = vmatpush.xpose.msra.mxu0 0.0
      %2955 = vmatpush.xpose.msra.mxu0 0.0
      %2956 = vmatpush.xpose.msra.mxu0 0.0
      %2957 = vmatpush.xpose.msra.mxu0 %v2940
      %2958 = vmatmul.f32.gmra.mxu0 %v2938
      %v2959 = vpop.f32.mrf.mxu0
      %v2960 = vadd.f32 0.0, %v2959
      %2961 = vdwg.mxu0
      %2962 = vrot.lane.b32.xlu0 %v2300, 96
      %v2963 = vpop.permute.xlu0 %2962
      %v2964 = vsel %vm1533, %v2963, 0
      %v2966 = vsel %vm1533, %v2899, 0
      %2968 = vmatpush.xpose.msra.mxu0 0.0
      %2969 = vmatpush.xpose.msra.mxu0 0.0
      %2970 = vmatpush.xpose.msra.mxu0 0.0
      %2971 = vmatpush.xpose.msra.mxu0 0.0
      %2972 = vmatpush.xpose.msra.mxu0 0.0
      %2973 = vmatpush.xpose.msra.mxu0 0.0
      %2974 = vmatpush.xpose.msra.mxu0 0.0
      %2975 = vmatpush.xpose.msra.mxu0 0.0
      %2976 = vmatpush.xpose.msra.mxu0 0.0
      %2977 = vmatpush.xpose.msra.mxu0 0.0
      %2978 = vmatpush.xpose.msra.mxu0 0.0
      %2979 = vmatpush.xpose.msra.mxu0 0.0
      %2980 = vmatpush.xpose.msra.mxu0 0.0
      %2981 = vmatpush.xpose.msra.mxu0 0.0
      %2982 = vmatpush.xpose.msra.mxu0 0.0
      %2983 = vmatpush.xpose.msra.mxu0 %v2966
      %2984 = vmatmul.f32.gmra.mxu0 %v2964
      %v2985 = vpop.f32.mrf.mxu0
      %v2986 = vadd.f32 0.0, %v2985
      %2987 = vdwg.mxu0
      %2988 = vrot.lane.b32.xlu0 %v2302, 96
      %v2989 = vpop.permute.xlu0 %2988
      %v2990 = vsel %vm1533, %v2989, 0
      %v2992 = vsel %vm1533, %v2901, 0
      %2994 = vmatpush.xpose.msra.mxu0 0.0
      %2995 = vmatpush.xpose.msra.mxu0 0.0
      %2996 = vmatpush.xpose.msra.mxu0 0.0
      %2997 = vmatpush.xpose.msra.mxu0 0.0
      %2998 = vmatpush.xpose.msra.mxu0 0.0
      %2999 = vmatpush.xpose.msra.mxu0 0.0
      %3000 = vmatpush.xpose.msra.mxu0 0.0
      %3001 = vmatpush.xpose.msra.mxu0 0.0
      %3002 = vmatpush.xpose.msra.mxu0 0.0
      %3003 = vmatpush.xpose.msra.mxu0 0.0
      %3004 = vmatpush.xpose.msra.mxu0 0.0
      %3005 = vmatpush.xpose.msra.mxu0 0.0
      %3006 = vmatpush.xpose.msra.mxu0 0.0
      %3007 = vmatpush.xpose.msra.mxu0 0.0
      %3008 = vmatpush.xpose.msra.mxu0 0.0
      %3009 = vmatpush.xpose.msra.mxu0 %v2992
      %3010 = vmatmul.f32.gmra.mxu0 %v2990
      %v3011 = vpop.f32.mrf.mxu0
      %v3012 = vadd.f32 0.0, %v3011
      %3013 = vdwg.mxu0
      %3014 = vrot.lane.b32.xlu0 %v2304, 96
      %v3015 = vpop.permute.xlu0 %3014
      %v3016 = vsel %vm1533, %v3015, 0
      %v3018 = vsel %vm1533, %v2903, 0
      %3020 = vmatpush.xpose.msra.mxu0 0.0
      %3021 = vmatpush.xpose.msra.mxu0 0.0
      %3022 = vmatpush.xpose.msra.mxu0 0.0
      %3023 = vmatpush.xpose.msra.mxu0 0.0
      %3024 = vmatpush.xpose.msra.mxu0 0.0
      %3025 = vmatpush.xpose.msra.mxu0 0.0
      %3026 = vmatpush.xpose.msra.mxu0 0.0
      %3027 = vmatpush.xpose.msra.mxu0 0.0
      %3028 = vmatpush.xpose.msra.mxu0 0.0
      %3029 = vmatpush.xpose.msra.mxu0 0.0
      %3030 = vmatpush.xpose.msra.mxu0 0.0
      %3031 = vmatpush.xpose.msra.mxu0 0.0
      %3032 = vmatpush.xpose.msra.mxu0 0.0
      %3033 = vmatpush.xpose.msra.mxu0 0.0
      %3034 = vmatpush.xpose.msra.mxu0 0.0
      %3035 = vmatpush.xpose.msra.mxu0 %v3018
      %3036 = vmatmul.f32.gmra.mxu0 %v3016
      %v3037 = vpop.f32.mrf.mxu0
      %v3038 = vadd.f32 0.0, %v3037
      %3039 = vdwg.mxu0
      %3040 = vrot.lane.b32.xlu0 %v2306, 96
      %v3041 = vpop.permute.xlu0 %3040
      %v3042 = vsel %vm1533, %v3041, 0
      %v3044 = vsel %vm1533, %v2905, 0
      %3046 = vmatpush.xpose.msra.mxu0 0.0
      %3047 = vmatpush.xpose.msra.mxu0 0.0
      %3048 = vmatpush.xpose.msra.mxu0 0.0
      %3049 = vmatpush.xpose.msra.mxu0 0.0
      %3050 = vmatpush.xpose.msra.mxu0 0.0
      %3051 = vmatpush.xpose.msra.mxu0 0.0
      %3052 = vmatpush.xpose.msra.mxu0 0.0
      %3053 = vmatpush.xpose.msra.mxu0 0.0
      %3054 = vmatpush.xpose.msra.mxu0 0.0
      %3055 = vmatpush.xpose.msra.mxu0 0.0
      %3056 = vmatpush.xpose.msra.mxu0 0.0
      %3057 = vmatpush.xpose.msra.mxu0 0.0
      %3058 = vmatpush.xpose.msra.mxu0 0.0
      %3059 = vmatpush.xpose.msra.mxu0 0.0
      %3060 = vmatpush.xpose.msra.mxu0 0.0
      %3061 = vmatpush.xpose.msra.mxu0 %v3044
      %3062 = vmatmul.f32.gmra.mxu0 %v3042
      %v3063 = vpop.f32.mrf.mxu0
      %v3064 = vadd.f32 0.0, %v3063
      %3065 = vdwg.mxu0
      %3066 = vrot.lane.b32.xlu0 %v2308, 96
      %v3067 = vpop.permute.xlu0 %3066
      %v3068 = vsel %vm1533, %v3067, 0
      %v3070 = vsel %vm1533, %v2907, 0
      %3072 = vmatpush.xpose.msra.mxu0 0.0
      %3073 = vmatpush.xpose.msra.mxu0 0.0
      %3074 = vmatpush.xpose.msra.mxu0 0.0
      %3075 = vmatpush.xpose.msra.mxu0 0.0
      %3076 = vmatpush.xpose.msra.mxu0 0.0
      %3077 = vmatpush.xpose.msra.mxu0 0.0
      %3078 = vmatpush.xpose.msra.mxu0 0.0
      %3079 = vmatpush.xpose.msra.mxu0 0.0
      %3080 = vmatpush.xpose.msra.mxu0 0.0
      %3081 = vmatpush.xpose.msra.mxu0 0.0
      %3082 = vmatpush.xpose.msra.mxu0 0.0
      %3083 = vmatpush.xpose.msra.mxu0 0.0
      %3084 = vmatpush.xpose.msra.mxu0 0.0
      %3085 = vmatpush.xpose.msra.mxu0 0.0
      %3086 = vmatpush.xpose.msra.mxu0 0.0
      %3087 = vmatpush.xpose.msra.mxu0 %v3070
      %3088 = vmatmul.f32.gmra.mxu0 %v3068
      %v3089 = vpop.f32.mrf.mxu0
      %v3090 = vadd.f32 0.0, %v3089
      %3091 = vdwg.mxu0
      %3092 = vrot.lane.b32.xlu0 %v2310, 96
      %v3093 = vpop.permute.xlu0 %3092
      %v3094 = vsel %vm1533, %v3093, 0
      %v3096 = vsel %vm1533, %v2909, 0
      %3098 = vmatpush.xpose.msra.mxu0 0.0
      %3099 = vmatpush.xpose.msra.mxu0 0.0
      %3100 = vmatpush.xpose.msra.mxu0 0.0
      %3101 = vmatpush.xpose.msra.mxu0 0.0
      %3102 = vmatpush.xpose.msra.mxu0 0.0
      %3103 = vmatpush.xpose.msra.mxu0 0.0
      %3104 = vmatpush.xpose.msra.mxu0 0.0
      %3105 = vmatpush.xpose.msra.mxu0 0.0
      %3106 = vmatpush.xpose.msra.mxu0 0.0
      %3107 = vmatpush.xpose.msra.mxu0 0.0
      %3108 = vmatpush.xpose.msra.mxu0 0.0
      %3109 = vmatpush.xpose.msra.mxu0 0.0
      %3110 = vmatpush.xpose.msra.mxu0 0.0
      %3111 = vmatpush.xpose.msra.mxu0 0.0
      %3112 = vmatpush.xpose.msra.mxu0 0.0
      %3113 = vmatpush.xpose.msra.mxu0 %v3096
      %3114 = vmatmul.f32.gmra.mxu0 %v3094
      %v3115 = vpop.f32.mrf.mxu0
      %v3116 = vadd.f32 0.0, %v3115
      %3117 = vdwg.mxu0
      %v3118 = vmul.f32 %v2934, 0.35355338
      %v3119 = vmul.f32 %v2960, 0.35355338
      %v3120 = vmul.f32 %v2986, 0.35355338
      %v3121 = vmul.f32 %v3012, 0.35355338
      %v3122 = vmul.f32 %v3038, 0.35355338
      %v3123 = vmul.f32 %v3064, 0.35355338
      %v3124 = vmul.f32 %v3090, 0.35355338
      %v3125 = vmul.f32 %v3116, 0.35355338
      %v3126 = vsel %vm1533, %v3118, -inf
      %3127 = vmax.xlane.f32.xlu0 %v3126
      %v3128 = vpop.xlane.xlu0 %3127
      %v3129 = vsel %vm1533, %v3119, -inf
      %3130 = vmax.xlane.f32.xlu0 %v3129
      %v3131 = vpop.xlane.xlu0 %3130
      %v3132 = vsel %vm1533, %v3120, -inf
      %3133 = vmax.xlane.f32.xlu0 %v3132
      %v3134 = vpop.xlane.xlu0 %3133
      %v3135 = vsel %vm1533, %v3121, -inf
      %3136 = vmax.xlane.f32.xlu0 %v3135
      %v3137 = vpop.xlane.xlu0 %3136
      %v3138 = vsel %vm1533, %v3122, -inf
      %3139 = vmax.xlane.f32.xlu0 %v3138
      %v3140 = vpop.xlane.xlu0 %3139
      %v3141 = vsel %vm1533, %v3123, -inf
      %3142 = vmax.xlane.f32.xlu0 %v3141
      %v3143 = vpop.xlane.xlu0 %3142
      %v3144 = vsel %vm1533, %v3124, -inf
      %3145 = vmax.xlane.f32.xlu0 %v3144
      %v3146 = vpop.xlane.xlu0 %3145
      %v3147 = vsel %vm1533, %v3125, -inf
      %3148 = vmax.xlane.f32.xlu0 %v3147
      %v3149 = vpop.xlane.xlu0 %3148
      %v3150 = vsub.f32 %v3118, %v3128
      %v3151 = vsub.f32 %v3119, %v3131
      %v3152 = vsub.f32 %v3120, %v3134
      %v3153 = vsub.f32 %v3121, %v3137
      %v3154 = vsub.f32 %v3122, %v3140
      %v3155 = vsub.f32 %v3123, %v3143
      %v3156 = vsub.f32 %v3124, %v3146
      %v3157 = vsub.f32 %v3125, %v3149
      %v3158 = vmul.f32 %v3150, 1.442695
      %v3159 = vpow.pop %v3158
      %v3160 = vmul.f32 %v3151, 1.442695
      %v3161 = vpow.pop %v3160
      %v3162 = vmul.f32 %v3152, 1.442695
      %v3163 = vpow.pop %v3162
      %v3164 = vmul.f32 %v3153, 1.442695
      %v3165 = vpow.pop %v3164
      %v3166 = vmul.f32 %v3154, 1.442695
      %v3167 = vpow.pop %v3166
      %v3168 = vmul.f32 %v3155, 1.442695
      %v3169 = vpow.pop %v3168
      %v3170 = vmul.f32 %v3156, 1.442695
      %v3171 = vpow.pop %v3170
      %v3172 = vmul.f32 %v3157, 1.442695
      %v3173 = vpow.pop %v3172
      %v3174 = vsel %vm1533, %v3159, 0.0
      %3175 = vadd.xlane.f32.xlu0 %v3174
      %v3176 = vpop.xlane.xlu0 %3175
      %v3177 = vsel %vm1533, %v3161, 0.0
      %3178 = vadd.xlane.f32.xlu0 %v3177
      %v3179 = vpop.xlane.xlu0 %3178
      %v3180 = vsel %vm1533, %v3163, 0.0
      %3181 = vadd.xlane.f32.xlu0 %v3180
      %v3182 = vpop.xlane.xlu0 %3181
      %v3183 = vsel %vm1533, %v3165, 0.0
      %3184 = vadd.xlane.f32.xlu0 %v3183
      %v3185 = vpop.xlane.xlu0 %3184
      %v3186 = vsel %vm1533, %v3167, 0.0
      %3187 = vadd.xlane.f32.xlu0 %v3186
      %v3188 = vpop.xlane.xlu0 %3187
      %v3189 = vsel %vm1533, %v3169, 0.0
      %3190 = vadd.xlane.f32.xlu0 %v3189
      %v3191 = vpop.xlane.xlu0 %3190
      %v3192 = vsel %vm1533, %v3171, 0.0
      %3193 = vadd.xlane.f32.xlu0 %v3192
      %v3194 = vpop.xlane.xlu0 %3193
      %v3195 = vsel %vm1533, %v3173, 0.0
      %3196 = vadd.xlane.f32.xlu0 %v3195
      %v3197 = vpop.xlane.xlu0 %3196
      %v3198 = vrcp.pop %v3176
      %v3199 = vrcp.pop %v3179
      %v3200 = vrcp.pop %v3182
      %v3201 = vrcp.pop %v3185
      %v3202 = vrcp.pop %v3188
      %v3203 = vrcp.pop %v3191
      %v3204 = vrcp.pop %v3194
      %v3205 = vrcp.pop %v3197
      %v3206 = vmul.f32 %v3159, %v3198
      %v3207 = vmul.f32 %v3161, %v3199
      %v3208 = vmul.f32 %v3163, %v3200
      %v3209 = vmul.f32 %v3165, %v3201
      %v3210 = vmul.f32 %v3167, %v3202
      %v3211 = vmul.f32 %v3169, %v3203
      %v3212 = vmul.f32 %v3171, %v3204
      %v3213 = vmul.f32 %v3173, %v3205
      %3214 = vrot.lane.b32.xlu0 %v2287, 96
      %v3215 = vpop.permute.xlu0 %3214
      %v3218 = vsel %vm1533, %v3206, 0
      %3220 = vmatpush.msra.mxu0 0.0
      %3221 = vmatpush.msra.mxu0 0.0
      %3222 = vmatpush.msra.mxu0 0.0
      %3223 = vmatpush.msra.mxu0 0.0
      %3224 = vmatpush.msra.mxu0 0.0
      %3225 = vmatpush.msra.mxu0 0.0
      %3226 = vmatpush.msra.mxu0 0.0
      %3227 = vmatpush.msra.mxu0 0.0
      %3228 = vmatpush.msra.mxu0 0.0
      %3229 = vmatpush.msra.mxu0 0.0
      %3230 = vmatpush.msra.mxu0 0.0
      %3231 = vmatpush.msra.mxu0 0.0
      %3232 = vmatpush.msra.mxu0 0.0
      %3233 = vmatpush.msra.mxu0 0.0
      %3234 = vmatpush.msra.mxu0 0.0
      %3235 = vmatpush.msra.mxu0 %v3215
      %3236 = vmatmul.f32.gmra.mxu0 %v3218
      %v3237 = vpop.f32.mrf.mxu0
      %v3238 = vadd.f32 0.0, %v3237
      %3239 = vdwg.mxu0
      %3240 = vrot.lane.b32.xlu0 %v2290, 96
      %v3241 = vpop.permute.xlu0 %3240
      %v3244 = vsel %vm1533, %v3207, 0
      %3246 = vmatpush.msra.mxu0 0.0
      %3247 = vmatpush.msra.mxu0 0.0
      %3248 = vmatpush.msra.mxu0 0.0
      %3249 = vmatpush.msra.mxu0 0.0
      %3250 = vmatpush.msra.mxu0 0.0
      %3251 = vmatpush.msra.mxu0 0.0
      %3252 = vmatpush.msra.mxu0 0.0
      %3253 = vmatpush.msra.mxu0 0.0
      %3254 = vmatpush.msra.mxu0 0.0
      %3255 = vmatpush.msra.mxu0 0.0
      %3256 = vmatpush.msra.mxu0 0.0
      %3257 = vmatpush.msra.mxu0 0.0
      %3258 = vmatpush.msra.mxu0 0.0
      %3259 = vmatpush.msra.mxu0 0.0
      %3260 = vmatpush.msra.mxu0 0.0
      %3261 = vmatpush.msra.mxu0 %v3241
      %3262 = vmatmul.f32.gmra.mxu0 %v3244
      %v3263 = vpop.f32.mrf.mxu0
      %v3264 = vadd.f32 0.0, %v3263
      %3265 = vdwg.mxu0
      %3266 = vrot.lane.b32.xlu0 %v2899, 96
      %v3267 = vpop.permute.xlu0 %3266
      %v3270 = vsel %vm1533, %v3208, 0
      %3272 = vmatpush.msra.mxu0 0.0
      %3273 = vmatpush.msra.mxu0 0.0
      %3274 = vmatpush.msra.mxu0 0.0
      %3275 = vmatpush.msra.mxu0 0.0
      %3276 = vmatpush.msra.mxu0 0.0
      %3277 = vmatpush.msra.mxu0 0.0
      %3278 = vmatpush.msra.mxu0 0.0
      %3279 = vmatpush.msra.mxu0 0.0
      %3280 = vmatpush.msra.mxu0 0.0
      %3281 = vmatpush.msra.mxu0 0.0
      %3282 = vmatpush.msra.mxu0 0.0
      %3283 = vmatpush.msra.mxu0 0.0
      %3284 = vmatpush.msra.mxu0 0.0
      %3285 = vmatpush.msra.mxu0 0.0
      %3286 = vmatpush.msra.mxu0 0.0
      %3287 = vmatpush.msra.mxu0 %v3267
      %3288 = vmatmul.f32.gmra.mxu0 %v3270
      %v3289 = vpop.f32.mrf.mxu0
      %v3290 = vadd.f32 0.0, %v3289
      %3291 = vdwg.mxu0
      %3292 = vrot.lane.b32.xlu0 %v2901, 96
      %v3293 = vpop.permute.xlu0 %3292
      %v3296 = vsel %vm1533, %v3209, 0
      %3298 = vmatpush.msra.mxu0 0.0
      %3299 = vmatpush.msra.mxu0 0.0
      %3300 = vmatpush.msra.mxu0 0.0
      %3301 = vmatpush.msra.mxu0 0.0
      %3302 = vmatpush.msra.mxu0 0.0
      %3303 = vmatpush.msra.mxu0 0.0
      %3304 = vmatpush.msra.mxu0 0.0
      %3305 = vmatpush.msra.mxu0 0.0
      %3306 = vmatpush.msra.mxu0 0.0
      %3307 = vmatpush.msra.mxu0 0.0
      %3308 = vmatpush.msra.mxu0 0.0
      %3309 = vmatpush.msra.mxu0 0.0
      %3310 = vmatpush.msra.mxu0 0.0
      %3311 = vmatpush.msra.mxu0 0.0
      %3312 = vmatpush.msra.mxu0 0.0
      %3313 = vmatpush.msra.mxu0 %v3293
      %3314 = vmatmul.f32.gmra.mxu0 %v3296
      %v3315 = vpop.f32.mrf.mxu0
      %v3316 = vadd.f32 0.0, %v3315
      %3317 = vdwg.mxu0
      %3318 = vrot.lane.b32.xlu0 %v2903, 96
      %v3319 = vpop.permute.xlu0 %3318
      %v3322 = vsel %vm1533, %v3210, 0
      %3324 = vmatpush.msra.mxu0 0.0
      %3325 = vmatpush.msra.mxu0 0.0
      %3326 = vmatpush.msra.mxu0 0.0
      %3327 = vmatpush.msra.mxu0 0.0
      %3328 = vmatpush.msra.mxu0 0.0
      %3329 = vmatpush.msra.mxu0 0.0
      %3330 = vmatpush.msra.mxu0 0.0
      %3331 = vmatpush.msra.mxu0 0.0
      %3332 = vmatpush.msra.mxu0 0.0
      %3333 = vmatpush.msra.mxu0 0.0
      %3334 = vmatpush.msra.mxu0 0.0
      %3335 = vmatpush.msra.mxu0 0.0
      %3336 = vmatpush.msra.mxu0 0.0
      %3337 = vmatpush.msra.mxu0 0.0
      %3338 = vmatpush.msra.mxu0 0.0
      %3339 = vmatpush.msra.mxu0 %v3319
      %3340 = vmatmul.f32.gmra.mxu0 %v3322
      %v3341 = vpop.f32.mrf.mxu0
      %v3342 = vadd.f32 0.0, %v3341
      %3343 = vdwg.mxu0
      %3344 = vrot.lane.b32.xlu0 %v2905, 96
      %v3345 = vpop.permute.xlu0 %3344
      %v3348 = vsel %vm1533, %v3211, 0
      %3350 = vmatpush.msra.mxu0 0.0
      %3351 = vmatpush.msra.mxu0 0.0
      %3352 = vmatpush.msra.mxu0 0.0
      %3353 = vmatpush.msra.mxu0 0.0
      %3354 = vmatpush.msra.mxu0 0.0
      %3355 = vmatpush.msra.mxu0 0.0
      %3356 = vmatpush.msra.mxu0 0.0
      %3357 = vmatpush.msra.mxu0 0.0
      %3358 = vmatpush.msra.mxu0 0.0
      %3359 = vmatpush.msra.mxu0 0.0
      %3360 = vmatpush.msra.mxu0 0.0
      %3361 = vmatpush.msra.mxu0 0.0
      %3362 = vmatpush.msra.mxu0 0.0
      %3363 = vmatpush.msra.mxu0 0.0
      %3364 = vmatpush.msra.mxu0 0.0
      %3365 = vmatpush.msra.mxu0 %v3345
      %3366 = vmatmul.f32.gmra.mxu0 %v3348
      %v3367 = vpop.f32.mrf.mxu0
      %v3368 = vadd.f32 0.0, %v3367
      %3369 = vdwg.mxu0
      %3370 = vrot.lane.b32.xlu0 %v2907, 96
      %v3371 = vpop.permute.xlu0 %3370
      %v3374 = vsel %vm1533, %v3212, 0
      %3376 = vmatpush.msra.mxu0 0.0
      %3377 = vmatpush.msra.mxu0 0.0
      %3378 = vmatpush.msra.mxu0 0.0
      %3379 = vmatpush.msra.mxu0 0.0
      %3380 = vmatpush.msra.mxu0 0.0
      %3381 = vmatpush.msra.mxu0 0.0
      %3382 = vmatpush.msra.mxu0 0.0
      %3383 = vmatpush.msra.mxu0 0.0
      %3384 = vmatpush.msra.mxu0 0.0
      %3385 = vmatpush.msra.mxu0 0.0
      %3386 = vmatpush.msra.mxu0 0.0
      %3387 = vmatpush.msra.mxu0 0.0
      %3388 = vmatpush.msra.mxu0 0.0
      %3389 = vmatpush.msra.mxu0 0.0
      %3390 = vmatpush.msra.mxu0 0.0
      %3391 = vmatpush.msra.mxu0 %v3371
      %3392 = vmatmul.f32.gmra.mxu0 %v3374
      %v3393 = vpop.f32.mrf.mxu0
      %v3394 = vadd.f32 0.0, %v3393
      %3395 = vdwg.mxu0
      %3396 = vrot.lane.b32.xlu0 %v2909, 96
      %v3397 = vpop.permute.xlu0 %3396
      %v3400 = vsel %vm1533, %v3213, 0
      %3402 = vmatpush.msra.mxu0 0.0
      %3403 = vmatpush.msra.mxu0 0.0
      %3404 = vmatpush.msra.mxu0 0.0
      %3405 = vmatpush.msra.mxu0 0.0
      %3406 = vmatpush.msra.mxu0 0.0
      %3407 = vmatpush.msra.mxu0 0.0
      %3408 = vmatpush.msra.mxu0 0.0
      %3409 = vmatpush.msra.mxu0 0.0
      %3410 = vmatpush.msra.mxu0 0.0
      %3411 = vmatpush.msra.mxu0 0.0
      %3412 = vmatpush.msra.mxu0 0.0
      %3413 = vmatpush.msra.mxu0 0.0
      %3414 = vmatpush.msra.mxu0 0.0
      %3415 = vmatpush.msra.mxu0 0.0
      %3416 = vmatpush.msra.mxu0 0.0
      %3417 = vmatpush.msra.mxu0 %v3397
      %3418 = vmatmul.f32.gmra.mxu0 %v3400
      %v3419 = vpop.f32.mrf.mxu0
      %v3420 = vadd.f32 0.0, %v3419
      %3421 = vdwg.mxu0
      %3424 = vrot.lane.b32.xlu0 %v3290, 8
      %v3425 = vpop.permute.xlu0 %3424
      %3426 = vrot.lane.b32.xlu0 %v3316, 8
      %v3427 = vpop.permute.xlu0 %3426
      %3432 = vrot.lane.b32.xlu0 %v3342, 16
      %v3433 = vpop.permute.xlu0 %3432
      %3434 = vrot.lane.b32.xlu0 %v3368, 16
      %v3435 = vpop.permute.xlu0 %3434
      %3440 = vrot.lane.b32.xlu0 %v3394, 24
      %v3441 = vpop.permute.xlu0 %3440
      %3442 = vrot.lane.b32.xlu0 %v3420, 24
      %v3443 = vpop.permute.xlu0 %3442
      %v3446 = vsel %vm1533, %v3238, %v3425
      %v3447 = vsel %vm1533, %v3264, %v3427
      %v3448 = vsel %vm2078, %v3446, %v3433
      %v3449 = vsel %vm2078, %v3447, %v3435
      %v3450 = vsel %vm2081, %v3448, %v3441
      %v3451 = vsel %vm2081, %v3449, %v3443
      %v3453 = vperm.slane %v2895, 0
      %v3456 = vsel %vm1443, %v3450, 0
      %v3459 = vsel %vm1443, %v3451, 0
      %3461 = vmatpush.msra.mxu0 0.0
      %3462 = vmatpush.msra.mxu0 0.0
      %3463 = vmatpush.msra.mxu0 0.0
      %3464 = vmatpush.msra.mxu0 0.0
      %3465 = vmatpush.msra.mxu0 0.0
      %3466 = vmatpush.msra.mxu0 0.0
      %3467 = vmatpush.msra.mxu0 0.0
      %3468 = vmatpush.msra.mxu0 0.0
      %3469 = vmatpush.msra.mxu0 0.0
      %3470 = vmatpush.msra.mxu0 0.0
      %3471 = vmatpush.msra.mxu0 0.0
      %3472 = vmatpush.msra.mxu0 0.0
      %3473 = vmatpush.msra.mxu0 %v2894
      %3474 = vmatpush.msra.mxu0 %v2893
      %3475 = vmatpush.msra.mxu0 %v2892
      %3476 = vmatpush.msra.mxu0 %v2891
      %3477 = vmatmul.f32.gmra.mxu0 %v3456
      %v3478 = vpop.f32.mrf.mxu0
      %v3479 = vadd.f32 %v3453, %v3478
      %3480 = vmatmul.f32.gmra.mxu0 %v3459
      %v3481 = vpop.f32.mrf.mxu0
      %v3482 = vadd.f32 %v3453, %v3481
      %3483 = vdwg.mxu0
      %v3484 = vadd.f32 %v2179, %v2886
      %v3485 = vadd.f32 %v2180, %v2889
      %v3486 = vadd.f32 %v3484, %v3479
      %v3487 = vadd.f32 %v3485, %v3482
      %v3488 = vld [vmem:[%s1378] sm:$0x1]
      %v3489 = vld [vmem:[%s1381] sm:$0x1]
      %v3490 = vsel %vm1443, %v3486, 0.0
      %3491 = vadd.xlane.f32.xlu0 %v3490
      %v3492 = vpop.xlane.xlu0 %3491
      %v3493 = vsel %vm1443, %v3487, 0.0
      %3494 = vadd.xlane.f32.xlu0 %v3493
      %v3495 = vpop.xlane.xlu0 %3494
      %v3496 = vmul.f32 %v3492, %v2132
      %v3497 = vmul.f32 %v3495, %v2132
      %v3498 = vsub.f32 %v3486, %v3496
      %v3499 = vsub.f32 %v3487, %v3497
      %v3500 = vmul.f32 %v3498, %v3498
      %v3501 = vmul.f32 %v3499, %v3499
      %v3502 = vsel %vm1443, %v3500, 0.0
      %3503 = vadd.xlane.f32.xlu0 %v3502
      %v3504 = vpop.xlane.xlu0 %3503
      %v3505 = vsel %vm1443, %v3501, 0.0
      %3506 = vadd.xlane.f32.xlu0 %v3505
      %v3507 = vpop.xlane.xlu0 %3506
      %v3508 = vmul.f32 %v3504, %v2132
      %v3509 = vmul.f32 %v3507, %v2132
      %v3510 = vadd.f32 %v3508, 1e-05
      %v3511 = vadd.f32 %v3509, 1e-05
      %v3512 = vrsqrt.pop %v3510
      %v3513 = vmul.f32 %v3512, %v3510
      %v3514 = vmul.f32 %v3513, %v3512
      %v3515 = vmul.f32 0.5, %v3514
      %v3516 = vsub.f32 1.5, %v3515
      %v3517 = vmul.f32 %v3512, %v3516
      %vm3518 = vweird.f32 %v3510
      %vm3519 = vweird.f32 %v3512
      %vm3520 = vmor %vm3518, %vm3519
      %v3521 = vsel %vm3520, %v3512, %v3517
      %v3522 = vrsqrt.pop %v3511
      %v3523 = vmul.f32 %v3522, %v3511
      %v3524 = vmul.f32 %v3523, %v3522
      %v3525 = vmul.f32 0.5, %v3524
      %v3526 = vsub.f32 1.5, %v3525
      %v3527 = vmul.f32 %v3522, %v3526
      %vm3528 = vweird.f32 %v3511
      %vm3529 = vweird.f32 %v3522
      %vm3530 = vmor %vm3528, %vm3529
      %v3531 = vsel %vm3530, %v3522, %v3527
      %v3532 = vmul.f32 %v3498, %v3521
      %v3533 = vmul.f32 %v3499, %v3531
      %v3535 = vperm.slane %v3488, 0
      %v3537 = vmul.f32 %v3532, %v3535
      %v3538 = vmul.f32 %v3533, %v3535
      %v3540 = vperm.slane %v3489, 0
      %v3542 = vadd.f32 %v3537, %v3540
      %v3543 = vadd.f32 %v3538, %v3540
      %v3544 = vld [vmem:[%s1392] sm:$0xff]
      %v3545 = vld [vmem:[%s1392 + $0x8] sm:$0xff]
      %v3546 = vld [vmem:[%s1392 + $0x10] sm:$0xff]
      %v3547 = vld [vmem:[%s1392 + $0x18] sm:$0xff]
      %v3548 = vld [vmem:[%s1395] sm:$0x1]
      %v3550 = vperm.slane %v3548, 0
      %v3553 = vsel %vm1443, %v3542, 0
      %v3556 = vsel %vm1443, %v3543, 0
      %3558 = vmatpush.msra.mxu0 0.0
      %3559 = vmatpush.msra.mxu0 0.0
      %3560 = vmatpush.msra.mxu0 0.0
      %3561 = vmatpush.msra.mxu0 0.0
      %3562 = vmatpush.msra.mxu0 0.0
      %3563 = vmatpush.msra.mxu0 0.0
      %3564 = vmatpush.msra.mxu0 0.0
      %3565 = vmatpush.msra.mxu0 0.0
      %3566 = vmatpush.msra.mxu0 0.0
      %3567 = vmatpush.msra.mxu0 0.0
      %3568 = vmatpush.msra.mxu0 0.0
      %3569 = vmatpush.msra.mxu0 0.0
      %3570 = vmatpush.msra.mxu0 %v3547
      %3571 = vmatpush.msra.mxu0 %v3546
      %3572 = vmatpush.msra.mxu0 %v3545
      %3573 = vmatpush.msra.mxu0 %v3544
      %3574 = vmatmul.f32.gmra.mxu0 %v3553
      %v3575 = vpop.f32.mrf.mxu0
      %v3576 = vadd.f32 %v3550, %v3575
      %3577 = vmatmul.f32.gmra.mxu0 %v3556
      %v3578 = vpop.f32.mrf.mxu0
      %v3579 = vadd.f32 %v3550, %v3578
      %3580 = vdwg.mxu0
      %v3581 = vmax.f32 %v3576, 0.0
      %v3582 = vmax.f32 %v3579, 0.0
      %v3583 = vld [vmem:[%s1400] sm:$0xff]
      %v3584 = vld [vmem:[%s1400 + $0x8] sm:$0xff]
      %v3585 = vld [vmem:[%s1400 + $0x10] sm:$0xff]
      %v3586 = vld [vmem:[%s1400 + $0x18] sm:$0xff]
      %v3587 = vld [vmem:[%s1400 + $0x20] sm:$0xff]
      %v3588 = vld [vmem:[%s1400 + $0x28] sm:$0xff]
      %v3589 = vld [vmem:[%s1400 + $0x30] sm:$0xff]
      %v3590 = vld [vmem:[%s1400 + $0x38] sm:$0xff]
      %v3591 = vld [vmem:[%s1403] sm:$0x1]
      %v3593 = vperm.slane %v3591, 0
      %vm3595 = vcmask 523264
      %v3597 = vsel %vm3595, %v3581, 0
      %v3600 = vsel %vm3595, %v3582, 0
      %3602 = vmatpush.msra.mxu0 0.0
      %3603 = vmatpush.msra.mxu0 0.0
      %3604 = vmatpush.msra.mxu0 0.0
      %3605 = vmatpush.msra.mxu0 0.0
      %3606 = vmatpush.msra.mxu0 0.0
      %3607 = vmatpush.msra.mxu0 0.0
      %3608 = vmatpush.msra.mxu0 0.0
      %3609 = vmatpush.msra.mxu0 0.0
      %3610 = vmatpush.msra.mxu0 %v3590
      %3611 = vmatpush.msra.mxu0 %v3589
      %3612 = vmatpush.msra.mxu0 %v3588
      %3613 = vmatpush.msra.mxu0 %v3587
      %3614 = vmatpush.msra.mxu0 %v3586
      %3615 = vmatpush.msra.mxu0 %v3585
      %3616 = vmatpush.msra.mxu0 %v3584
      %3617 = vmatpush.msra.mxu0 %v3583
      %3618 = vmatmul.f32.gmra.mxu0 %v3597
      %v3619 = vpop.f32.mrf.mxu0
      %v3620 = vadd.f32 %v3593, %v3619
      %3621 = vmatmul.f32.gmra.mxu0 %v3600
      %v3622 = vpop.f32.mrf.mxu0
      %v3623 = vadd.f32 %v3593, %v3622
      %3624 = vdwg.mxu0
      %v3625 = vadd.f32 %v3542, %v3620
      %v3626 = vadd.f32 %v3543, %v3623
      %v3627 = vld [vmem:[%s1384] sm:$0x1]
      %v3628 = vld [vmem:[%s1387] sm:$0x1]
      %v3629 = vsel %vm1443, %v3625, 0.0
      %3630 = vadd.xlane.f32.xlu0 %v3629
      %v3631 = vpop.xlane.xlu0 %3630
      %v3632 = vsel %vm1443, %v3626, 0.0
      %3633 = vadd.xlane.f32.xlu0 %v3632
      %v3634 = vpop.xlane.xlu0 %3633
      %v3635 = vmul.f32 %v3631, %v2132
      %v3636 = vmul.f32 %v3634, %v2132
      %v3637 = vsub.f32 %v3625, %v3635
      %v3638 = vsub.f32 %v3626, %v3636
      %v3639 = vmul.f32 %v3637, %v3637
      %v3640 = vmul.f32 %v3638, %v3638
      %v3641 = vsel %vm1443, %v3639, 0.0
      %3642 = vadd.xlane.f32.xlu0 %v3641
      %v3643 = vpop.xlane.xlu0 %3642
      %v3644 = vsel %vm1443, %v3640, 0.0
      %3645 = vadd.xlane.f32.xlu0 %v3644
      %v3646 = vpop.xlane.xlu0 %3645
      %v3647 = vmul.f32 %v3643, %v2132
      %v3648 = vmul.f32 %v3646, %v2132
      %v3649 = vadd.f32 %v3647, 1e-05
      %v3650 = vadd.f32 %v3648, 1e-05
      %v3651 = vrsqrt.pop %v3649
      %v3652 = vmul.f32 %v3651, %v3649
      %v3653 = vmul.f32 %v3652, %v3651
      %v3654 = vmul.f32 0.5, %v3653
      %v3655 = vsub.f32 1.5, %v3654
      %v3656 = vmul.f32 %v3651, %v3655
      %vm3657 = vweird.f32 %v3649
      %vm3658 = vweird.f32 %v3651
      %vm3659 = vmor %vm3657, %vm3658
      %v3660 = vsel %vm3659, %v3651, %v3656
      %v3661 = vrsqrt.pop %v3650
      %v3662 = vmul.f32 %v3661, %v3650
      %v3663 = vmul.f32 %v3662, %v3661
      %v3664 = vmul.f32 0.5, %v3663
      %v3665 = vsub.f32 1.5, %v3664
      %v3666 = vmul.f32 %v3661, %v3665
      %vm3667 = vweird.f32 %v3650
      %vm3668 = vweird.f32 %v3661
      %vm3669 = vmor %vm3667, %vm3668
      %v3670 = vsel %vm3669, %v3661, %v3666
      %v3671 = vmul.f32 %v3637, %v3660
      %v3672 = vmul.f32 %v3638, %v3670
      %v3674 = vperm.slane %v3627, 0
      %v3676 = vmul.f32 %v3671, %v3674
      %v3677 = vmul.f32 %v3672, %v3674
      %v3679 = vperm.slane %v3628, 0
      %v3681 = vadd.f32 %v3676, %v3679
      %v3682 = vadd.f32 %v3677, %v3679
      %3683 = vst.msk [vmem:[#allocation2] sm:$0xff] %vm1443, %v3681
      %3684 = vst.msk [vmem:[#allocation2 + $0x8] sm:$0xff] %vm1443, %v3682
      %p3685 = scmp.eq.s32.totalorder %s78, 1
      // Predicated region
      $region157: #{decoder_forward.1} parent=151 // pred_check
        %p3686 = pneg %p3685
      $region158: #{decoder_forward.1} parent=151 // pred_check_branch
        %3688 = sbr.rel (%p3686) target = $region160
      $region159: #{decoder_forward.1} parent=151 // pred_region
        %v3689 = vld [vmem:[%s63] sm:$0xff]
        %v3690 = vld [vmem:[%s63 + $0x8] sm:$0xff]
        %v3691 = vld [vmem:[%s63 + $0x10] sm:$0xff]
        %v3692 = vld [vmem:[%s63 + $0x18] sm:$0xff]
        %v3693 = vld [vmem:[%s65] sm:$0x1]
        %v3695 = vperm.slane %v3693, 0
        %v3698 = vsel %vm1443, %v3681, 0
        %v3701 = vsel %vm1443, %v3682, 0
        %3703 = vmatpush.msra.mxu0 0.0
        %3704 = vmatpush.msra.mxu0 0.0
        %3705 = vmatpush.msra.mxu0 0.0
        %3706 = vmatpush.msra.mxu0 0.0
        %3707 = vmatpush.msra.mxu0 0.0
        %3708 = vmatpush.msra.mxu0 0.0
        %3709 = vmatpush.msra.mxu0 0.0
        %3710 = vmatpush.msra.mxu0 0.0
        %3711 = vmatpush.msra.mxu0 0.0
        %3712 = vmatpush.msra.mxu0 0.0
        %3713 = vmatpush.msra.mxu0 0.0
        %3714 = vmatpush.msra.mxu0 0.0
        %3715 = vmatpush.msra.mxu0 %v3692
        %3716 = vmatpush.msra.mxu0 %v3691
        %3717 = vmatpush.msra.mxu0 %v3690
        %3718 = vmatpush.msra.mxu0 %v3689
        %3719 = vmatmul.f32.gmra.mxu0 %v3698
        %v3720 = vpop.f32.mrf.mxu0
        %v3721 = vadd.f32 %v3695, %v3720
        %3722 = vmatmul.f32.gmra.mxu0 %v3701
        %v3723 = vpop.f32.mrf.mxu0
        %v3724 = vadd.f32 %v3695, %v3723
        %3725 = vdwg.mxu0
        %3726 = vmax.xlane.f32.xlu0 %v3721
        %v3727 = vpop.xlane.xlu0 %3726
        %3728 = vmax.xlane.f32.xlu0 %v3724
        %v3729 = vpop.xlane.xlu0 %3728
        %v3730 = vsub.f32 %v3721, %v3727
        %v3731 = vsub.f32 %v3724, %v3729
        %v3732 = vmul.f32 %v3730, 1.442695
        %v3733 = vpow.pop %v3732
        %v3734 = vmul.f32 %v3731, 1.442695
        %v3735 = vpow.pop %v3734
        %3736 = vadd.xlane.f32.xlu0 %v3733
        %v3737 = vpop.xlane.xlu0 %3736
        %3738 = vadd.xlane.f32.xlu0 %v3735
        %v3739 = vpop.xlane.xlu0 %3738
        %v3740 = vlog2.pop %v3737
        %v3741 = vmul.f32 %v3740, 0.6931472
        %v3742 = vlog2.pop %v3739
        %v3743 = vmul.f32 %v3742, 0.6931472
        %v3744 = vsub.f32 %v3730, %v3741
        %v3745 = vsub.f32 %v3731, %v3743
        %3746 = vst [vmem:[%s67] sm:$0xff] %v3744
        %3747 = vst [vmem:[%s67 + $0x8] sm:$0xff] %v3745
      $region160: #{decoder_forward.1} parent=151 // pred_fallthru
        _
      // Predicated region
      $region161: #{decoder_forward.1} parent=151 // pred_check
        %p3748 = pneg %p914
      $region162: #{decoder_forward.1} parent=151 // pred_check_branch
        %3750 = sbr.rel (%p3748) target = $region164
      $region163: #{decoder_forward.1} parent=151 // pred_region
        _
      $region164: #{decoder_forward.1} parent=151 // pred_fallthru
        _
      // Predicated region
      $region165: #{decoder_forward.1} parent=151 // pred_check
        %p3751 = pneg %p914
      $region166: #{decoder_forward.1} parent=151 // pred_check_branch
        %3753 = sbr.rel (%p3751) target = $region168
      $region167: #{decoder_forward.1} parent=151 // pred_region
        _
      $region168: #{decoder_forward.1} parent=151 // pred_fallthru
        _
    $region152: #{decoder_forward.1} parent=5 // pred_fallthru
      _
    %p3754 = scmp.le.s32.totalorder 2, %s73
    // Predicated region
    $region169: #{decoder_forward.1} parent=5 // pred_check
      %p3755 = pneg %p3754
    $region170: #{decoder_forward.1} parent=5 // pred_check_branch
      %3757 = sbr.rel (%p3755) target = $region172
    $region171: #{decoder_forward.1} parent=5 // pred_region
      %s3758 = ssub.s32 %s73, 2
    $region172: #{decoder_forward.1} parent=5 // pred_fallthru
      _
  $region6: #{decoder_forward.1} parent=0 // loop_footer
    %s77 = sadd.s32 1, %s73
  $region7: #{decoder_forward.1} parent=0 // loop_footer_branch
    %72 = sbr.rel target = $region3
  $region8: #{decoder_forward.1} parent=0 // loop_exit
    _

</llo_original>
